<compile_context>
chip_gen: v7x
topology: tpu7x:2x2x1
jax: 0.10.0
libtpu: 0.0.40
codegen_flags: <defaults>
</compile_context>

<pallas_src>
import functools
import math

import jax
import jax.numpy as jnp
from jax.experimental import pallas as pl
from jax.experimental.pallas import tpu as pltpu


# ----------------------------------------------------------------------------
# Tiling helpers
# ----------------------------------------------------------------------------

_M_TILE = 256      # matmul rows per tile (multiple of 8)
_N_TILE = 1024     # matmul output cols per tile (multiple of 128)
_K_TILE = 512      # matmul contraction cols per tile (multiple of 128)
_SEQ_TILE = 256    # flash-attention q/kv rows per tile
_SMEAN_TILE = 512  # seq-mean rows per tile


def _round_up(x, m):
    return (x + m - 1) // m * m


def _pick_tile(dim, max_tile):
    """Return (tile, padded_dim). Single full-dim block when dim <= max_tile."""
    if dim <= max_tile:
        return dim, dim
    return max_tile, _round_up(dim, max_tile)


def _seq_tile(s, max_tile=_SEQ_TILE):
    if s <= max_tile:
        sp = _round_up(s, 8)
        return sp, sp
    return max_tile, _round_up(s, max_tile)


def _bf16(x):
    return x if x.dtype == jnp.bfloat16 else x.astype(jnp.bfloat16)


# ----------------------------------------------------------------------------
# Generic tiled matmul (+bias, +optional ReLU)
# ----------------------------------------------------------------------------

def _matmul_kernel(x_ref, w_ref, b_ref, o_ref, acc_ref, *, activation, n_k):
    @pl.when(pl.program_id(2) == 0)
    def _():
        acc_ref[...] = jnp.zeros_like(acc_ref)

    acc_ref[...] += jnp.dot(x_ref[...], w_ref[...],
                            preferred_element_type=jnp.float32)

    @pl.when(pl.program_id(2) == n_k - 1)
    def _():
        y = acc_ref[...] + b_ref[...]
        if activation == "relu":
            y = jnp.maximum(y, 0.0)
        o_ref[...] = y.astype(o_ref.dtype)


def pallas_linear(x, w, b, activation=None, out_dtype=jnp.bfloat16):
    """y = act(x @ w + b).  x: (M, K), w: (K, N) bf16, b: (N,)/(1,N) f32."""
    M, K = x.shape
    N = w.shape[1]
    tm, Mp = _pick_tile(M, _M_TILE)
    tk, Kp = _pick_tile(K, _K_TILE)
    tn, Np = _pick_tile(N, _N_TILE)

    xb = _bf16(x)
    wb = _bf16(w)
    bf = b.reshape(1, N).astype(jnp.float32)
    if Mp != M or Kp != K:
        xb = jnp.pad(xb, ((0, Mp - M), (0, Kp - K)))
    if Kp != K or Np != N:
        wb = jnp.pad(wb, ((0, Kp - K), (0, Np - N)))
    if Np != N:
        bf = jnp.pad(bf, ((0, 0), (0, Np - N)))

    gm, gn, gk = Mp // tm, Np // tn, Kp // tk

    out = pl.pallas_call(
        functools.partial(_matmul_kernel, activation=activation, n_k=gk),
        out_shape=jax.ShapeDtypeStruct((Mp, Np), out_dtype),
        grid=(gm, gn, gk),
        in_specs=[
            pl.BlockSpec((tm, tk), lambda i, j, k: (i, k)),
            pl.BlockSpec((tk, tn), lambda i, j, k: (k, j)),
            pl.BlockSpec((1, tn), lambda i, j, k: (0, j)),
        ],
        out_specs=pl.BlockSpec((tm, tn), lambda i, j, k: (i, j)),
        scratch_shapes=[pltpu.VMEM((tm, tn), jnp.float32)],
        compiler_params=pltpu.CompilerParams(
            dimension_semantics=("parallel", "parallel", "arbitrary")),
    )(xb, wb, bf)

    if Mp != M or Np != N:
        out = out[:M, :N]
    return out


# ----------------------------------------------------------------------------
# Matmul + residual add + LayerNorm (fused epilogue)
# ----------------------------------------------------------------------------

def _matmul_add_ln_kernel(x_ref, w_ref, b_ref, r_ref, g_ref, bb_ref,
                          o_ref, acc_ref, *, eps, n_k):
    @pl.when(pl.program_id(1) == 0)
    def _():
        acc_ref[...] = jnp.zeros_like(acc_ref)

    acc_ref[...] += jnp.dot(x_ref[...], w_ref[...],
                            preferred_element_type=jnp.float32)

    @pl.when(pl.program_id(1) == n_k - 1)
    def _():
        y = acc_ref[...] + b_ref[...] + r_ref[...].astype(jnp.float32)
        mu = jnp.mean(y, axis=-1, keepdims=True)
        var = jnp.mean(jnp.square(y - mu), axis=-1, keepdims=True)
        yn = (y - mu) * jax.lax.rsqrt(var + eps)
        o_ref[...] = (yn * g_ref[...] + bb_ref[...]).astype(o_ref.dtype)


def pallas_linear_add_ln(x, w, b, residual, gamma, beta, eps=1e-5,
                         out_dtype=jnp.bfloat16):
    """LayerNorm(residual + x @ w + b) * gamma + beta.  N (=E) kept un-tiled."""
    M, K = x.shape
    N = w.shape[1]
    tm, Mp = _pick_tile(M, _M_TILE)
    tk, Kp = _pick_tile(K, _K_TILE)

    xb = _bf16(x)
    wb = _bf16(w)
    rb = _bf16(residual)
    bf = b.reshape(1, N).astype(jnp.float32)
    g2 = gamma.reshape(1, N).astype(jnp.float32)
    b2 = beta.reshape(1, N).astype(jnp.float32)
    if Mp != M or Kp != K:
        xb = jnp.pad(xb, ((0, Mp - M), (0, Kp - K)))
    if Kp != K:
        wb = jnp.pad(wb, ((0, Kp - K), (0, 0)))
    if Mp != M:
        rb = jnp.pad(rb, ((0, Mp - M), (0, 0)))

    gm, gk = Mp // tm, Kp // tk

    out = pl.pallas_call(
        functools.partial(_matmul_add_ln_kernel, eps=eps, n_k=gk),
        out_shape=jax.ShapeDtypeStruct((Mp, N), out_dtype),
        grid=(gm, gk),
        in_specs=[
            pl.BlockSpec((tm, tk), lambda i, k: (i, k)),
            pl.BlockSpec((tk, N), lambda i, k: (k, 0)),
            pl.BlockSpec((1, N), lambda i, k: (0, 0)),
            pl.BlockSpec((tm, N), lambda i, k: (i, 0)),
            pl.BlockSpec((1, N), lambda i, k: (0, 0)),
            pl.BlockSpec((1, N), lambda i, k: (0, 0)),
        ],
        out_specs=pl.BlockSpec((tm, N), lambda i, k: (i, 0)),
        scratch_shapes=[pltpu.VMEM((tm, N), jnp.float32)],
        compiler_params=pltpu.CompilerParams(
            dimension_semantics=("parallel", "arbitrary")),
    )(xb, wb, bf, rb, g2, b2)

    return out[:M] if Mp != M else out


# ----------------------------------------------------------------------------
# Flash attention (online softmax, heads sliced from the QKV slab)
# ----------------------------------------------------------------------------

def _flash_attn_kernel(q_ref, k_ref, v_ref, o_ref, m_sc, l_sc, acc_sc,
                       *, scale, n_kv, kv_tile, seq_len, mask_kv):
    ki = pl.program_id(3)

    @pl.when(ki == 0)
    def _():
        m_sc[...] = jnp.full_like(m_sc, -jnp.inf)
        l_sc[...] = jnp.zeros_like(l_sc)
        acc_sc[...] = jnp.zeros_like(acc_sc)

    q = q_ref[0]                                    # (tq, Dh) bf16
    k = k_ref[0]                                    # (tk, Dh) bf16
    v = v_ref[0]                                    # (tk, Dh) bf16
    s = jax.lax.dot_general(q, k, (((1,), (1,)), ((), ())),
                            preferred_element_type=jnp.float32) * scale
    if mask_kv:
        kv_pos = ki * kv_tile + jax.lax.broadcasted_iota(jnp.int32, s.shape, 1)
        s = jnp.where(kv_pos < seq_len, s, -1e30)

    m_prev = m_sc[...]
    m_new = jnp.maximum(m_prev, jnp.max(s, axis=-1, keepdims=True))
    alpha = jnp.exp(m_prev - m_new)
    p = jnp.exp(s - m_new)
    l_sc[...] = alpha * l_sc[...] + jnp.sum(p, axis=-1, keepdims=True)
    acc_sc[...] = alpha * acc_sc[...] + jnp.dot(
        p.astype(jnp.bfloat16), v, preferred_element_type=jnp.float32)
    m_sc[...] = m_new

    @pl.when(ki == n_kv - 1)
    def _():
        # approx reciprocal: ~1e-3-level deviation vs exact 1/sum (inference OK).
        inv = pl.reciprocal(l_sc[...], approx=True)
        o_ref[0] = (acc_sc[...] * inv).astype(o_ref.dtype)


def pallas_flash_attention(qkv, batch, seq, nhead):
    """qkv: (B*S, 3E) bf16, rows batch-major (b, s) -> (B*S, E) bf16.

    Head h's Q/K/V live in column blocks h / nhead+h / 2*nhead+h of the QKV
    slab, so the BlockSpec index_map slices heads with no relayout in HBM.
    Dh should be a multiple of 128 for lane-dense blocks (true for 1024/8).
    """
    e3 = qkv.shape[1]
    e = e3 // 3
    dh = e // nhead
    scale = 1.0 / math.sqrt(dh)

    qkv3 = qkv.reshape(batch, seq, e3)              # free reshape (row-major)
    tq, sp = _seq_tile(seq)
    tk = tq
    if sp != seq:
        qkv3 = jnp.pad(qkv3, ((0, 0), (0, sp - seq), (0, 0)))
    nq, nkv = sp // tq, sp // tk

    out = pl.pallas_call(
        functools.partial(_flash_attn_kernel, scale=scale, n_kv=nkv,
                          kv_tile=tk, seq_len=seq, mask_kv=(sp != seq)),
        out_shape=jax.ShapeDtypeStruct((batch, sp, e), jnp.bfloat16),
        grid=(batch, nhead, nq, nkv),
        in_specs=[
            pl.BlockSpec((1, tq, dh), lambda b, h, qi, ki: (b, qi, h)),
            pl.BlockSpec((1, tk, dh), lambda b, h, qi, ki: (b, ki, nhead + h)),
            pl.BlockSpec((1, tk, dh), lambda b, h, qi, ki: (b, ki, 2 * nhead + h)),
        ],
        out_specs=pl.BlockSpec((1, tq, dh), lambda b, h, qi, ki: (b, qi, h)),
        scratch_shapes=[
            pltpu.VMEM((tq, 1), jnp.float32),       # running max
            pltpu.VMEM((tq, 1), jnp.float32),       # running denom
            pltpu.VMEM((tq, dh), jnp.float32),      # running acc
        ],
        compiler_params=pltpu.CompilerParams(
            dimension_semantics=("parallel", "parallel", "parallel", "arbitrary")),
    )(qkv3, qkv3, qkv3)

    if sp != seq:
        out = out[:, :seq, :]
    return out.reshape(batch * seq, e)


# ----------------------------------------------------------------------------
# Conv1d(k=3, stride=2, pad=1) + ReLU, fused in one kernel (no HBM im2col)
# ----------------------------------------------------------------------------

def _conv_relu_kernel(z_ref, w01_ref, w2_ref, b_ref, o_ref, *, t_out):
    # z row t holds padded input rows (2t, 2t+1) concatenated on channels.
    za = z_ref[0, pl.ds(0, t_out), :].astype(jnp.bfloat16)   # taps 0,1
    zb = z_ref[0, pl.ds(1, t_out), :].astype(jnp.bfloat16)   # taps 2,(unused)
    y = jnp.dot(za, w01_ref[...], preferred_element_type=jnp.float32)
    y = y + jnp.dot(zb, w2_ref[...], preferred_element_type=jnp.float32)
    y = y + b_ref[...]
    o_ref[0] = jnp.maximum(y, 0.0).astype(o_ref.dtype)


def pallas_conv1d_relu(x, w01, w2z, b, out_dtype=jnp.float32):
    """Channels-last Conv1d(kernel=3, stride=2, padding=1) + ReLU.

    x: (B, T, Cin) f32.  w01 = [W_tap0; W_tap1], w2z = [W_tap2; 0]  (2*Cin, Cout) bf16.
    """
    B, T, Cin = x.shape
    Cout = w01.shape[1]
    t_out = (T + 2 - 3) // 2 + 1
    t_pad = 2 * t_out + 2
    # 1 leading zero row (conv pad); trailing zeros cover the conv's right pad.
    # Any extra trailing row is only multiplied by the zero half of w2z.
    xp = jnp.pad(x, ((0, 0), (1, t_pad - 1 - T), (0, 0)))
    z = xp.reshape(B, t_pad // 2, 2 * Cin)          # free pair-interleave reshape
    t_half = t_pad // 2
    bf = b.reshape(1, Cout).astype(jnp.float32)

    return pl.pallas_call(
        functools.partial(_conv_relu_kernel, t_out=t_out),
        out_shape=jax.ShapeDtypeStruct((B, t_out, Cout), out_dtype),
        grid=(B,),
        in_specs=[
            pl.BlockSpec((1, t_half, 2 * Cin), lambda bb: (bb, 0, 0)),
            pl.BlockSpec((2 * Cin, Cout), lambda bb: (0, 0)),
            pl.BlockSpec((2 * Cin, Cout), lambda bb: (0, 0)),
            pl.BlockSpec((1, Cout), lambda bb: (0, 0)),
        ],
        out_specs=pl.BlockSpec((1, t_out, Cout), lambda bb: (bb, 0, 0)),
        compiler_params=pltpu.CompilerParams(dimension_semantics=("parallel",)),
    )(z, w01, w2z, bf)


# ----------------------------------------------------------------------------
# Mean over the sequence axis
# ----------------------------------------------------------------------------

def _seq_mean_kernel(x_ref, o_ref, acc_ref, *, n_steps, inv_len):
    @pl.when(pl.program_id(0) == 0)
    def _():
        acc_ref[...] = jnp.zeros_like(acc_ref)
    acc_ref[...] += jnp.sum(x_ref[...].astype(jnp.float32), axis=1)
    @pl.when(pl.program_id(0) == n_steps - 1)
    def _():
        o_ref[...] = acc_ref[...] * inv_len


def pallas_seq_mean(x, seq_len):
    """x: (B, S, E) bf16 -> mean over S -> (B, E) f32."""
    B, S, E = x.shape
    ts, sp = _pick_tile(S, _SMEAN_TILE)
    if sp != S:
        x = jnp.pad(x, ((0, 0), (0, sp - S), (0, 0)))
    gs = sp // ts
    return pl.pallas_call(
        functools.partial(_seq_mean_kernel, n_steps=gs, inv_len=1.0 / seq_len),
        out_shape=jax.ShapeDtypeStruct((B, E), jnp.float32),
        grid=(gs,),
        in_specs=[pl.BlockSpec((B, ts, E), lambda i: (0, i, 0))],
        out_specs=pl.BlockSpec((B, E), lambda i: (0, 0)),
        scratch_shapes=[pltpu.VMEM((B, E), jnp.float32)],
        compiler_params=pltpu.CompilerParams(dimension_semantics=("arbitrary",)),
    )(x)


# ----------------------------------------------------------------------------
# Model glue
# ----------------------------------------------------------------------------

def encoder_layer(h2, p, batch, seq, nhead):
    """One post-norm nn.TransformerEncoderLayer (ReLU FFN, dropout=identity).

    h2: (B*S, E) bf16, rows batch-major (b, s).
    """
    # Fused Q/K/V projection -> (B*S, 3E) bf16 slab.
    qkv = pallas_linear(h2, p["wqkv"], p["bqkv"], out_dtype=jnp.bfloat16)
    # Flash attention reads head columns straight from the slab and writes
    # lane-dense (B*S, E) row-major: no head split/merge transposes.
    attn = pallas_flash_attention(qkv, batch, seq, nhead)
    # out-proj + residual + LayerNorm fused in one kernel.
    h2 = pallas_linear_add_ln(attn, p["wo"], p["bo"], h2, p["ln1_g"], p["ln1_b"])
    # FFN: linear+ReLU, then linear + residual + LayerNorm fused.
    ff = pallas_linear(h2, p["w1"], p["b1"], activation="relu",
                       out_dtype=jnp.bfloat16)
    h2 = pallas_linear_add_ln(ff, p["w2"], p["b2"], h2, p["ln2_g"], p["ln2_b"])
    return h2


def transformer_forward(params, x, nhead):
    """Mirror of Transformer.forward.  x: (B, T, a, b, c) with a*b*c = input_dim."""
    B, T = x.shape[0], x.shape[1]
    x = x.reshape(B, T, -1).astype(jnp.float32)       # view(B, T, -1)
    # conv1 + relu + dropout(identity), conv2 + relu + dropout (channels-last).
    # TODO(synk): dropout layers are identity here (eval semantics).
    x = pallas_conv1d_relu(x, params["conv1_w01"], params["conv1_w2z"],
                           params["conv1_b"], out_dtype=jnp.float32)
    x = pallas_conv1d_relu(x, params["conv2_w01"], params["conv2_w2z"],
                           params["conv2_b"], out_dtype=jnp.bfloat16)
    Bt, S, C = x.shape
    h2 = pallas_linear(x.reshape(Bt * S, C), params["lin_w"], params["lin_b"],
                       out_dtype=jnp.bfloat16)
    E = h2.shape[-1]
    # Rows stay batch-major (b, s); the PyTorch permute(1,0,2) is never
    # materialized (attention handles the batch axis, the mean reduces S).
    for lyr in params["layers"]:
        h2 = encoder_layer(h2, lyr, Bt, S, nhead)
    return pallas_seq_mean(h2.reshape(Bt, S, E), S)   # mean over seq -> (B, E)


def init_params(key, input_dim, conv_hidden, hidden_dim, nhead, n_layers, ffn_dim):
    """All weights pre-cast to bf16 / pre-packed once (no per-forward casts)."""
    keys = iter(jax.random.split(key, 8 + 12 * n_layers))

    def w(shape, scale=0.05):
        return scale * jax.random.normal(next(keys), shape, jnp.float32)

    def conv_prep(w_pt):
        # PyTorch Conv1d weight (Cout, Cin, 3) -> stacked tap matrices (2*Cin, Cout).
        # TODO(synk): weights imported from PyTorch would use exactly this transform.
        w0, w1, w2 = (jnp.transpose(w_pt[:, :, k], (1, 0)) for k in range(3))
        w01 = jnp.concatenate([w0, w1], axis=0).astype(jnp.bfloat16)
        w2z = jnp.concatenate([w2, jnp.zeros_like(w2)], axis=0).astype(jnp.bfloat16)
        return w01, w2z

    c1_01, c1_2z = conv_prep(w((conv_hidden, input_dim, 3)))
    c2_01, c2_2z = conv_prep(w((input_dim, conv_hidden, 3)))

    params = {
        "conv1_w01": c1_01, "conv1_w2z": c1_2z, "conv1_b": w((conv_hidden,)),
        "conv2_w01": c2_01, "conv2_w2z": c2_2z, "conv2_b": w((input_dim,)),
        "lin_w": w((input_dim, hidden_dim)).astype(jnp.bfloat16),
        "lin_b": w((hidden_dim,)),
        "layers": [],
    }
    for _ in range(n_layers):
        wq, bq = w((hidden_dim, hidden_dim)), w((hidden_dim,))
        wk, bk = w((hidden_dim, hidden_dim)), w((hidden_dim,))
        wv, bv = w((hidden_dim, hidden_dim)), w((hidden_dim,))
        params["layers"].append({
            # fused in-projection (E, 3E) bf16, pre-concatenated
            "wqkv": jnp.concatenate([wq, wk, wv], axis=1).astype(jnp.bfloat16),
            "bqkv": jnp.concatenate([bq, bk, bv], axis=0),
            "wo": w((hidden_dim, hidden_dim)).astype(jnp.bfloat16),
            "bo": w((hidden_dim,)),
            "w1": w((hidden_dim, ffn_dim)).astype(jnp.bfloat16),
            "b1": w((ffn_dim,)),
            "w2": w((ffn_dim, hidden_dim)).astype(jnp.bfloat16),
            "b2": w((hidden_dim,)),
            "ln1_g": jnp.ones((hidden_dim,), jnp.float32),
            "ln1_b": jnp.zeros((hidden_dim,), jnp.float32),
            "ln2_g": jnp.ones((hidden_dim,), jnp.float32),
            "ln2_b": jnp.zeros((hidden_dim,), jnp.float32),
        })
    return params


if __name__ == "__main__":
    # Small shapes consistent with the module's forward:
    #   x: (B, T, 4, 4, 4) -> flattened feature dim 64 (analogue of 270)
    #   conv hidden 128 (analogue of 512), d_model 256, nhead 2 -> Dh = 128
    #   (same per-head width as the real 1024/8 config, so blocks stay lane-dense)
    B, T = 2, 64
    input_dim, conv_hidden = 64, 128
    hidden_dim, nhead, n_layers, ffn_dim = 256, 2, 2, 512

    key = jax.random.PRNGKey(0)
    pkey, xkey = jax.random.split(key)
    params = init_params(pkey, input_dim, conv_hidden, hidden_dim, nhead,
                         n_layers, ffn_dim)
    x = jax.random.normal(xkey, (B, T, 4, 4, 4), jnp.float32)

    fwd = jax.jit(functools.partial(transformer_forward, nhead=nhead))
    out = jax.block_until_ready(fwd(params, x))
    assert out.shape == (B, hidden_dim), out.shape
    assert bool(jnp.all(jnp.isfinite(out)))
    print("KERNEL_OK")
</pallas_src>

<mosaic_0001>
module attributes {stable_mosaic.version = 11 : i64} {
  func.func @_conv_relu_kernel(%arg0: i32, %arg1: memref<1x33x128xf32, #tpu.memory_space<vmem>>, %arg2: memref<128x128xbf16, #tpu.memory_space<vmem>>, %arg3: memref<128x128xbf16, #tpu.memory_space<vmem>>, %arg4: memref<1x128xf32, #tpu.memory_space<vmem>>, %arg5: memref<1x32x128xf32, #tpu.memory_space<vmem>>) attributes {dimension_semantics = [#tpu.dimension_semantics<parallel>], iteration_bounds = array<i64: 2>, scalar_prefetch = 0 : i64, scratch_operands = 0 : i64, tpu.core_type = #tpu.core_type<tc>, window_params = [{transform_indices = @transform_0, window_bounds = array<i64: 1, 33, 128>}, {pipeline_mode = #tpu.pipeline_mode<synchronous>, transform_indices = @transform_1, window_bounds = array<i64: 128, 128>}, {pipeline_mode = #tpu.pipeline_mode<synchronous>, transform_indices = @transform_2, window_bounds = array<i64: 128, 128>}, {pipeline_mode = #tpu.pipeline_mode<synchronous>, transform_indices = @transform_3, window_bounds = array<i64: 1, 128>}, {transform_indices = @transform_4, window_bounds = array<i64: 1, 32, 128>}]} {
    %c0 = arith.constant 0 : index
    %c0_0 = arith.constant 0 : index
    %c0_1 = arith.constant 0 : index
    %0 = vector.load %arg1[%c0, %c0_0, %c0_1] : memref<1x33x128xf32, #tpu.memory_space<vmem>>, vector<1x32x128xf32>
    %1 = vector.shape_cast %0 : vector<1x32x128xf32> to vector<32x128xf32>
    %2 = arith.truncf %1 : vector<32x128xf32> to vector<32x128xbf16>
    %c0_2 = arith.constant 0 : index
    %c1 = arith.constant 1 : index
    %c0_3 = arith.constant 0 : index
    %3 = vector.load %arg1[%c0_2, %c1, %c0_3] : memref<1x33x128xf32, #tpu.memory_space<vmem>>, vector<1x32x128xf32>
    %4 = vector.shape_cast %3 : vector<1x32x128xf32> to vector<32x128xf32>
    %5 = arith.truncf %4 : vector<32x128xf32> to vector<32x128xbf16>
    %c0_4 = arith.constant 0 : index
    %c0_5 = arith.constant 0 : index
    %6 = vector.load %arg2[%c0_4, %c0_5] : memref<128x128xbf16, #tpu.memory_space<vmem>>, vector<128x128xbf16>
    %cst = arith.constant dense<0.000000e+00> : vector<32x128xf32>
    %7 = tpu.matmul %2, %6, %cst {dimension_numbers = #tpu.dot_dimension_numbers<[1], [0], [0], [1], [0, 0, 1, 1], [], []>} : vector<32x128xbf16>, vector<128x128xbf16>, vector<32x128xf32> -> vector<32x128xf32>
    %c0_6 = arith.constant 0 : index
    %c0_7 = arith.constant 0 : index
    %8 = vector.load %arg3[%c0_6, %c0_7] : memref<128x128xbf16, #tpu.memory_space<vmem>>, vector<128x128xbf16>
    %cst_8 = arith.constant dense<0.000000e+00> : vector<32x128xf32>
    %9 = tpu.matmul %5, %8, %cst_8 {dimension_numbers = #tpu.dot_dimension_numbers<[1], [0], [0], [1], [0, 0, 1, 1], [], []>} : vector<32x128xbf16>, vector<128x128xbf16>, vector<32x128xf32> -> vector<32x128xf32>
    %10 = arith.addf %7, %9 : vector<32x128xf32>
    %c0_9 = arith.constant 0 : index
    %c0_10 = arith.constant 0 : index
    %11 = vector.load %arg4[%c0_9, %c0_10] : memref<1x128xf32, #tpu.memory_space<vmem>>, vector<1x128xf32>
    %12 = vector.broadcast %11 : vector<1x128xf32> to vector<32x128xf32>
    %13 = arith.addf %10, %12 : vector<32x128xf32>
    %cst_11 = arith.constant 0.000000e+00 : f32
    %14 = vector.broadcast %cst_11 : f32 to vector<32x128xf32>
    %15 = arith.maximumf %13, %14 : vector<32x128xf32>
    %c0_12 = arith.constant 0 : index
    %c0_13 = arith.constant 0 : index
    %c0_14 = arith.constant 0 : index
    %16 = vector.load %arg5[%c0_12, %c0_13, %c0_14] : memref<1x32x128xf32, #tpu.memory_space<vmem>>, vector<1x32x128xf32>
    %17 = vector.shape_cast %16 : vector<1x32x128xf32> to vector<32x128xf32>
    %18 = vector.shape_cast %15 : vector<32x128xf32> to vector<1x32x128xf32>
    tpu.vector_store %arg5[%c0_12, %c0_13, %c0_14], %18 {strides = array<i32>} : memref<1x32x128xf32, #tpu.memory_space<vmem>>, vector<1x32x128xf32>,
    return
  }
  func.func @transform_0(%arg0: i32) -> (i32, i32, i32) {
    %c0_i32 = arith.constant 0 : i32
    %c0_i32_0 = arith.constant 0 : i32
    %c0_i32_1 = arith.constant 0 : i32
    return %arg0, %c0_i32, %c0_i32_0 : i32, i32, i32
  }
  func.func @transform_1(%arg0: i32) -> (i32, i32) {
    %c0_i32 = arith.constant 0 : i32
    %c0_i32_0 = arith.constant 0 : i32
    %c0_i32_1 = arith.constant 0 : i32
    return %c0_i32, %c0_i32_0 : i32, i32
  }
  func.func @transform_2(%arg0: i32) -> (i32, i32) {
    %c0_i32 = arith.constant 0 : i32
    %c0_i32_0 = arith.constant 0 : i32
    %c0_i32_1 = arith.constant 0 : i32
    return %c0_i32, %c0_i32_0 : i32, i32
  }
  func.func @transform_3(%arg0: i32) -> (i32, i32) {
    %c0_i32 = arith.constant 0 : i32
    %c0_i32_0 = arith.constant 0 : i32
    %c0_i32_1 = arith.constant 0 : i32
    return %c0_i32, %c0_i32_0 : i32, i32
  }
  func.func @transform_4(%arg0: i32) -> (i32, i32, i32) {
    %c0_i32 = arith.constant 0 : i32
    %c0_i32_0 = arith.constant 0 : i32
    %c0_i32_1 = arith.constant 0 : i32
    return %arg0, %c0_i32, %c0_i32_0 : i32, i32, i32
  }
}

module attributes {stable_mosaic.version = 11 : i64} {
  func.func @_matmul_kernel(%arg0: i32, %arg1: i32, %arg2: i32, %arg3: memref<32x64xbf16, #tpu.memory_space<vmem>>, %arg4: memref<64x256xbf16, #tpu.memory_space<vmem>>, %arg5: memref<1x256xf32, #tpu.memory_space<vmem>>, %arg6: memref<32x256xbf16, #tpu.memory_space<vmem>>, %arg7: memref<32x256xf32, #tpu.memory_space<vmem>>) attributes {dimension_semantics = [#tpu.dimension_semantics<parallel>, #tpu.dimension_semantics<parallel>, #tpu.dimension_semantics<arbitrary>], iteration_bounds = array<i64: 1, 1, 1>, scalar_prefetch = 0 : i64, scratch_operands = 1 : i64, tpu.core_type = #tpu.core_type<tc>, window_params = [{transform_indices = @transform_0, window_bounds = array<i64: 32, 64>}, {transform_indices = @transform_1, window_bounds = array<i64: 64, 256>}, {transform_indices = @transform_2, window_bounds = array<i64: 1, 256>}, {transform_indices = @transform_3, window_bounds = array<i64: 32, 256>}]} {
    %c0_i32 = arith.constant 0 : i32
    %0 = arith.cmpi eq, %arg2, %c0_i32 : i32
    %1 = arith.extui %0 : i1 to i32
    %c0_i32_0 = arith.constant 0 : i32
    %2 = arith.cmpi ne, %1, %c0_i32_0 : i32
    scf.if %2 {
      %cst_10 = arith.constant 0.000000e+00 : f32
      %12 = vector.broadcast %cst_10 : f32 to vector<32x256xf32>
      %c0_11 = arith.constant 0 : index
      %c0_12 = arith.constant 0 : index
      %13 = vector.load %arg7[%c0_11, %c0_12] : memref<32x256xf32, #tpu.memory_space<vmem>>, vector<32x256xf32>
      tpu.vector_store %arg7[%c0_11, %c0_12], %12 {strides = array<i32>} : memref<32x256xf32, #tpu.memory_space<vmem>>, vector<32x256xf32>,
    } else {
    }
    %c0 = arith.constant 0 : index
    %c0_1 = arith.constant 0 : index
    %3 = vector.load %arg7[%c0, %c0_1] : memref<32x256xf32, #tpu.memory_space<vmem>>, vector<32x256xf32>
    %c0_2 = arith.constant 0 : index
    %c0_3 = arith.constant 0 : index
    %4 = vector.load %arg3[%c0_2, %c0_3] : memref<32x64xbf16, #tpu.memory_space<vmem>>, vector<32x64xbf16>
    %c0_4 = arith.constant 0 : index
    %c0_5 = arith.constant 0 : index
    %5 = vector.load %arg4[%c0_4, %c0_5] : memref<64x256xbf16, #tpu.memory_space<vmem>>, vector<64x256xbf16>
    %cst = arith.constant dense<0.000000e+00> : vector<32x256xf32>
    %6 = tpu.matmul %4, %5, %cst {dimension_numbers = #tpu.dot_dimension_numbers<[1], [0], [0], [1], [0, 0, 1, 1], [], []>} : vector<32x64xbf16>, vector<64x256xbf16>, vector<32x256xf32> -> vector<32x256xf32>
    %7 = arith.addf %3, %6 : vector<32x256xf32>
    %c0_6 = arith.constant 0 : index
    %c0_7 = arith.constant 0 : index
    %8 = vector.load %arg7[%c0_6, %c0_7] : memref<32x256xf32, #tpu.memory_space<vmem>>, vector<32x256xf32>
    tpu.vector_store %arg7[%c0_6, %c0_7], %7 {strides = array<i32>} : memref<32x256xf32, #tpu.memory_space<vmem>>, vector<32x256xf32>,
    %c0_i32_8 = arith.constant 0 : i32
    %9 = arith.cmpi eq, %arg2, %c0_i32_8 : i32
    %10 = arith.extui %9 : i1 to i32
    %c0_i32_9 = arith.constant 0 : i32
    %11 = arith.cmpi ne, %10, %c0_i32_9 : i32
    scf.if %11 {
      %c0_10 = arith.constant 0 : index
      %c0_11 = arith.constant 0 : index
      %12 = vector.load %arg7[%c0_10, %c0_11] : memref<32x256xf32, #tpu.memory_space<vmem>>, vector<32x256xf32>
      %c0_12 = arith.constant 0 : index
      %c0_13 = arith.constant 0 : index
      %13 = vector.load %arg5[%c0_12, %c0_13] : memref<1x256xf32, #tpu.memory_space<vmem>>, vector<1x256xf32>
      %14 = vector.broadcast %13 : vector<1x256xf32> to vector<32x256xf32>
      %15 = arith.addf %12, %14 : vector<32x256xf32>
      %16 = arith.truncf %15 : vector<32x256xf32> to vector<32x256xbf16>
      %c0_14 = arith.constant 0 : index
      %c0_15 = arith.constant 0 : index
      %17 = vector.load %arg6[%c0_14, %c0_15] : memref<32x256xbf16, #tpu.memory_space<vmem>>, vector<32x256xbf16>
      tpu.vector_store %arg6[%c0_14, %c0_15], %16 {strides = array<i32>} : memref<32x256xbf16, #tpu.memory_space<vmem>>, vector<32x256xbf16>,
    } else {
    }
    return
  }
  func.func @transform_0(%arg0: i32, %arg1: i32, %arg2: i32) -> (i32, i32) {
    %c0_i32 = arith.constant 0 : i32
    return %arg0, %arg2 : i32, i32
  }
  func.func @transform_1(%arg0: i32, %arg1: i32, %arg2: i32) -> (i32, i32) {
    %c0_i32 = arith.constant 0 : i32
    return %arg2, %arg1 : i32, i32
  }
  func.func @transform_2(%arg0: i32, %arg1: i32, %arg2: i32) -> (i32, i32) {
    %c0_i32 = arith.constant 0 : i32
    %c0_i32_0 = arith.constant 0 : i32
    return %c0_i32, %arg1 : i32, i32
  }
  func.func @transform_3(%arg0: i32, %arg1: i32, %arg2: i32) -> (i32, i32) {
    %c0_i32 = arith.constant 0 : i32
    return %arg0, %arg1 : i32, i32
  }
}

module attributes {stable_mosaic.version = 11 : i64} {
  func.func @_conv_relu_kernel(%arg0: i32, %arg1: memref<1x17x256xf32, #tpu.memory_space<vmem>>, %arg2: memref<256x64xbf16, #tpu.memory_space<vmem>>, %arg3: memref<256x64xbf16, #tpu.memory_space<vmem>>, %arg4: memref<1x64xf32, #tpu.memory_space<vmem>>, %arg5: memref<1x16x64xbf16, #tpu.memory_space<vmem>>) attributes {dimension_semantics = [#tpu.dimension_semantics<parallel>], iteration_bounds = array<i64: 2>, scalar_prefetch = 0 : i64, scratch_operands = 0 : i64, tpu.core_type = #tpu.core_type<tc>, window_params = [{transform_indices = @transform_0, window_bounds = array<i64: 1, 17, 256>}, {pipeline_mode = #tpu.pipeline_mode<synchronous>, transform_indices = @transform_1, window_bounds = array<i64: 256, 64>}, {pipeline_mode = #tpu.pipeline_mode<synchronous>, transform_indices = @transform_2, window_bounds = array<i64: 256, 64>}, {pipeline_mode = #tpu.pipeline_mode<synchronous>, transform_indices = @transform_3, window_bounds = array<i64: 1, 64>}, {transform_indices = @transform_4, window_bounds = array<i64: 1, 16, 64>}]} {
    %c0 = arith.constant 0 : index
    %c0_0 = arith.constant 0 : index
    %c0_1 = arith.constant 0 : index
    %0 = vector.load %arg1[%c0, %c0_0, %c0_1] : memref<1x17x256xf32, #tpu.memory_space<vmem>>, vector<1x16x256xf32>
    %1 = vector.shape_cast %0 : vector<1x16x256xf32> to vector<16x256xf32>
    %2 = arith.truncf %1 : vector<16x256xf32> to vector<16x256xbf16>
    %c0_2 = arith.constant 0 : index
    %c1 = arith.constant 1 : index
    %c0_3 = arith.constant 0 : index
    %3 = vector.load %arg1[%c0_2, %c1, %c0_3] : memref<1x17x256xf32, #tpu.memory_space<vmem>>, vector<1x16x256xf32>
    %4 = vector.shape_cast %3 : vector<1x16x256xf32> to vector<16x256xf32>
    %5 = arith.truncf %4 : vector<16x256xf32> to vector<16x256xbf16>
    %c0_4 = arith.constant 0 : index
    %c0_5 = arith.constant 0 : index
    %6 = vector.load %arg2[%c0_4, %c0_5] : memref<256x64xbf16, #tpu.memory_space<vmem>>, vector<256x64xbf16>
    %cst = arith.constant dense<0.000000e+00> : vector<16x64xf32>
    %7 = tpu.matmul %2, %6, %cst {dimension_numbers = #tpu.dot_dimension_numbers<[1], [0], [0], [1], [0, 0, 1, 1], [], []>} : vector<16x256xbf16>, vector<256x64xbf16>, vector<16x64xf32> -> vector<16x64xf32>
    %c0_6 = arith.constant 0 : index
    %c0_7 = arith.constant 0 : index
    %8 = vector.load %arg3[%c0_6, %c0_7] : memref<256x64xbf16, #tpu.memory_space<vmem>>, vector<256x64xbf16>
    %cst_8 = arith.constant dense<0.000000e+00> : vector<16x64xf32>
    %9 = tpu.matmul %5, %8, %cst_8 {dimension_numbers = #tpu.dot_dimension_numbers<[1], [0], [0], [1], [0, 0, 1, 1], [], []>} : vector<16x256xbf16>, vector<256x64xbf16>, vector<16x64xf32> -> vector<16x64xf32>
    %10 = arith.addf %7, %9 : vector<16x64xf32>
    %c0_9 = arith.constant 0 : index
    %c0_10 = arith.constant 0 : index
    %11 = vector.load %arg4[%c0_9, %c0_10] : memref<1x64xf32, #tpu.memory_space<vmem>>, vector<1x64xf32>
    %12 = vector.broadcast %11 : vector<1x64xf32> to vector<16x64xf32>
    %13 = arith.addf %10, %12 : vector<16x64xf32>
    %cst_11 = arith.constant 0.000000e+00 : f32
    %14 = vector.broadcast %cst_11 : f32 to vector<16x64xf32>
    %15 = arith.maximumf %13, %14 : vector<16x64xf32>
    %16 = arith.truncf %15 : vector<16x64xf32> to vector<16x64xbf16>
    %c0_12 = arith.constant 0 : index
    %c0_13 = arith.constant 0 : index
    %c0_14 = arith.constant 0 : index
    %17 = vector.load %arg5[%c0_12, %c0_13, %c0_14] : memref<1x16x64xbf16, #tpu.memory_space<vmem>>, vector<1x16x64xbf16>
    %18 = vector.shape_cast %17 : vector<1x16x64xbf16> to vector<16x64xbf16>
    %19 = vector.shape_cast %16 : vector<16x64xbf16> to vector<1x16x64xbf16>
    tpu.vector_store %arg5[%c0_12, %c0_13, %c0_14], %19 {strides = array<i32>} : memref<1x16x64xbf16, #tpu.memory_space<vmem>>, vector<1x16x64xbf16>,
    return
  }
  func.func @transform_0(%arg0: i32) -> (i32, i32, i32) {
    %c0_i32 = arith.constant 0 : i32
    %c0_i32_0 = arith.constant 0 : i32
    %c0_i32_1 = arith.constant 0 : i32
    return %arg0, %c0_i32, %c0_i32_0 : i32, i32, i32
  }
  func.func @transform_1(%arg0: i32) -> (i32, i32) {
    %c0_i32 = arith.constant 0 : i32
    %c0_i32_0 = arith.constant 0 : i32
    %c0_i32_1 = arith.constant 0 : i32
    return %c0_i32, %c0_i32_0 : i32, i32
  }
  func.func @transform_2(%arg0: i32) -> (i32, i32) {
    %c0_i32 = arith.constant 0 : i32
    %c0_i32_0 = arith.constant 0 : i32
    %c0_i32_1 = arith.constant 0 : i32
    return %c0_i32, %c0_i32_0 : i32, i32
  }
  func.func @transform_3(%arg0: i32) -> (i32, i32) {
    %c0_i32 = arith.constant 0 : i32
    %c0_i32_0 = arith.constant 0 : i32
    %c0_i32_1 = arith.constant 0 : i32
    return %c0_i32, %c0_i32_0 : i32, i32
  }
  func.func @transform_4(%arg0: i32) -> (i32, i32, i32) {
    %c0_i32 = arith.constant 0 : i32
    %c0_i32_0 = arith.constant 0 : i32
    %c0_i32_1 = arith.constant 0 : i32
    return %arg0, %c0_i32, %c0_i32_0 : i32, i32, i32
  }
}

module attributes {stable_mosaic.version = 11 : i64} {
  func.func @_matmul_kernel(%arg0: i32, %arg1: i32, %arg2: i32, %arg3: memref<32x256xbf16, #tpu.memory_space<vmem>>, %arg4: memref<256x768xbf16, #tpu.memory_space<vmem>>, %arg5: memref<1x768xf32, #tpu.memory_space<vmem>>, %arg6: memref<32x768xbf16, #tpu.memory_space<vmem>>, %arg7: memref<32x768xf32, #tpu.memory_space<vmem>>) attributes {dimension_semantics = [#tpu.dimension_semantics<parallel>, #tpu.dimension_semantics<parallel>, #tpu.dimension_semantics<arbitrary>], iteration_bounds = array<i64: 1, 1, 1>, scalar_prefetch = 0 : i64, scratch_operands = 1 : i64, tpu.core_type = #tpu.core_type<tc>, window_params = [{transform_indices = @transform_0, window_bounds = array<i64: 32, 256>}, {transform_indices = @transform_1, window_bounds = array<i64: 256, 768>}, {transform_indices = @transform_2, window_bounds = array<i64: 1, 768>}, {transform_indices = @transform_3, window_bounds = array<i64: 32, 768>}]} {
    %c0_i32 = arith.constant 0 : i32
    %0 = arith.cmpi eq, %arg2, %c0_i32 : i32
    %1 = arith.extui %0 : i1 to i32
    %c0_i32_0 = arith.constant 0 : i32
    %2 = arith.cmpi ne, %1, %c0_i32_0 : i32
    scf.if %2 {
      %cst_10 = arith.constant 0.000000e+00 : f32
      %12 = vector.broadcast %cst_10 : f32 to vector<32x768xf32>
      %c0_11 = arith.constant 0 : index
      %c0_12 = arith.constant 0 : index
      %13 = vector.load %arg7[%c0_11, %c0_12] : memref<32x768xf32, #tpu.memory_space<vmem>>, vector<32x768xf32>
      tpu.vector_store %arg7[%c0_11, %c0_12], %12 {strides = array<i32>} : memref<32x768xf32, #tpu.memory_space<vmem>>, vector<32x768xf32>,
    } else {
    }
    %c0 = arith.constant 0 : index
    %c0_1 = arith.constant 0 : index
    %3 = vector.load %arg7[%c0, %c0_1] : memref<32x768xf32, #tpu.memory_space<vmem>>, vector<32x768xf32>
    %c0_2 = arith.constant 0 : index
    %c0_3 = arith.constant 0 : index
    %4 = vector.load %arg3[%c0_2, %c0_3] : memref<32x256xbf16, #tpu.memory_space<vmem>>, vector<32x256xbf16>
    %c0_4 = arith.constant 0 : index
    %c0_5 = arith.constant 0 : index
    %5 = vector.load %arg4[%c0_4, %c0_5] : memref<256x768xbf16, #tpu.memory_space<vmem>>, vector<256x768xbf16>
    %cst = arith.constant dense<0.000000e+00> : vector<32x768xf32>
    %6 = tpu.matmul %4, %5, %cst {dimension_numbers = #tpu.dot_dimension_numbers<[1], [0], [0], [1], [0, 0, 1, 1], [], []>} : vector<32x256xbf16>, vector<256x768xbf16>, vector<32x768xf32> -> vector<32x768xf32>
    %7 = arith.addf %3, %6 : vector<32x768xf32>
    %c0_6 = arith.constant 0 : index
    %c0_7 = arith.constant 0 : index
    %8 = vector.load %arg7[%c0_6, %c0_7] : memref<32x768xf32, #tpu.memory_space<vmem>>, vector<32x768xf32>
    tpu.vector_store %arg7[%c0_6, %c0_7], %7 {strides = array<i32>} : memref<32x768xf32, #tpu.memory_space<vmem>>, vector<32x768xf32>,
    %c0_i32_8 = arith.constant 0 : i32
    %9 = arith.cmpi eq, %arg2, %c0_i32_8 : i32
    %10 = arith.extui %9 : i1 to i32
    %c0_i32_9 = arith.constant 0 : i32
    %11 = arith.cmpi ne, %10, %c0_i32_9 : i32
    scf.if %11 {
      %c0_10 = arith.constant 0 : index
      %c0_11 = arith.constant 0 : index
      %12 = vector.load %arg7[%c0_10, %c0_11] : memref<32x768xf32, #tpu.memory_space<vmem>>, vector<32x768xf32>
      %c0_12 = arith.constant 0 : index
      %c0_13 = arith.constant 0 : index
      %13 = vector.load %arg5[%c0_12, %c0_13] : memref<1x768xf32, #tpu.memory_space<vmem>>, vector<1x768xf32>
      %14 = vector.broadcast %13 : vector<1x768xf32> to vector<32x768xf32>
      %15 = arith.addf %12, %14 : vector<32x768xf32>
      %16 = arith.truncf %15 : vector<32x768xf32> to vector<32x768xbf16>
      %c0_14 = arith.constant 0 : index
      %c0_15 = arith.constant 0 : index
      %17 = vector.load %arg6[%c0_14, %c0_15] : memref<32x768xbf16, #tpu.memory_space<vmem>>, vector<32x768xbf16>
      tpu.vector_store %arg6[%c0_14, %c0_15], %16 {strides = array<i32>} : memref<32x768xbf16, #tpu.memory_space<vmem>>, vector<32x768xbf16>,
    } else {
    }
    return
  }
  func.func @transform_0(%arg0: i32, %arg1: i32, %arg2: i32) -> (i32, i32) {
    %c0_i32 = arith.constant 0 : i32
    return %arg0, %arg2 : i32, i32
  }
  func.func @transform_1(%arg0: i32, %arg1: i32, %arg2: i32) -> (i32, i32) {
    %c0_i32 = arith.constant 0 : i32
    return %arg2, %arg1 : i32, i32
  }
  func.func @transform_2(%arg0: i32, %arg1: i32, %arg2: i32) -> (i32, i32) {
    %c0_i32 = arith.constant 0 : i32
    %c0_i32_0 = arith.constant 0 : i32
    return %c0_i32, %arg1 : i32, i32
  }
  func.func @transform_3(%arg0: i32, %arg1: i32, %arg2: i32) -> (i32, i32) {
    %c0_i32 = arith.constant 0 : i32
    return %arg0, %arg1 : i32, i32
  }
}

module attributes {stable_mosaic.version = 11 : i64} {
  func.func @_flash_attn_kernel(%arg0: i32, %arg1: i32, %arg2: i32, %arg3: i32, %arg4: memref<1x16x128xbf16, #tpu.memory_space<vmem>>, %arg5: memref<1x16x128xbf16, #tpu.memory_space<vmem>>, %arg6: memref<1x16x128xbf16, #tpu.memory_space<vmem>>, %arg7: memref<1x16x128xbf16, #tpu.memory_space<vmem>>, %arg8: memref<16x1xf32, #tpu.memory_space<vmem>>, %arg9: memref<16x1xf32, #tpu.memory_space<vmem>>, %arg10: memref<16x128xf32, #tpu.memory_space<vmem>>) attributes {dimension_semantics = [#tpu.dimension_semantics<parallel>, #tpu.dimension_semantics<parallel>, #tpu.dimension_semantics<parallel>, #tpu.dimension_semantics<arbitrary>], iteration_bounds = array<i64: 2, 2, 1, 1>, scalar_prefetch = 0 : i64, scratch_operands = 3 : i64, tpu.core_type = #tpu.core_type<tc>, window_params = [{transform_indices = @transform_0, window_bounds = array<i64: 1, 16, 128>}, {transform_indices = @transform_1, window_bounds = array<i64: 1, 16, 128>}, {transform_indices = @transform_2, window_bounds = array<i64: 1, 16, 128>}, {transform_indices = @transform_3, window_bounds = array<i64: 1, 16, 128>}]} {
    %c0_i32 = arith.constant 0 : i32
    %0 = arith.cmpi eq, %arg3, %c0_i32 : i32
    %1 = arith.extui %0 : i1 to i32
    %c0_i32_0 = arith.constant 0 : i32
    %2 = arith.cmpi ne, %1, %c0_i32_0 : i32
    scf.if %2 {
      %cst_27 = arith.constant 0xFF800000 : f32
      %38 = vector.broadcast %cst_27 : f32 to vector<16x1xf32>
      %c0_28 = arith.constant 0 : index
      %c0_29 = arith.constant 0 : index
      %39 = vector.load %arg8[%c0_28, %c0_29] : memref<16x1xf32, #tpu.memory_space<vmem>>, vector<16x1xf32>
      tpu.vector_store %arg8[%c0_28, %c0_29], %38 {strides = array<i32>} : memref<16x1xf32, #tpu.memory_space<vmem>>, vector<16x1xf32>,
      %cst_30 = arith.constant 0.000000e+00 : f32
      %40 = vector.broadcast %cst_30 : f32 to vector<16x1xf32>
      %c0_31 = arith.constant 0 : index
      %c0_32 = arith.constant 0 : index
      %41 = vector.load %arg9[%c0_31, %c0_32] : memref<16x1xf32, #tpu.memory_space<vmem>>, vector<16x1xf32>
      tpu.vector_store %arg9[%c0_31, %c0_32], %40 {strides = array<i32>} : memref<16x1xf32, #tpu.memory_space<vmem>>, vector<16x1xf32>,
      %cst_33 = arith.constant 0.000000e+00 : f32
      %42 = vector.broadcast %cst_33 : f32 to vector<16x128xf32>
      %c0_34 = arith.constant 0 : index
      %c0_35 = arith.constant 0 : index
      %43 = vector.load %arg10[%c0_34, %c0_35] : memref<16x128xf32, #tpu.memory_space<vmem>>, vector<16x128xf32>
      tpu.vector_store %arg10[%c0_34, %c0_35], %42 {strides = array<i32>} : memref<16x128xf32, #tpu.memory_space<vmem>>, vector<16x128xf32>,
    } else {
    }
    %c0 = arith.constant 0 : index
    %c0_1 = arith.constant 0 : index
    %c0_2 = arith.constant 0 : index
    %3 = vector.load %arg4[%c0, %c0_1, %c0_2] : memref<1x16x128xbf16, #tpu.memory_space<vmem>>, vector<1x16x128xbf16>
    %4 = vector.shape_cast %3 : vector<1x16x128xbf16> to vector<16x128xbf16>
    %c0_3 = arith.constant 0 : index
    %c0_4 = arith.constant 0 : index
    %c0_5 = arith.constant 0 : index
    %5 = vector.load %arg5[%c0_3, %c0_4, %c0_5] : memref<1x16x128xbf16, #tpu.memory_space<vmem>>, vector<1x16x128xbf16>
    %6 = vector.shape_cast %5 : vector<1x16x128xbf16> to vector<16x128xbf16>
    %c0_6 = arith.constant 0 : index
    %c0_7 = arith.constant 0 : index
    %c0_8 = arith.constant 0 : index
    %7 = vector.load %arg6[%c0_6, %c0_7, %c0_8] : memref<1x16x128xbf16, #tpu.memory_space<vmem>>, vector<1x16x128xbf16>
    %8 = vector.shape_cast %7 : vector<1x16x128xbf16> to vector<16x128xbf16>
    %cst = arith.constant dense<0.000000e+00> : vector<16x16xf32>
    %9 = tpu.matmul %4, %6, %cst {dimension_numbers = #tpu.dot_dimension_numbers<[1], [1], [0], [0], [0, 0, 1, 0], [], []>} : vector<16x128xbf16>, vector<16x128xbf16>, vector<16x16xf32> -> vector<16x16xf32>
    %cst_9 = arith.constant 0.0883883461 : f32
    %10 = vector.broadcast %cst_9 : f32 to vector<16x16xf32>
    %11 = arith.mulf %9, %10 : vector<16x16xf32>
    %c0_10 = arith.constant 0 : index
    %c0_11 = arith.constant 0 : index
    %12 = vector.load %arg8[%c0_10, %c0_11] : memref<16x1xf32, #tpu.memory_space<vmem>>, vector<16x1xf32>
    %cst_12 = arith.constant dense<0xFF800000> : vector<16xf32>
    %13 = vector.multi_reduction <maximumf>, %11, %cst_12 [1] : vector<16x16xf32> to vector<16xf32>
    %14 = vector.shape_cast %13 : vector<16xf32> to vector<16x1xf32>
    %15 = arith.maximumf %12, %14 : vector<16x1xf32>
    %16 = arith.subf %12, %15 : vector<16x1xf32>
    %17 = math.exp %16 : vector<16x1xf32>
    %18 = vector.broadcast %15 : vector<16x1xf32> to vector<16x16xf32>
    %19 = arith.subf %11, %18 : vector<16x16xf32>
    %20 = math.exp %19 : vector<16x16xf32>
    %c0_13 = arith.constant 0 : index
    %c0_14 = arith.constant 0 : index
    %21 = vector.load %arg9[%c0_13, %c0_14] : memref<16x1xf32, #tpu.memory_space<vmem>>, vector<16x1xf32>
    %22 = arith.mulf %17, %21 : vector<16x1xf32>
    %cst_15 = arith.constant dense<0.000000e+00> : vector<16xf32>
    %23 = vector.multi_reduction <add>, %20, %cst_15 [1] : vector<16x16xf32> to vector<16xf32>
    %24 = vector.shape_cast %23 : vector<16xf32> to vector<16x1xf32>
    %25 = arith.addf %22, %24 : vector<16x1xf32>
    %c0_16 = arith.constant 0 : index
    %c0_17 = arith.constant 0 : index
    %26 = vector.load %arg9[%c0_16, %c0_17] : memref<16x1xf32, #tpu.memory_space<vmem>>, vector<16x1xf32>
    tpu.vector_store %arg9[%c0_16, %c0_17], %25 {strides = array<i32>} : memref<16x1xf32, #tpu.memory_space<vmem>>, vector<16x1xf32>,
    %c0_18 = arith.constant 0 : index
    %c0_19 = arith.constant 0 : index
    %27 = vector.load %arg10[%c0_18, %c0_19] : memref<16x128xf32, #tpu.memory_space<vmem>>, vector<16x128xf32>
    %28 = vector.broadcast %17 : vector<16x1xf32> to vector<16x128xf32>
    %29 = arith.mulf %28, %27 : vector<16x128xf32>
    %30 = arith.truncf %20 : vector<16x16xf32> to vector<16x16xbf16>
    %cst_20 = arith.constant dense<0.000000e+00> : vector<16x128xf32>
    %31 = tpu.matmul %30, %8, %cst_20 {dimension_numbers = #tpu.dot_dimension_numbers<[1], [0], [0], [1], [0, 0, 1, 1], [], []>} : vector<16x16xbf16>, vector<16x128xbf16>, vector<16x128xf32> -> vector<16x128xf32>
    %32 = arith.addf %29, %31 : vector<16x128xf32>
    %c0_21 = arith.constant 0 : index
    %c0_22 = arith.constant 0 : index
    %33 = vector.load %arg10[%c0_21, %c0_22] : memref<16x128xf32, #tpu.memory_space<vmem>>, vector<16x128xf32>
    tpu.vector_store %arg10[%c0_21, %c0_22], %32 {strides = array<i32>} : memref<16x128xf32, #tpu.memory_space<vmem>>, vector<16x128xf32>,
    %c0_23 = arith.constant 0 : index
    %c0_24 = arith.constant 0 : index
    %34 = vector.load %arg8[%c0_23, %c0_24] : memref<16x1xf32, #tpu.memory_space<vmem>>, vector<16x1xf32>
    tpu.vector_store %arg8[%c0_23, %c0_24], %15 {strides = array<i32>} : memref<16x1xf32, #tpu.memory_space<vmem>>, vector<16x1xf32>,
    %c0_i32_25 = arith.constant 0 : i32
    %35 = arith.cmpi eq, %arg3, %c0_i32_25 : i32
    %36 = arith.extui %35 : i1 to i32
    %c0_i32_26 = arith.constant 0 : i32
    %37 = arith.cmpi ne, %36, %c0_i32_26 : i32
    scf.if %37 {
      %c0_27 = arith.constant 0 : index
      %c0_28 = arith.constant 0 : index
      %38 = vector.load %arg9[%c0_27, %c0_28] : memref<16x1xf32, #tpu.memory_space<vmem>>, vector<16x1xf32>
      %39 = tpu.reciprocal %38 {approx = true} : vector<16x1xf32> -> vector<16x1xf32>
      %c0_29 = arith.constant 0 : index
      %c0_30 = arith.constant 0 : index
      %40 = vector.load %arg10[%c0_29, %c0_30] : memref<16x128xf32, #tpu.memory_space<vmem>>, vector<16x128xf32>
      %41 = vector.broadcast %39 : vector<16x1xf32> to vector<16x128xf32>
      %42 = arith.mulf %40, %41 : vector<16x128xf32>
      %43 = arith.truncf %42 : vector<16x128xf32> to vector<16x128xbf16>
      %c0_31 = arith.constant 0 : index
      %c0_32 = arith.constant 0 : index
      %c0_33 = arith.constant 0 : index
      %44 = vector.load %arg7[%c0_31, %c0_32, %c0_33] : memref<1x16x128xbf16, #tpu.memory_space<vmem>>, vector<1x16x128xbf16>
      %45 = vector.shape_cast %44 : vector<1x16x128xbf16> to vector<16x128xbf16>
      %46 = vector.shape_cast %43 : vector<16x128xbf16> to vector<1x16x128xbf16>
      tpu.vector_store %arg7[%c0_31, %c0_32, %c0_33], %46 {strides = array<i32>} : memref<1x16x128xbf16, #tpu.memory_space<vmem>>, vector<1x16x128xbf16>,
    } else {
    }
    return
  }
  func.func @transform_0(%arg0: i32, %arg1: i32, %arg2: i32, %arg3: i32) -> (i32, i32, i32) {
    %c0_i32 = arith.constant 0 : i32
    return %arg0, %arg2, %arg1 : i32, i32, i32
  }
  func.func @transform_1(%arg0: i32, %arg1: i32, %arg2: i32, %arg3: i32) -> (i32, i32, i32) {
    %c2_i32 = arith.constant 2 : i32
    %0 = arith.addi %c2_i32, %arg1 : i32
    %c0_i32 = arith.constant 0 : i32
    return %arg0, %arg3, %0 : i32, i32, i32
  }
  func.func @transform_2(%arg0: i32, %arg1: i32, %arg2: i32, %arg3: i32) -> (i32, i32, i32) {
    %c4_i32 = arith.constant 4 : i32
    %0 = arith.addi %c4_i32, %arg1 : i32
    %c0_i32 = arith.constant 0 : i32
    return %arg0, %arg3, %0 : i32, i32, i32
  }
  func.func @transform_3(%arg0: i32, %arg1: i32, %arg2: i32, %arg3: i32) -> (i32, i32, i32) {
    %c0_i32 = arith.constant 0 : i32
    return %arg0, %arg2, %arg1 : i32, i32, i32
  }
}

module attributes {stable_mosaic.version = 11 : i64} {
  func.func @_matmul_add_ln_kernel(%arg0: i32, %arg1: i32, %arg2: memref<32x256xbf16, #tpu.memory_space<vmem>>, %arg3: memref<256x256xbf16, #tpu.memory_space<vmem>>, %arg4: memref<1x256xf32, #tpu.memory_space<vmem>>, %arg5: memref<32x256xbf16, #tpu.memory_space<vmem>>, %arg6: memref<1x256xf32, #tpu.memory_space<vmem>>, %arg7: memref<1x256xf32, #tpu.memory_space<vmem>>, %arg8: memref<32x256xbf16, #tpu.memory_space<vmem>>, %arg9: memref<32x256xf32, #tpu.memory_space<vmem>>) attributes {dimension_semantics = [#tpu.dimension_semantics<parallel>, #tpu.dimension_semantics<arbitrary>], iteration_bounds = array<i64: 1, 1>, scalar_prefetch = 0 : i64, scratch_operands = 1 : i64, tpu.core_type = #tpu.core_type<tc>, window_params = [{transform_indices = @transform_0, window_bounds = array<i64: 32, 256>}, {transform_indices = @transform_1, window_bounds = array<i64: 256, 256>}, {pipeline_mode = #tpu.pipeline_mode<synchronous>, transform_indices = @transform_2, window_bounds = array<i64: 1, 256>}, {transform_indices = @transform_3, window_bounds = array<i64: 32, 256>}, {pipeline_mode = #tpu.pipeline_mode<synchronous>, transform_indices = @transform_4, window_bounds = array<i64: 1, 256>}, {pipeline_mode = #tpu.pipeline_mode<synchronous>, transform_indices = @transform_5, window_bounds = array<i64: 1, 256>}, {transform_indices = @transform_6, window_bounds = array<i64: 32, 256>}]} {
    %c0_i32 = arith.constant 0 : i32
    %0 = arith.cmpi eq, %arg1, %c0_i32 : i32
    %1 = arith.extui %0 : i1 to i32
    %c0_i32_0 = arith.constant 0 : i32
    %2 = arith.cmpi ne, %1, %c0_i32_0 : i32
    scf.if %2 {
      %cst_10 = arith.constant 0.000000e+00 : f32
      %12 = vector.broadcast %cst_10 : f32 to vector<32x256xf32>
      %c0_11 = arith.constant 0 : index
      %c0_12 = arith.constant 0 : index
      %13 = vector.load %arg9[%c0_11, %c0_12] : memref<32x256xf32, #tpu.memory_space<vmem>>, vector<32x256xf32>
      tpu.vector_store %arg9[%c0_11, %c0_12], %12 {strides = array<i32>} : memref<32x256xf32, #tpu.memory_space<vmem>>, vector<32x256xf32>,
    } else {
    }
    %c0 = arith.constant 0 : index
    %c0_1 = arith.constant 0 : index
    %3 = vector.load %arg9[%c0, %c0_1] : memref<32x256xf32, #tpu.memory_space<vmem>>, vector<32x256xf32>
    %c0_2 = arith.constant 0 : index
    %c0_3 = arith.constant 0 : index
    %4 = vector.load %arg2[%c0_2, %c0_3] : memref<32x256xbf16, #tpu.memory_space<vmem>>, vector<32x256xbf16>
    %c0_4 = arith.constant 0 : index
    %c0_5 = arith.constant 0 : index
    %5 = vector.load %arg3[%c0_4, %c0_5] : memref<256x256xbf16, #tpu.memory_space<vmem>>, vector<256x256xbf16>
    %cst = arith.constant dense<0.000000e+00> : vector<32x256xf32>
    %6 = tpu.matmul %4, %5, %cst {dimension_numbers = #tpu.dot_dimension_numbers<[1], [0], [0], [1], [0, 0, 1, 1], [], []>} : vector<32x256xbf16>, vector<256x256xbf16>, vector<32x256xf32> -> vector<32x256xf32>
    %7 = arith.addf %3, %6 : vector<32x256xf32>
    %c0_6 = arith.constant 0 : index
    %c0_7 = arith.constant 0 : index
    %8 = vector.load %arg9[%c0_6, %c0_7] : memref<32x256xf32, #tpu.memory_space<vmem>>, vector<32x256xf32>
    tpu.vector_store %arg9[%c0_6, %c0_7], %7 {strides = array<i32>} : memref<32x256xf32, #tpu.memory_space<vmem>>, vector<32x256xf32>,
    %c0_i32_8 = arith.constant 0 : i32
    %9 = arith.cmpi eq, %arg1, %c0_i32_8 : i32
    %10 = arith.extui %9 : i1 to i32
    %c0_i32_9 = arith.constant 0 : i32
    %11 = arith.cmpi ne, %10, %c0_i32_9 : i32
    scf.if %11 {
      %c0_10 = arith.constant 0 : index
      %c0_11 = arith.constant 0 : index
      %12 = vector.load %arg9[%c0_10, %c0_11] : memref<32x256xf32, #tpu.memory_space<vmem>>, vector<32x256xf32>
      %c0_12 = arith.constant 0 : index
      %c0_13 = arith.constant 0 : index
      %13 = vector.load %arg4[%c0_12, %c0_13] : memref<1x256xf32, #tpu.memory_space<vmem>>, vector<1x256xf32>
      %14 = vector.broadcast %13 : vector<1x256xf32> to vector<32x256xf32>
      %15 = arith.addf %12, %14 : vector<32x256xf32>
      %c0_14 = arith.constant 0 : index
      %c0_15 = arith.constant 0 : index
      %16 = vector.load %arg5[%c0_14, %c0_15] : memref<32x256xbf16, #tpu.memory_space<vmem>>, vector<32x256xbf16>
      %17 = arith.extf %16 : vector<32x256xbf16> to vector<32x256xf32>
      %18 = arith.addf %15, %17 : vector<32x256xf32>
      %cst_16 = arith.constant dense<0.000000e+00> : vector<32xf32>
      %19 = vector.multi_reduction <add>, %18, %cst_16 [1] : vector<32x256xf32> to vector<32xf32>
      %20 = vector.shape_cast %19 : vector<32xf32> to vector<32x1xf32>
      %cst_17 = arith.constant 2.560000e+02 : f32
      %21 = vector.broadcast %cst_17 : f32 to vector<32x1xf32>
      %22 = arith.divf %20, %21 : vector<32x1xf32>
      %23 = vector.broadcast %22 : vector<32x1xf32> to vector<32x256xf32>
      %24 = arith.subf %18, %23 : vector<32x256xf32>
      %25 = arith.mulf %24, %24 : vector<32x256xf32>
      %cst_18 = arith.constant dense<0.000000e+00> : vector<32xf32>
      %26 = vector.multi_reduction <add>, %25, %cst_18 [1] : vector<32x256xf32> to vector<32xf32>
      %27 = vector.shape_cast %26 : vector<32xf32> to vector<32x1xf32>
      %cst_19 = arith.constant 2.560000e+02 : f32
      %28 = vector.broadcast %cst_19 : f32 to vector<32x1xf32>
      %29 = arith.divf %27, %28 : vector<32x1xf32>
      %30 = vector.broadcast %22 : vector<32x1xf32> to vector<32x256xf32>
      %31 = arith.subf %18, %30 : vector<32x256xf32>
      %cst_20 = arith.constant 9.99999974E-6 : f32
      %32 = vector.broadcast %cst_20 : f32 to vector<32x1xf32>
      %33 = arith.addf %29, %32 : vector<32x1xf32>
      %34 = math.rsqrt %33 : vector<32x1xf32>
      %35 = vector.broadcast %34 : vector<32x1xf32> to vector<32x256xf32>
      %36 = arith.mulf %31, %35 : vector<32x256xf32>
      %c0_21 = arith.constant 0 : index
      %c0_22 = arith.constant 0 : index
      %37 = vector.load %arg6[%c0_21, %c0_22] : memref<1x256xf32, #tpu.memory_space<vmem>>, vector<1x256xf32>
      %38 = vector.broadcast %37 : vector<1x256xf32> to vector<32x256xf32>
      %39 = arith.mulf %36, %38 : vector<32x256xf32>
      %c0_23 = arith.constant 0 : index
      %c0_24 = arith.constant 0 : index
      %40 = vector.load %arg7[%c0_23, %c0_24] : memref<1x256xf32, #tpu.memory_space<vmem>>, vector<1x256xf32>
      %41 = vector.broadcast %40 : vector<1x256xf32> to vector<32x256xf32>
      %42 = arith.addf %39, %41 : vector<32x256xf32>
      %43 = arith.truncf %42 : vector<32x256xf32> to vector<32x256xbf16>
      %c0_25 = arith.constant 0 : index
      %c0_26 = arith.constant 0 : index
      %44 = vector.load %arg8[%c0_25, %c0_26] : memref<32x256xbf16, #tpu.memory_space<vmem>>, vector<32x256xbf16>
      tpu.vector_store %arg8[%c0_25, %c0_26], %43 {strides = array<i32>} : memref<32x256xbf16, #tpu.memory_space<vmem>>, vector<32x256xbf16>,
    } else {
    }
    return
  }
  func.func @transform_0(%arg0: i32, %arg1: i32) -> (i32, i32) {
    %c0_i32 = arith.constant 0 : i32
    return %arg0, %arg1 : i32, i32
  }
  func.func @transform_1(%arg0: i32, %arg1: i32) -> (i32, i32) {
    %c0_i32 = arith.constant 0 : i32
    %c0_i32_0 = arith.constant 0 : i32
    return %arg1, %c0_i32 : i32, i32
  }
  func.func @transform_2(%arg0: i32, %arg1: i32) -> (i32, i32) {
    %c0_i32 = arith.constant 0 : i32
    %c0_i32_0 = arith.constant 0 : i32
    %c0_i32_1 = arith.constant 0 : i32
    return %c0_i32, %c0_i32_0 : i32, i32
  }
  func.func @transform_3(%arg0: i32, %arg1: i32) -> (i32, i32) {
    %c0_i32 = arith.constant 0 : i32
    %c0_i32_0 = arith.constant 0 : i32
    return %arg0, %c0_i32 : i32, i32
  }
  func.func @transform_4(%arg0: i32, %arg1: i32) -> (i32, i32) {
    %c0_i32 = arith.constant 0 : i32
    %c0_i32_0 = arith.constant 0 : i32
    %c0_i32_1 = arith.constant 0 : i32
    return %c0_i32, %c0_i32_0 : i32, i32
  }
  func.func @transform_5(%arg0: i32, %arg1: i32) -> (i32, i32) {
    %c0_i32 = arith.constant 0 : i32
    %c0_i32_0 = arith.constant 0 : i32
    %c0_i32_1 = arith.constant 0 : i32
    return %c0_i32, %c0_i32_0 : i32, i32
  }
  func.func @transform_6(%arg0: i32, %arg1: i32) -> (i32, i32) {
    %c0_i32 = arith.constant 0 : i32
    %c0_i32_0 = arith.constant 0 : i32
    return %arg0, %c0_i32 : i32, i32
  }
}

module attributes {stable_mosaic.version = 11 : i64} {
  func.func @_matmul_kernel(%arg0: i32, %arg1: i32, %arg2: i32, %arg3: memref<32x256xbf16, #tpu.memory_space<vmem>>, %arg4: memref<256x512xbf16, #tpu.memory_space<vmem>>, %arg5: memref<1x512xf32, #tpu.memory_space<vmem>>, %arg6: memref<32x512xbf16, #tpu.memory_space<vmem>>, %arg7: memref<32x512xf32, #tpu.memory_space<vmem>>) attributes {dimension_semantics = [#tpu.dimension_semantics<parallel>, #tpu.dimension_semantics<parallel>, #tpu.dimension_semantics<arbitrary>], iteration_bounds = array<i64: 1, 1, 1>, scalar_prefetch = 0 : i64, scratch_operands = 1 : i64, tpu.core_type = #tpu.core_type<tc>, window_params = [{transform_indices = @transform_0, window_bounds = array<i64: 32, 256>}, {transform_indices = @transform_1, window_bounds = array<i64: 256, 512>}, {transform_indices = @transform_2, window_bounds = array<i64: 1, 512>}, {transform_indices = @transform_3, window_bounds = array<i64: 32, 512>}]} {
    %c0_i32 = arith.constant 0 : i32
    %0 = arith.cmpi eq, %arg2, %c0_i32 : i32
    %1 = arith.extui %0 : i1 to i32
    %c0_i32_0 = arith.constant 0 : i32
    %2 = arith.cmpi ne, %1, %c0_i32_0 : i32
    scf.if %2 {
      %cst_10 = arith.constant 0.000000e+00 : f32
      %12 = vector.broadcast %cst_10 : f32 to vector<32x512xf32>
      %c0_11 = arith.constant 0 : index
      %c0_12 = arith.constant 0 : index
      %13 = vector.load %arg7[%c0_11, %c0_12] : memref<32x512xf32, #tpu.memory_space<vmem>>, vector<32x512xf32>
      tpu.vector_store %arg7[%c0_11, %c0_12], %12 {strides = array<i32>} : memref<32x512xf32, #tpu.memory_space<vmem>>, vector<32x512xf32>,
    } else {
    }
    %c0 = arith.constant 0 : index
    %c0_1 = arith.constant 0 : index
    %3 = vector.load %arg7[%c0, %c0_1] : memref<32x512xf32, #tpu.memory_space<vmem>>, vector<32x512xf32>
    %c0_2 = arith.constant 0 : index
    %c0_3 = arith.constant 0 : index
    %4 = vector.load %arg3[%c0_2, %c0_3] : memref<32x256xbf16, #tpu.memory_space<vmem>>, vector<32x256xbf16>
    %c0_4 = arith.constant 0 : index
    %c0_5 = arith.constant 0 : index
    %5 = vector.load %arg4[%c0_4, %c0_5] : memref<256x512xbf16, #tpu.memory_space<vmem>>, vector<256x512xbf16>
    %cst = arith.constant dense<0.000000e+00> : vector<32x512xf32>
    %6 = tpu.matmul %4, %5, %cst {dimension_numbers = #tpu.dot_dimension_numbers<[1], [0], [0], [1], [0, 0, 1, 1], [], []>} : vector<32x256xbf16>, vector<256x512xbf16>, vector<32x512xf32> -> vector<32x512xf32>
    %7 = arith.addf %3, %6 : vector<32x512xf32>
    %c0_6 = arith.constant 0 : index
    %c0_7 = arith.constant 0 : index
    %8 = vector.load %arg7[%c0_6, %c0_7] : memref<32x512xf32, #tpu.memory_space<vmem>>, vector<32x512xf32>
    tpu.vector_store %arg7[%c0_6, %c0_7], %7 {strides = array<i32>} : memref<32x512xf32, #tpu.memory_space<vmem>>, vector<32x512xf32>,
    %c0_i32_8 = arith.constant 0 : i32
    %9 = arith.cmpi eq, %arg2, %c0_i32_8 : i32
    %10 = arith.extui %9 : i1 to i32
    %c0_i32_9 = arith.constant 0 : i32
    %11 = arith.cmpi ne, %10, %c0_i32_9 : i32
    scf.if %11 {
      %c0_10 = arith.constant 0 : index
      %c0_11 = arith.constant 0 : index
      %12 = vector.load %arg7[%c0_10, %c0_11] : memref<32x512xf32, #tpu.memory_space<vmem>>, vector<32x512xf32>
      %c0_12 = arith.constant 0 : index
      %c0_13 = arith.constant 0 : index
      %13 = vector.load %arg5[%c0_12, %c0_13] : memref<1x512xf32, #tpu.memory_space<vmem>>, vector<1x512xf32>
      %14 = vector.broadcast %13 : vector<1x512xf32> to vector<32x512xf32>
      %15 = arith.addf %12, %14 : vector<32x512xf32>
      %cst_14 = arith.constant 0.000000e+00 : f32
      %16 = vector.broadcast %cst_14 : f32 to vector<32x512xf32>
      %17 = arith.maximumf %15, %16 : vector<32x512xf32>
      %18 = arith.truncf %17 : vector<32x512xf32> to vector<32x512xbf16>
      %c0_15 = arith.constant 0 : index
      %c0_16 = arith.constant 0 : index
      %19 = vector.load %arg6[%c0_15, %c0_16] : memref<32x512xbf16, #tpu.memory_space<vmem>>, vector<32x512xbf16>
      tpu.vector_store %arg6[%c0_15, %c0_16], %18 {strides = array<i32>} : memref<32x512xbf16, #tpu.memory_space<vmem>>, vector<32x512xbf16>,
    } else {
    }
    return
  }
  func.func @transform_0(%arg0: i32, %arg1: i32, %arg2: i32) -> (i32, i32) {
    %c0_i32 = arith.constant 0 : i32
    return %arg0, %arg2 : i32, i32
  }
  func.func @transform_1(%arg0: i32, %arg1: i32, %arg2: i32) -> (i32, i32) {
    %c0_i32 = arith.constant 0 : i32
    return %arg2, %arg1 : i32, i32
  }
  func.func @transform_2(%arg0: i32, %arg1: i32, %arg2: i32) -> (i32, i32) {
    %c0_i32 = arith.constant 0 : i32
    %c0_i32_0 = arith.constant 0 : i32
    return %c0_i32, %arg1 : i32, i32
  }
  func.func @transform_3(%arg0: i32, %arg1: i32, %arg2: i32) -> (i32, i32) {
    %c0_i32 = arith.constant 0 : i32
    return %arg0, %arg1 : i32, i32
  }
}

module attributes {stable_mosaic.version = 11 : i64} {
  func.func @_matmul_add_ln_kernel(%arg0: i32, %arg1: i32, %arg2: memref<32x512xbf16, #tpu.memory_space<vmem>>, %arg3: memref<512x256xbf16, #tpu.memory_space<vmem>>, %arg4: memref<1x256xf32, #tpu.memory_space<vmem>>, %arg5: memref<32x256xbf16, #tpu.memory_space<vmem>>, %arg6: memref<1x256xf32, #tpu.memory_space<vmem>>, %arg7: memref<1x256xf32, #tpu.memory_space<vmem>>, %arg8: memref<32x256xbf16, #tpu.memory_space<vmem>>, %arg9: memref<32x256xf32, #tpu.memory_space<vmem>>) attributes {dimension_semantics = [#tpu.dimension_semantics<parallel>, #tpu.dimension_semantics<arbitrary>], iteration_bounds = array<i64: 1, 1>, scalar_prefetch = 0 : i64, scratch_operands = 1 : i64, tpu.core_type = #tpu.core_type<tc>, window_params = [{transform_indices = @transform_0, window_bounds = array<i64: 32, 512>}, {transform_indices = @transform_1, window_bounds = array<i64: 512, 256>}, {pipeline_mode = #tpu.pipeline_mode<synchronous>, transform_indices = @transform_2, window_bounds = array<i64: 1, 256>}, {transform_indices = @transform_3, window_bounds = array<i64: 32, 256>}, {pipeline_mode = #tpu.pipeline_mode<synchronous>, transform_indices = @transform_4, window_bounds = array<i64: 1, 256>}, {pipeline_mode = #tpu.pipeline_mode<synchronous>, transform_indices = @transform_5, window_bounds = array<i64: 1, 256>}, {transform_indices = @transform_6, window_bounds = array<i64: 32, 256>}]} {
    %c0_i32 = arith.constant 0 : i32
    %0 = arith.cmpi eq, %arg1, %c0_i32 : i32
    %1 = arith.extui %0 : i1 to i32
    %c0_i32_0 = arith.constant 0 : i32
    %2 = arith.cmpi ne, %1, %c0_i32_0 : i32
    scf.if %2 {
      %cst_10 = arith.constant 0.000000e+00 : f32
      %12 = vector.broadcast %cst_10 : f32 to vector<32x256xf32>
      %c0_11 = arith.constant 0 : index
      %c0_12 = arith.constant 0 : index
      %13 = vector.load %arg9[%c0_11, %c0_12] : memref<32x256xf32, #tpu.memory_space<vmem>>, vector<32x256xf32>
      tpu.vector_store %arg9[%c0_11, %c0_12], %12 {strides = array<i32>} : memref<32x256xf32, #tpu.memory_space<vmem>>, vector<32x256xf32>,
    } else {
    }
    %c0 = arith.constant 0 : index
    %c0_1 = arith.constant 0 : index
    %3 = vector.load %arg9[%c0, %c0_1] : memref<32x256xf32, #tpu.memory_space<vmem>>, vector<32x256xf32>
    %c0_2 = arith.constant 0 : index
    %c0_3 = arith.constant 0 : index
    %4 = vector.load %arg2[%c0_2, %c0_3] : memref<32x512xbf16, #tpu.memory_space<vmem>>, vector<32x512xbf16>
    %c0_4 = arith.constant 0 : index
    %c0_5 = arith.constant 0 : index
    %5 = vector.load %arg3[%c0_4, %c0_5] : memref<512x256xbf16, #tpu.memory_space<vmem>>, vector<512x256xbf16>
    %cst = arith.constant dense<0.000000e+00> : vector<32x256xf32>
    %6 = tpu.matmul %4, %5, %cst {dimension_numbers = #tpu.dot_dimension_numbers<[1], [0], [0], [1], [0, 0, 1, 1], [], []>} : vector<32x512xbf16>, vector<512x256xbf16>, vector<32x256xf32> -> vector<32x256xf32>
    %7 = arith.addf %3, %6 : vector<32x256xf32>
    %c0_6 = arith.constant 0 : index
    %c0_7 = arith.constant 0 : index
    %8 = vector.load %arg9[%c0_6, %c0_7] : memref<32x256xf32, #tpu.memory_space<vmem>>, vector<32x256xf32>
    tpu.vector_store %arg9[%c0_6, %c0_7], %7 {strides = array<i32>} : memref<32x256xf32, #tpu.memory_space<vmem>>, vector<32x256xf32>,
    %c0_i32_8 = arith.constant 0 : i32
    %9 = arith.cmpi eq, %arg1, %c0_i32_8 : i32
    %10 = arith.extui %9 : i1 to i32
    %c0_i32_9 = arith.constant 0 : i32
    %11 = arith.cmpi ne, %10, %c0_i32_9 : i32
    scf.if %11 {
      %c0_10 = arith.constant 0 : index
      %c0_11 = arith.constant 0 : index
      %12 = vector.load %arg9[%c0_10, %c0_11] : memref<32x256xf32, #tpu.memory_space<vmem>>, vector<32x256xf32>
      %c0_12 = arith.constant 0 : index
      %c0_13 = arith.constant 0 : index
      %13 = vector.load %arg4[%c0_12, %c0_13] : memref<1x256xf32, #tpu.memory_space<vmem>>, vector<1x256xf32>
      %14 = vector.broadcast %13 : vector<1x256xf32> to vector<32x256xf32>
      %15 = arith.addf %12, %14 : vector<32x256xf32>
      %c0_14 = arith.constant 0 : index
      %c0_15 = arith.constant 0 : index
      %16 = vector.load %arg5[%c0_14, %c0_15] : memref<32x256xbf16, #tpu.memory_space<vmem>>, vector<32x256xbf16>
      %17 = arith.extf %16 : vector<32x256xbf16> to vector<32x256xf32>
      %18 = arith.addf %15, %17 : vector<32x256xf32>
      %cst_16 = arith.constant dense<0.000000e+00> : vector<32xf32>
      %19 = vector.multi_reduction <add>, %18, %cst_16 [1] : vector<32x256xf32> to vector<32xf32>
      %20 = vector.shape_cast %19 : vector<32xf32> to vector<32x1xf32>
      %cst_17 = arith.constant 2.560000e+02 : f32
      %21 = vector.broadcast %cst_17 : f32 to vector<32x1xf32>
      %22 = arith.divf %20, %21 : vector<32x1xf32>
      %23 = vector.broadcast %22 : vector<32x1xf32> to vector<32x256xf32>
      %24 = arith.subf %18, %23 : vector<32x256xf32>
      %25 = arith.mulf %24, %24 : vector<32x256xf32>
      %cst_18 = arith.constant dense<0.000000e+00> : vector<32xf32>
      %26 = vector.multi_reduction <add>, %25, %cst_18 [1] : vector<32x256xf32> to vector<32xf32>
      %27 = vector.shape_cast %26 : vector<32xf32> to vector<32x1xf32>
      %cst_19 = arith.constant 2.560000e+02 : f32
      %28 = vector.broadcast %cst_19 : f32 to vector<32x1xf32>
      %29 = arith.divf %27, %28 : vector<32x1xf32>
      %30 = vector.broadcast %22 : vector<32x1xf32> to vector<32x256xf32>
      %31 = arith.subf %18, %30 : vector<32x256xf32>
      %cst_20 = arith.constant 9.99999974E-6 : f32
      %32 = vector.broadcast %cst_20 : f32 to vector<32x1xf32>
      %33 = arith.addf %29, %32 : vector<32x1xf32>
      %34 = math.rsqrt %33 : vector<32x1xf32>
      %35 = vector.broadcast %34 : vector<32x1xf32> to vector<32x256xf32>
      %36 = arith.mulf %31, %35 : vector<32x256xf32>
      %c0_21 = arith.constant 0 : index
      %c0_22 = arith.constant 0 : index
      %37 = vector.load %arg6[%c0_21, %c0_22] : memref<1x256xf32, #tpu.memory_space<vmem>>, vector<1x256xf32>
      %38 = vector.broadcast %37 : vector<1x256xf32> to vector<32x256xf32>
      %39 = arith.mulf %36, %38 : vector<32x256xf32>
      %c0_23 = arith.constant 0 : index
      %c0_24 = arith.constant 0 : index
      %40 = vector.load %arg7[%c0_23, %c0_24] : memref<1x256xf32, #tpu.memory_space<vmem>>, vector<1x256xf32>
      %41 = vector.broadcast %40 : vector<1x256xf32> to vector<32x256xf32>
      %42 = arith.addf %39, %41 : vector<32x256xf32>
      %43 = arith.truncf %42 : vector<32x256xf32> to vector<32x256xbf16>
      %c0_25 = arith.constant 0 : index
      %c0_26 = arith.constant 0 : index
      %44 = vector.load %arg8[%c0_25, %c0_26] : memref<32x256xbf16, #tpu.memory_space<vmem>>, vector<32x256xbf16>
      tpu.vector_store %arg8[%c0_25, %c0_26], %43 {strides = array<i32>} : memref<32x256xbf16, #tpu.memory_space<vmem>>, vector<32x256xbf16>,
    } else {
    }
    return
  }
  func.func @transform_0(%arg0: i32, %arg1: i32) -> (i32, i32) {
    %c0_i32 = arith.constant 0 : i32
    return %arg0, %arg1 : i32, i32
  }
  func.func @transform_1(%arg0: i32, %arg1: i32) -> (i32, i32) {
    %c0_i32 = arith.constant 0 : i32
    %c0_i32_0 = arith.constant 0 : i32
    return %arg1, %c0_i32 : i32, i32
  }
  func.func @transform_2(%arg0: i32, %arg1: i32) -> (i32, i32) {
    %c0_i32 = arith.constant 0 : i32
    %c0_i32_0 = arith.constant 0 : i32
    %c0_i32_1 = arith.constant 0 : i32
    return %c0_i32, %c0_i32_0 : i32, i32
  }
  func.func @transform_3(%arg0: i32, %arg1: i32) -> (i32, i32) {
    %c0_i32 = arith.constant 0 : i32
    %c0_i32_0 = arith.constant 0 : i32
    return %arg0, %c0_i32 : i32, i32
  }
  func.func @transform_4(%arg0: i32, %arg1: i32) -> (i32, i32) {
    %c0_i32 = arith.constant 0 : i32
    %c0_i32_0 = arith.constant 0 : i32
    %c0_i32_1 = arith.constant 0 : i32
    return %c0_i32, %c0_i32_0 : i32, i32
  }
  func.func @transform_5(%arg0: i32, %arg1: i32) -> (i32, i32) {
    %c0_i32 = arith.constant 0 : i32
    %c0_i32_0 = arith.constant 0 : i32
    %c0_i32_1 = arith.constant 0 : i32
    return %c0_i32, %c0_i32_0 : i32, i32
  }
  func.func @transform_6(%arg0: i32, %arg1: i32) -> (i32, i32) {
    %c0_i32 = arith.constant 0 : i32
    %c0_i32_0 = arith.constant 0 : i32
    return %arg0, %c0_i32 : i32, i32
  }
}

module attributes {stable_mosaic.version = 11 : i64} {
  func.func @_seq_mean_kernel(%arg0: i32, %arg1: memref<2x16x256xbf16, #tpu.memory_space<vmem>>, %arg2: memref<2x256xf32, #tpu.memory_space<vmem>>, %arg3: memref<2x256xf32, #tpu.memory_space<vmem>>) attributes {dimension_semantics = [#tpu.dimension_semantics<arbitrary>], iteration_bounds = array<i64: 1>, scalar_prefetch = 0 : i64, scratch_operands = 1 : i64, tpu.core_type = #tpu.core_type<tc>, window_params = [{transform_indices = @transform_0, window_bounds = array<i64: 2, 16, 256>}, {pipeline_mode = #tpu.pipeline_mode<synchronous>, transform_indices = @transform_1, window_bounds = array<i64: 2, 256>}]} {
    %c0_i32 = arith.constant 0 : i32
    %0 = arith.cmpi eq, %arg0, %c0_i32 : i32
    %1 = arith.extui %0 : i1 to i32
    %c0_i32_0 = arith.constant 0 : i32
    %2 = arith.cmpi ne, %1, %c0_i32_0 : i32
    scf.if %2 {
      %cst_9 = arith.constant 0.000000e+00 : f32
      %12 = vector.broadcast %cst_9 : f32 to vector<2x256xf32>
      %c0_10 = arith.constant 0 : index
      %c0_11 = arith.constant 0 : index
      %13 = vector.load %arg3[%c0_10, %c0_11] : memref<2x256xf32, #tpu.memory_space<vmem>>, vector<2x256xf32>
      tpu.vector_store %arg3[%c0_10, %c0_11], %12 {strides = array<i32>} : memref<2x256xf32, #tpu.memory_space<vmem>>, vector<2x256xf32>,
    } else {
    }
    %c0 = arith.constant 0 : index
    %c0_1 = arith.constant 0 : index
    %3 = vector.load %arg3[%c0, %c0_1] : memref<2x256xf32, #tpu.memory_space<vmem>>, vector<2x256xf32>
    %c0_2 = arith.constant 0 : index
    %c0_3 = arith.constant 0 : index
    %c0_4 = arith.constant 0 : index
    %4 = vector.load %arg1[%c0_2, %c0_3, %c0_4] : memref<2x16x256xbf16, #tpu.memory_space<vmem>>, vector<2x16x256xbf16>
    %5 = arith.extf %4 : vector<2x16x256xbf16> to vector<2x16x256xf32>
    %cst = arith.constant dense<0.000000e+00> : vector<2x256xf32>
    %6 = vector.multi_reduction <add>, %5, %cst [1] : vector<2x16x256xf32> to vector<2x256xf32>
    %7 = arith.addf %3, %6 : vector<2x256xf32>
    %c0_5 = arith.constant 0 : index
    %c0_6 = arith.constant 0 : index
    %8 = vector.load %arg3[%c0_5, %c0_6] : memref<2x256xf32, #tpu.memory_space<vmem>>, vector<2x256xf32>
    tpu.vector_store %arg3[%c0_5, %c0_6], %7 {strides = array<i32>} : memref<2x256xf32, #tpu.memory_space<vmem>>, vector<2x256xf32>,
    %c0_i32_7 = arith.constant 0 : i32
    %9 = arith.cmpi eq, %arg0, %c0_i32_7 : i32
    %10 = arith.extui %9 : i1 to i32
    %c0_i32_8 = arith.constant 0 : i32
    %11 = arith.cmpi ne, %10, %c0_i32_8 : i32
    scf.if %11 {
      %c0_9 = arith.constant 0 : index
      %c0_10 = arith.constant 0 : index
      %12 = vector.load %arg3[%c0_9, %c0_10] : memref<2x256xf32, #tpu.memory_space<vmem>>, vector<2x256xf32>
      %cst_11 = arith.constant 6.250000e-02 : f32
      %13 = vector.broadcast %cst_11 : f32 to vector<2x256xf32>
      %14 = arith.mulf %12, %13 : vector<2x256xf32>
      %c0_12 = arith.constant 0 : index
      %c0_13 = arith.constant 0 : index
      %15 = vector.load %arg2[%c0_12, %c0_13] : memref<2x256xf32, #tpu.memory_space<vmem>>, vector<2x256xf32>
      tpu.vector_store %arg2[%c0_12, %c0_13], %14 {strides = array<i32>} : memref<2x256xf32, #tpu.memory_space<vmem>>, vector<2x256xf32>,
    } else {
    }
    return
  }
  func.func @transform_0(%arg0: i32) -> (i32, i32, i32) {
    %c0_i32 = arith.constant 0 : i32
    %c0_i32_0 = arith.constant 0 : i32
    %c0_i32_1 = arith.constant 0 : i32
    return %c0_i32, %arg0, %c0_i32_0 : i32, i32, i32
  }
  func.func @transform_1(%arg0: i32) -> (i32, i32) {
    %c0_i32 = arith.constant 0 : i32
    %c0_i32_0 = arith.constant 0 : i32
    %c0_i32_1 = arith.constant 0 : i32
    return %c0_i32, %c0_i32_0 : i32, i32
  }
}

</mosaic_0001>

<llo_original>
// kernel: transformer_forward.16
$region0: #{transformer_forward.16}
  #allocation0 [shape = 'u32[]', space=smem, size = 0x4, offset = 0x4, fixed_abs, tag = 'smem constant byte address 0x4 - core index']
  #allocation1 [shape = 'u32[144,128]{1,0:T(1,128)}', space=vmem, size = 0x12000, scoped, tag = 'internal scratch']
  #allocation2 [shape = 'f32[32,256]{1,0:T(8,128)}', space=vmem, size = 0x8000, scoped, tag = 'scratch operand']
  %s0 = inlined_call_operand.vmem [shape: bf16[32,64], index: 0, kind: input, shape index: {}]
  %s1 = inlined_call_operand.vmem [shape: bf16[64,256], index: 1, kind: input, shape index: {}]
  %s2 = inlined_call_operand.vmem [shape: f32[1,256], index: 2, kind: input, shape index: {}]
  %s3 = inlined_call_operand.vmem [shape: bf16[32,256], index: 3, kind: output, shape index: {}]
  %s4 = sld [smem:[#allocation0]]
  $region30: #{transformer_forward.16} parent=0
    _
  %s6 = ssub.s32 1, %s4
  %s7 = scalar_select 0, %s6, %s4
  // Predicated region
  $region2: #{transformer_forward.16} parent=0 // pred_check
    _
  $region3: #{transformer_forward.16} parent=0 // pred_check_branch
    %9 = sbr.rel (0) target = $region5
  $region4: #{transformer_forward.16} parent=0 // pred_region
    _
  $region5: #{transformer_forward.16} parent=0 // pred_fallthru
    _
  // Predicated region
  $region6: #{transformer_forward.16} parent=0 // pred_check
    _
  $region7: #{transformer_forward.16} parent=0 // pred_check_branch
    %11 = sbr.rel (0) target = $region9
  $region8: #{transformer_forward.16} parent=0 // pred_region
    _
  $region9: #{transformer_forward.16} parent=0 // pred_fallthru
    _
  // Predicated region
  $region10: #{transformer_forward.16} parent=0 // pred_check
    _
  $region11: #{transformer_forward.16} parent=0 // pred_check_branch
    %13 = sbr.rel (0) target = $region13
  $region12: #{transformer_forward.16} parent=0 // pred_region
    _
  $region13: #{transformer_forward.16} parent=0 // pred_fallthru
    _
  %p15 = scmp.eq.s32.totalorder 0, 0
  // Predicated region
  $region14: #{transformer_forward.16} parent=0 // pred_check
    %p16 = pneg %p15
  $region15: #{transformer_forward.16} parent=0 // pred_check_branch
    %18 = sbr.rel (%p16) target = $region17
  $region16: #{transformer_forward.16} parent=0 // pred_region
    %19 = vst [vmem:[#allocation2] sm:$0xff] 0.0
    %20 = vst [vmem:[#allocation2 + $0x8] sm:$0xff] 0.0
    %21 = vst [vmem:[#allocation2 + $0x10] sm:$0xff] 0.0
    %22 = vst [vmem:[#allocation2 + $0x18] sm:$0xff] 0.0
    %23 = vst [vmem:[#allocation2 + $0x20] sm:$0xff] 0.0
    %24 = vst [vmem:[#allocation2 + $0x28] sm:$0xff] 0.0
    %25 = vst [vmem:[#allocation2 + $0x30] sm:$0xff] 0.0
    %26 = vst [vmem:[#allocation2 + $0x38] sm:$0xff] 0.0
  $region17: #{transformer_forward.16} parent=0 // pred_fallthru
    _
  %v27 = vld [vmem:[#allocation2] sm:$0xff]
  %v28 = vld [vmem:[#allocation2 + $0x8] sm:$0xff]
  %v29 = vld [vmem:[#allocation2 + $0x10] sm:$0xff]
  %v30 = vld [vmem:[#allocation2 + $0x18] sm:$0xff]
  %v31 = vld [vmem:[#allocation2 + $0x20] sm:$0xff]
  %v32 = vld [vmem:[#allocation2 + $0x28] sm:$0xff]
  %v33 = vld [vmem:[#allocation2 + $0x30] sm:$0xff]
  %v34 = vld [vmem:[#allocation2 + $0x38] sm:$0xff]
  %v35 = vld [vmem:[%s0] sm:$0xf]
  %v36 = vld [vmem:[%s0 + $0x4] sm:$0xf]
  %v37 = vld [vmem:[%s0 + $0x8] sm:$0xf]
  %v38 = vld [vmem:[%s0 + $0xc] sm:$0xf]
  %v39 = vld [vmem:[%s1] sm:$0xff]
  %v40 = vld [vmem:[%s1 + $0x8] sm:$0xff]
  %v41 = vld [vmem:[%s1 + $0x10] sm:$0xff]
  %v42 = vld [vmem:[%s1 + $0x18] sm:$0xff]
  %v43 = vld [vmem:[%s1 + $0x20] sm:$0xff]
  %v44 = vld [vmem:[%s1 + $0x28] sm:$0xff]
  %v45 = vld [vmem:[%s1 + $0x30] sm:$0xff]
  %v46 = vld [vmem:[%s1 + $0x38] sm:$0xff]
  %v51 = vunpack.c.l.b16 %v35
  %v52 = vunpack.c.l.b16 %v36
  %v53 = vunpack.c.l.b16 %v37
  %v54 = vunpack.c.l.b16 %v38
  %v55 = vpack.c.b16 %v52, %v51
  %v56 = vpack.c.b16 %v54, %v53
  %v65 = vunpack.c.l.b16 %v39
  %v66 = vunpack.c.h.b16 %v39
  %v67 = vunpack.c.l.b16 %v40
  %v68 = vunpack.c.h.b16 %v40
  %v69 = vunpack.c.l.b16 %v41
  %v70 = vunpack.c.h.b16 %v41
  %v71 = vunpack.c.l.b16 %v42
  %v72 = vunpack.c.h.b16 %v42
  %v73 = vunpack.c.l.b16 %v43
  %v74 = vunpack.c.h.b16 %v43
  %v75 = vunpack.c.l.b16 %v44
  %v76 = vunpack.c.h.b16 %v44
  %v77 = vunpack.c.l.b16 %v45
  %v78 = vunpack.c.h.b16 %v45
  %v79 = vunpack.c.l.b16 %v46
  %v80 = vunpack.c.h.b16 %v46
  %v81 = vpack.c.b16 %v67, %v65
  %v82 = vpack.c.b16 %v68, %v66
  %v83 = vpack.c.b16 %v71, %v69
  %v84 = vpack.c.b16 %v72, %v70
  %v85 = vpack.c.b16 %v75, %v73
  %v86 = vpack.c.b16 %v76, %v74
  %v87 = vpack.c.b16 %v79, %v77
  %v88 = vpack.c.b16 %v80, %v78
  %vm97 = vcmask 523264
  %v99 = vsel %vm97, %v55, 0
  %v102 = vsel %vm97, %v56, 0
  %104 = vmatprep.subr.bf16.mxu0 %v82
  %105 = vmatpush1.bf16.msra.mxu0 %v81
  %106 = vmatprep.subr.bf16.mxu0 %v84
  %107 = vmatpush1.bf16.msra.mxu0 %v83
  %108 = vmatprep.subr.bf16.mxu0 %v86
  %109 = vmatpush1.bf16.msra.mxu0 %v85
  %110 = vmatprep.subr.bf16.mxu0 %v88
  %111 = vmatpush1.bf16.msra.mxu0 %v87
  %112 = vmatprep.subr.bf16.mxu0 0
  %113 = vmatpush1.bf16.msra.mxu0 0
  %114 = vmatprep.subr.bf16.mxu0 0
  %115 = vmatpush1.bf16.msra.mxu0 0
  %116 = vmatprep.subr.bf16.mxu0 0
  %117 = vmatpush1.bf16.msra.mxu0 0
  %118 = vmatprep.subr.bf16.mxu0 0
  %119 = vmatpush1.bf16.msra.mxu0 0
  %120 = vmatprep.subr.bf16.mxu0 0
  %121 = vmatpush1.bf16.msra.mxu0 0
  %122 = vmatprep.subr.bf16.mxu0 0
  %123 = vmatpush1.bf16.msra.mxu0 0
  %124 = vmatprep.subr.bf16.mxu0 0
  %125 = vmatpush1.bf16.msra.mxu0 0
  %126 = vmatprep.subr.bf16.mxu0 0
  %127 = vmatpush1.bf16.msra.mxu0 0
  %128 = vmatprep.subr.bf16.mxu0 0
  %129 = vmatpush1.bf16.msra.mxu0 0
  %130 = vmatprep.subr.bf16.mxu0 0
  %131 = vmatpush1.bf16.msra.mxu0 0
  %132 = vmatprep.subr.bf16.mxu0 0
  %133 = vmatpush1.bf16.msra.mxu0 0
  %134 = vmatprep.subr.bf16.mxu0 0
  %135 = vmatpush1.bf16.msra.mxu0 0
  %136 = vmatprep.mubr.bf16.mxu0 0
  %137 = vmatmul.mubr.bf16.gmra.mrb[0].mxu0 %v99
  %v138 = vpop.f32.mrb[0].mxu0
  %v139 = vadd.f32 0.0, %v138
  %v140 = vpop.f32.mrb[0].mxu0
  %v141 = vadd.f32 0.0, %v140
  %v142 = vpop.f32.mrb[0].mxu0
  %v143 = vadd.f32 0.0, %v142
  %v144 = vpop.f32.mrb[0].mxu0
  %v145 = vadd.f32 0.0, %v144
  %146 = vmatprep.mubr.bf16.mxu0 0
  %147 = vmatmul.mubr.bf16.gmra.mrb[0].mxu0 %v102
  %v148 = vpop.f32.mrb[0].mxu0
  %v149 = vadd.f32 0.0, %v148
  %v150 = vpop.f32.mrb[0].mxu0
  %v151 = vadd.f32 0.0, %v150
  %v152 = vpop.f32.mrb[0].mxu0
  %v153 = vadd.f32 0.0, %v152
  %v154 = vpop.f32.mrb[0].mxu0
  %v155 = vadd.f32 0.0, %v154
  %156 = vdwg.mxu0
  %v157 = vadd.f32 %v27, %v139
  %v158 = vadd.f32 %v28, %v141
  %v159 = vadd.f32 %v29, %v143
  %v160 = vadd.f32 %v30, %v145
  %v161 = vadd.f32 %v31, %v149
  %v162 = vadd.f32 %v32, %v151
  %v163 = vadd.f32 %v33, %v153
  %v164 = vadd.f32 %v34, %v155
  %165 = vst [vmem:[#allocation2] sm:$0xff] %v157
  %166 = vst [vmem:[#allocation2 + $0x8] sm:$0xff] %v158
  %167 = vst [vmem:[#allocation2 + $0x10] sm:$0xff] %v159
  %168 = vst [vmem:[#allocation2 + $0x18] sm:$0xff] %v160
  %169 = vst [vmem:[#allocation2 + $0x20] sm:$0xff] %v161
  %170 = vst [vmem:[#allocation2 + $0x28] sm:$0xff] %v162
  %171 = vst [vmem:[#allocation2 + $0x30] sm:$0xff] %v163
  %172 = vst [vmem:[#allocation2 + $0x38] sm:$0xff] %v164
  // Predicated region
  $region18: #{transformer_forward.16} parent=0 // pred_check
    %p173 = pneg %p15
  $region19: #{transformer_forward.16} parent=0 // pred_check_branch
    %175 = sbr.rel (%p173) target = $region21
  $region20: #{transformer_forward.16} parent=0 // pred_region
    %v176 = vld [vmem:[#allocation2] sm:$0xff]
    %v177 = vld [vmem:[#allocation2 + $0x8] sm:$0xff]
    %v178 = vld [vmem:[#allocation2 + $0x10] sm:$0xff]
    %v179 = vld [vmem:[#allocation2 + $0x18] sm:$0xff]
    %v180 = vld [vmem:[#allocation2 + $0x20] sm:$0xff]
    %v181 = vld [vmem:[#allocation2 + $0x28] sm:$0xff]
    %v182 = vld [vmem:[#allocation2 + $0x30] sm:$0xff]
    %v183 = vld [vmem:[#allocation2 + $0x38] sm:$0xff]
    %v184 = vld [vmem:[%s2] sm:$0x3]
    %v186 = vlaneseq
    %v187 = vshrl.u32 %v186, 7
    %v188 = vsub.s32 0, %v187
    %v189 = vrot.slane %v184, %v188
    %v190 = vlaneseq
    %v191 = vshrl.u32 %v190, 7
    %v192 = vsub.s32 1, %v191
    %v193 = vrot.slane %v184, %v192
    %v196 = vadd.f32 %v176, %v189
    %v197 = vadd.f32 %v177, %v193
    %v198 = vadd.f32 %v178, %v189
    %v199 = vadd.f32 %v179, %v193
    %v200 = vadd.f32 %v180, %v189
    %v201 = vadd.f32 %v181, %v193
    %v202 = vadd.f32 %v182, %v189
    %v203 = vadd.f32 %v183, %v193
    %v204 = vpack.c.bf16 %v198, %v196
    %v205 = vpack.c.bf16 %v199, %v197
    %v206 = vpack.c.bf16 %v202, %v200
    %v207 = vpack.c.bf16 %v203, %v201
    %v212 = vunpack.c.l.b16 %v204
    %v213 = vunpack.c.l.b16 %v205
    %v214 = vunpack.c.h.b16 %v204
    %v215 = vunpack.c.h.b16 %v205
    %v216 = vunpack.c.l.b16 %v206
    %v217 = vunpack.c.l.b16 %v207
    %v218 = vunpack.c.h.b16 %v206
    %v219 = vunpack.c.h.b16 %v207
    %v220 = vpack.c.b16 %v213, %v212
    %v221 = vpack.c.b16 %v215, %v214
    %v222 = vpack.c.b16 %v217, %v216
    %v223 = vpack.c.b16 %v219, %v218
    %228 = vst [vmem:[%s3] sm:$0xff] %v220
    %229 = vst [vmem:[%s3 + $0x8] sm:$0xff] %v221
    %230 = vst [vmem:[%s3 + $0x10] sm:$0xff] %v222
    %231 = vst [vmem:[%s3 + $0x18] sm:$0xff] %v223
  $region21: #{transformer_forward.16} parent=0 // pred_fallthru
    _
  // Predicated region
  $region22: #{transformer_forward.16} parent=0 // pred_check
    _
  $region23: #{transformer_forward.16} parent=0 // pred_check_branch
    %233 = sbr.rel (0) target = $region25
  $region24: #{transformer_forward.16} parent=0 // pred_region
    _
  $region25: #{transformer_forward.16} parent=0 // pred_fallthru
    _
  // Predicated region
  $region26: #{transformer_forward.16} parent=0 // pred_check
    _
  $region27: #{transformer_forward.16} parent=0 // pred_check_branch
    %235 = sbr.rel (0) target = $region29
  $region28: #{transformer_forward.16} parent=0 // pred_region
    _
  $region29: #{transformer_forward.16} parent=0 // pred_fallthru
    _

// kernel: transformer_forward.14
$region0: #{transformer_forward.14}
  #allocation0 [shape = 'u32[]', space=smem, size = 0x4, offset = 0x4, fixed_abs, tag = 'smem constant byte address 0x4 - core index']
  #allocation1 [shape = 'u32[144,128]{1,0:T(1,128)}', space=vmem, size = 0x12000, scoped, tag = 'internal scratch']
  %s0 = inlined_call_operand.vmem [shape: f32[2,33,128], index: 0, kind: input, shape index: {}]
  %s1 = inlined_call_operand.vmem [shape: bf16[128,128], index: 1, kind: input, shape index: {}]
  %s2 = inlined_call_operand.vmem [shape: bf16[128,128], index: 2, kind: input, shape index: {}]
  %s3 = inlined_call_operand.vmem [shape: f32[1,128], index: 3, kind: input, shape index: {}]
  %s4 = inlined_call_operand.vmem [shape: f32[2,32,128], index: 4, kind: output, shape index: {}]
  %s5 = sld [smem:[#allocation0]]
  $region49: #{transformer_forward.14} parent=0
    _
  %s7 = ssub.s32 1, %s5
  %s8 = scalar_select 0, %s7, %s5
  loop: start=0, step=1, limit=4
  $region2: #{transformer_forward.14} parent=0 // loop_pre_header
    _
  $region3: #{transformer_forward.14} parent=0 // loop_header
    %s10 = sphi 0, %s14
    %p11 = scmp.ge.s32.totalorder %s10, 4
    %s20 = sphi 0, %s22
    %s23 = sphi 0, %s20
    %s24 = sphi 0, %s23
    %s40 = sphi 0, %s24
    %s44 = sphi 0, %s44
    %s46 = sphi 0, %s44
    %s47 = sphi 0, %s46
    %s61 = sphi 0, %s47
    %s65 = sphi 0, %s65
    %s67 = sphi 0, %s65
    %s68 = sphi 0, %s67
    %s82 = sphi 0, %s68
    %s86 = sphi 0, %s86
    %s88 = sphi 0, %s86
    %s89 = sphi 0, %s88
    %s103 = sphi 0, %s89
    %s109 = sphi 0, %s111
    %s112 = sphi 0, %s109
    %s113 = sphi 0, %s112
    %s129 = sphi 0, %s113
  $region4: #{transformer_forward.14} parent=0 // loop_header_branch
    %13 = sbr.rel (%p11) target = $region8
  $region5: #{transformer_forward.14} parent=0 // loop_body
    %s15 = ssub.s32 %s10, 1
    %s16 = ssub.s32 %s10, 2
    %s17 = sadd.s32 %s10, 1
    %s18 = ssub.s32 %s10, %s17
    %p19 = scmp.eq.s32.totalorder %s18, 0
    %s21 = sadd.s32 %s20, 1
    %s22 = scalar_select %p19, %s20, %s21
    %p25 = pneg %p19
    %p26 = scmp.eq.s32.totalorder %s10, 1
    %p27 = por %p25, %p26
    %p28 = scmp.ne.s32.totalorder %s20, %s23
    %p29 = scmp.eq.s32.totalorder %s10, 0
    %p30 = por %p28, %p29
    %p31 = scmp.ne.s32.totalorder %s20, %s23
    %p32 = scmp.eq.s32.totalorder %s15, 1
    %p33 = por %p31, %p32
    %p34 = scmp.ne.s32.totalorder %s23, %s24
    %p35 = scmp.eq.s32.totalorder %s15, 0
    %p36 = por %p34, %p35
    %p37 = scmp.ne.s32.totalorder %s23, %s24
    %p38 = scmp.eq.s32.totalorder %s16, 1
    %p39 = por %p37, %p38
    %p41 = scmp.ne.s32.totalorder %s24, %s40
    %p42 = scmp.eq.s32.totalorder %s16, 0
    %p43 = por %p41, %p42
    %s45 = sadd.s32 %s44, 1
    %p48 = scmp.eq.s32.totalorder %s10, 1
    %p49 = scmp.ne.s32.totalorder %s44, %s46
    %p50 = scmp.eq.s32.totalorder %s10, 0
    %p51 = por %p49, %p50
    %p52 = scmp.ne.s32.totalorder %s44, %s46
    %p53 = scmp.eq.s32.totalorder %s15, 1
    %p54 = por %p52, %p53
    %p55 = scmp.ne.s32.totalorder %s46, %s47
    %p56 = scmp.eq.s32.totalorder %s15, 0
    %p57 = por %p55, %p56
    %p58 = scmp.ne.s32.totalorder %s46, %s47
    %p59 = scmp.eq.s32.totalorder %s16, 1
    %p60 = por %p58, %p59
    %p62 = scmp.ne.s32.totalorder %s47, %s61
    %p63 = scmp.eq.s32.totalorder %s16, 0
    %p64 = por %p62, %p63
    %s66 = sadd.s32 %s65, 1
    %p69 = scmp.eq.s32.totalorder %s10, 1
    %p70 = scmp.ne.s32.totalorder %s65, %s67
    %p71 = scmp.eq.s32.totalorder %s10, 0
    %p72 = por %p70, %p71
    %p73 = scmp.ne.s32.totalorder %s65, %s67
    %p74 = scmp.eq.s32.totalorder %s15, 1
    %p75 = por %p73, %p74
    %p76 = scmp.ne.s32.totalorder %s67, %s68
    %p77 = scmp.eq.s32.totalorder %s15, 0
    %p78 = por %p76, %p77
    %p79 = scmp.ne.s32.totalorder %s67, %s68
    %p80 = scmp.eq.s32.totalorder %s16, 1
    %p81 = por %p79, %p80
    %p83 = scmp.ne.s32.totalorder %s68, %s82
    %p84 = scmp.eq.s32.totalorder %s16, 0
    %p85 = por %p83, %p84
    %s87 = sadd.s32 %s86, 1
    %p90 = scmp.eq.s32.totalorder %s10, 1
    %p91 = scmp.ne.s32.totalorder %s86, %s88
    %p92 = scmp.eq.s32.totalorder %s10, 0
    %p93 = por %p91, %p92
    %p94 = scmp.ne.s32.totalorder %s86, %s88
    %p95 = scmp.eq.s32.totalorder %s15, 1
    %p96 = por %p94, %p95
    %p97 = scmp.ne.s32.totalorder %s88, %s89
    %p98 = scmp.eq.s32.totalorder %s15, 0
    %p99 = por %p97, %p98
    %p100 = scmp.ne.s32.totalorder %s88, %s89
    %p101 = scmp.eq.s32.totalorder %s16, 1
    %p102 = por %p100, %p101
    %p104 = scmp.ne.s32.totalorder %s89, %s103
    %p105 = scmp.eq.s32.totalorder %s16, 0
    %p106 = por %p104, %p105
    %s107 = ssub.s32 %s10, %s17
    %p108 = scmp.eq.s32.totalorder %s107, 0
    %s110 = sadd.s32 %s109, 1
    %s111 = scalar_select %p108, %s109, %s110
    %p114 = pneg %p108
    %p115 = scmp.eq.s32.totalorder %s10, 1
    %p116 = por %p114, %p115
    %p117 = scmp.ne.s32.totalorder %s109, %s112
    %p118 = scmp.eq.s32.totalorder %s10, 0
    %p119 = por %p117, %p118
    %p120 = scmp.ne.s32.totalorder %s109, %s112
    %p121 = scmp.eq.s32.totalorder %s15, 1
    %p122 = por %p120, %p121
    %p123 = scmp.ne.s32.totalorder %s112, %s113
    %p124 = scmp.eq.s32.totalorder %s15, 0
    %p125 = por %p123, %p124
    %p126 = scmp.ne.s32.totalorder %s112, %s113
    %p127 = scmp.eq.s32.totalorder %s16, 1
    %p128 = por %p126, %p127
    %p130 = scmp.ne.s32.totalorder %s113, %s129
    %p131 = scmp.eq.s32.totalorder %s16, 0
    %p132 = por %p130, %p131
    %p133 = scmp.le.s32.totalorder 1, %s10
    %p134 = scmp.lt.s32.totalorder %s10, 3
    %p135 = pnand %p133, %p134
    %p136 = pneg %p135
    // Predicated region
    $region9: #{transformer_forward.14} parent=5 // pred_check
      _
    $region10: #{transformer_forward.14} parent=5 // pred_check_branch
      %138 = sbr.rel (%p135) target = $region12
    $region11: #{transformer_forward.14} parent=5 // pred_region
      %s139 = ssub.s32 %s10, 1
      // Predicated region
      $region13: #{transformer_forward.14} parent=11 // pred_check
        %p140 = pneg %p57
      $region14: #{transformer_forward.14} parent=11 // pred_check_branch
        %142 = sbr.rel (%p140) target = $region16
      $region15: #{transformer_forward.14} parent=11 // pred_region
        _
      $region16: #{transformer_forward.14} parent=11 // pred_fallthru
        _
      // Predicated region
      $region17: #{transformer_forward.14} parent=11 // pred_check
        %p143 = pneg %p78
      $region18: #{transformer_forward.14} parent=11 // pred_check_branch
        %145 = sbr.rel (%p143) target = $region20
      $region19: #{transformer_forward.14} parent=11 // pred_region
        _
      $region20: #{transformer_forward.14} parent=11 // pred_fallthru
        _
      // Predicated region
      $region21: #{transformer_forward.14} parent=11 // pred_check
        %p146 = pneg %p99
      $region22: #{transformer_forward.14} parent=11 // pred_check_branch
        %148 = sbr.rel (%p146) target = $region24
      $region23: #{transformer_forward.14} parent=11 // pred_region
        _
      $region24: #{transformer_forward.14} parent=11 // pred_fallthru
        _
    $region12: #{transformer_forward.14} parent=5 // pred_fallthru
      _
    %p149 = scmp.lt.s32.totalorder %s10, 2
    // Predicated region
    $region25: #{transformer_forward.14} parent=5 // pred_check
      %p150 = pneg %p149
    $region26: #{transformer_forward.14} parent=5 // pred_check_branch
      %152 = sbr.rel (%p150) target = $region28
    $region27: #{transformer_forward.14} parent=5 // pred_region
      // Predicated region
      $region29: #{transformer_forward.14} parent=27 // pred_check
        %p153 = pneg %p30
      $region30: #{transformer_forward.14} parent=27 // pred_check_branch
        %155 = sbr.rel (%p153) target = $region32
      $region31: #{transformer_forward.14} parent=27 // pred_region
        %p156 = scmp.lt.s32.totalorder %s10, 1
        %s157 = scalar_select %p156, %s10, 1
        %s158 = smul.addr %s157, 5
        %s159 = smul.addr %s158, 8
        %s160 = scalar_lea.vmem %s0, %s159
      $region32: #{transformer_forward.14} parent=27 // pred_fallthru
        _
    $region28: #{transformer_forward.14} parent=5 // pred_fallthru
      _
    %p161 = scmp.le.s32.totalorder 1, %s10
    %p162 = scmp.lt.s32.totalorder %s10, 3
    %p163 = pnand %p161, %p162
    %p164 = pneg %p163
    // Predicated region
    $region33: #{transformer_forward.14} parent=5 // pred_check
      _
    $region34: #{transformer_forward.14} parent=5 // pred_check_branch
      %166 = sbr.rel (%p163) target = $region36
    $region35: #{transformer_forward.14} parent=5 // pred_region
      %s167 = ssub.s32 %s10, 1
      %p168 = scmp.lt.s32.totalorder %s15, 1
      %s169 = scalar_select %p168, %s15, 1
      %s170 = smul.addr %s169, 5
      %s171 = smul.addr %s170, 8
      %s172 = scalar_lea.vmem %s0, %s171
      %p173 = pneg %p36
      %p174 = pneg %p33
      %p175 = pneg %p57
      %p176 = pneg %p54
      %p177 = pneg %p78
      %p178 = pneg %p75
      %p179 = pneg %p99
      %p180 = pneg %p96
      %p181 = pneg %p125
      %p182 = pneg %p122
      %p183 = scmp.lt.s32.totalorder %s15, 1
      %s184 = scalar_select %p183, %s15, 1
      %s185 = smul.addr %s184, 4
      %s186 = smul.addr %s185, 8
      %s187 = scalar_lea.vmem %s4, %s186
      %p188 = scmp.lt.s32.totalorder %s15, 1
      %s189 = scalar_select %p188, %s15, 1
      %s190 = smul.addr %s189, 5
      %s191 = smul.addr %s190, 8
      %s192 = scalar_lea.vmem %s0, %s191
      %p193 = scmp.lt.s32.totalorder %s15, 1
      %s194 = scalar_select %p193, %s15, 1
      %s195 = smul.addr %s194, 4
      %s196 = smul.addr %s195, 8
      %s197 = scalar_lea.vmem %s4, %s196
      %v199 = vld [vmem:[%s192] sm:$0xff]
      %v200 = vld [vmem:[%s192 + $0x8] sm:$0xff]
      %v201 = vld [vmem:[%s192 + $0x10] sm:$0xff]
      %v202 = vld [vmem:[%s192 + $0x18] sm:$0xff]
      %v203 = vpack.c.bf16 %v200, %v199
      %v204 = vpack.c.bf16 %v202, %v201
      %v205 = vld [vmem:[%s192 + $0x1] sm:$0xff]
      %v206 = vld [vmem:[%s192 + $0x9] sm:$0xff]
      %v207 = vld [vmem:[%s192 + $0x11] sm:$0xff]
      %v208 = vld [vmem:[%s192 + $0x19] sm:$0xff]
      %v209 = vpack.c.bf16 %v206, %v205
      %v210 = vpack.c.bf16 %v208, %v207
      %v211 = vld [vmem:[%s1] sm:$0xf]
      %v212 = vld [vmem:[%s1 + $0x4] sm:$0xf]
      %v213 = vld [vmem:[%s1 + $0x8] sm:$0xf]
      %v214 = vld [vmem:[%s1 + $0xc] sm:$0xf]
      %v215 = vld [vmem:[%s1 + $0x10] sm:$0xf]
      %v216 = vld [vmem:[%s1 + $0x14] sm:$0xf]
      %v217 = vld [vmem:[%s1 + $0x18] sm:$0xf]
      %v218 = vld [vmem:[%s1 + $0x1c] sm:$0xf]
      %v219 = vld [vmem:[%s1 + $0x20] sm:$0xf]
      %v220 = vld [vmem:[%s1 + $0x24] sm:$0xf]
      %v221 = vld [vmem:[%s1 + $0x28] sm:$0xf]
      %v222 = vld [vmem:[%s1 + $0x2c] sm:$0xf]
      %v223 = vld [vmem:[%s1 + $0x30] sm:$0xf]
      %v224 = vld [vmem:[%s1 + $0x34] sm:$0xf]
      %v225 = vld [vmem:[%s1 + $0x38] sm:$0xf]
      %v226 = vld [vmem:[%s1 + $0x3c] sm:$0xf]
      %v227 = vld [vmem:[%s2] sm:$0xf]
      %v228 = vld [vmem:[%s2 + $0x4] sm:$0xf]
      %v229 = vld [vmem:[%s2 + $0x8] sm:$0xf]
      %v230 = vld [vmem:[%s2 + $0xc] sm:$0xf]
      %v231 = vld [vmem:[%s2 + $0x10] sm:$0xf]
      %v232 = vld [vmem:[%s2 + $0x14] sm:$0xf]
      %v233 = vld [vmem:[%s2 + $0x18] sm:$0xf]
      %v234 = vld [vmem:[%s2 + $0x1c] sm:$0xf]
      %v235 = vld [vmem:[%s2 + $0x20] sm:$0xf]
      %v236 = vld [vmem:[%s2 + $0x24] sm:$0xf]
      %v237 = vld [vmem:[%s2 + $0x28] sm:$0xf]
      %v238 = vld [vmem:[%s2 + $0x2c] sm:$0xf]
      %v239 = vld [vmem:[%s2 + $0x30] sm:$0xf]
      %v240 = vld [vmem:[%s2 + $0x34] sm:$0xf]
      %v241 = vld [vmem:[%s2 + $0x38] sm:$0xf]
      %v242 = vld [vmem:[%s2 + $0x3c] sm:$0xf]
      %v259 = vunpack.c.l.b16 %v227
      %v260 = vunpack.c.l.b16 %v228
      %v261 = vunpack.c.l.b16 %v229
      %v262 = vunpack.c.l.b16 %v230
      %v263 = vunpack.c.l.b16 %v231
      %v264 = vunpack.c.l.b16 %v232
      %v265 = vunpack.c.l.b16 %v233
      %v266 = vunpack.c.l.b16 %v234
      %v267 = vunpack.c.l.b16 %v235
      %v268 = vunpack.c.l.b16 %v236
      %v269 = vunpack.c.l.b16 %v237
      %v270 = vunpack.c.l.b16 %v238
      %v271 = vunpack.c.l.b16 %v239
      %v272 = vunpack.c.l.b16 %v240
      %v273 = vunpack.c.l.b16 %v241
      %v274 = vunpack.c.l.b16 %v242
      %v275 = vpack.c.b16 %v260, %v259
      %v276 = vpack.c.b16 %v262, %v261
      %v277 = vpack.c.b16 %v264, %v263
      %v278 = vpack.c.b16 %v266, %v265
      %v279 = vpack.c.b16 %v268, %v267
      %v280 = vpack.c.b16 %v270, %v269
      %v281 = vpack.c.b16 %v272, %v271
      %v282 = vpack.c.b16 %v274, %v273
      %291 = vmatprep.subr.bf16.mxu0 0
      %292 = vmatpush1.bf16.msra.mxu0 %v275
      %293 = vmatprep.subr.bf16.mxu0 0
      %294 = vmatpush1.bf16.msra.mxu0 %v276
      %295 = vmatprep.subr.bf16.mxu0 0
      %296 = vmatpush1.bf16.msra.mxu0 %v277
      %297 = vmatprep.subr.bf16.mxu0 0
      %298 = vmatpush1.bf16.msra.mxu0 %v278
      %299 = vmatprep.subr.bf16.mxu0 0
      %300 = vmatpush1.bf16.msra.mxu0 %v279
      %301 = vmatprep.subr.bf16.mxu0 0
      %302 = vmatpush1.bf16.msra.mxu0 %v280
      %303 = vmatprep.subr.bf16.mxu0 0
      %304 = vmatpush1.bf16.msra.mxu0 %v281
      %305 = vmatprep.subr.bf16.mxu0 0
      %306 = vmatpush1.bf16.msra.mxu0 %v282
      %307 = vmatprep.subr.bf16.mxu0 0
      %308 = vmatpush1.bf16.msra.mxu0 0
      %309 = vmatprep.subr.bf16.mxu0 0
      %310 = vmatpush1.bf16.msra.mxu0 0
      %311 = vmatprep.subr.bf16.mxu0 0
      %312 = vmatpush1.bf16.msra.mxu0 0
      %313 = vmatprep.subr.bf16.mxu0 0
      %314 = vmatpush1.bf16.msra.mxu0 0
      %315 = vmatprep.subr.bf16.mxu0 0
      %316 = vmatpush1.bf16.msra.mxu0 0
      %317 = vmatprep.subr.bf16.mxu0 0
      %318 = vmatpush1.bf16.msra.mxu0 0
      %319 = vmatprep.subr.bf16.mxu0 0
      %320 = vmatpush1.bf16.msra.mxu0 0
      %321 = vmatprep.subr.bf16.mxu0 0
      %322 = vmatpush1.bf16.msra.mxu0 0
      %323 = vmatprep.mubr.bf16.mxu0 0
      %324 = vmatmul.mubr.bf16.gmra.mrb[0].mxu0 %v209
      %v325 = vpop.f32.mrb[0].mxu0
      %v326 = vadd.f32 0.0, %v325
      %v327 = vpop.f32.mrb[0].mxu0
      %v328 = vpop.f32.mrb[0].mxu0
      %v329 = vadd.f32 0.0, %v328
      %v330 = vpop.f32.mrb[0].mxu0
      %331 = vmatprep.mubr.bf16.mxu0 0
      %332 = vmatmul.mubr.bf16.gmra.mrb[0].mxu0 %v210
      %v333 = vpop.f32.mrb[0].mxu0
      %v334 = vadd.f32 0.0, %v333
      %v335 = vpop.f32.mrb[0].mxu0
      %v336 = vpop.f32.mrb[0].mxu0
      %v337 = vadd.f32 0.0, %v336
      %v338 = vpop.f32.mrb[0].mxu0
      %339 = vdwg.mxu0
      %v356 = vunpack.c.l.b16 %v211
      %v357 = vunpack.c.l.b16 %v212
      %v358 = vunpack.c.l.b16 %v213
      %v359 = vunpack.c.l.b16 %v214
      %v360 = vunpack.c.l.b16 %v215
      %v361 = vunpack.c.l.b16 %v216
      %v362 = vunpack.c.l.b16 %v217
      %v363 = vunpack.c.l.b16 %v218
      %v364 = vunpack.c.l.b16 %v219
      %v365 = vunpack.c.l.b16 %v220
      %v366 = vunpack.c.l.b16 %v221
      %v367 = vunpack.c.l.b16 %v222
      %v368 = vunpack.c.l.b16 %v223
      %v369 = vunpack.c.l.b16 %v224
      %v370 = vunpack.c.l.b16 %v225
      %v371 = vunpack.c.l.b16 %v226
      %v372 = vpack.c.b16 %v357, %v356
      %v373 = vpack.c.b16 %v359, %v358
      %v374 = vpack.c.b16 %v361, %v360
      %v375 = vpack.c.b16 %v363, %v362
      %v376 = vpack.c.b16 %v365, %v364
      %v377 = vpack.c.b16 %v367, %v366
      %v378 = vpack.c.b16 %v369, %v368
      %v379 = vpack.c.b16 %v371, %v370
      %388 = vmatprep.subr.bf16.mxu0 0
      %389 = vmatpush1.bf16.msra.mxu0 %v372
      %390 = vmatprep.subr.bf16.mxu0 0
      %391 = vmatpush1.bf16.msra.mxu0 %v373
      %392 = vmatprep.subr.bf16.mxu0 0
      %393 = vmatpush1.bf16.msra.mxu0 %v374
      %394 = vmatprep.subr.bf16.mxu0 0
      %395 = vmatpush1.bf16.msra.mxu0 %v375
      %396 = vmatprep.subr.bf16.mxu0 0
      %397 = vmatpush1.bf16.msra.mxu0 %v376
      %398 = vmatprep.subr.bf16.mxu0 0
      %399 = vmatpush1.bf16.msra.mxu0 %v377
      %400 = vmatprep.subr.bf16.mxu0 0
      %401 = vmatpush1.bf16.msra.mxu0 %v378
      %402 = vmatprep.subr.bf16.mxu0 0
      %403 = vmatpush1.bf16.msra.mxu0 %v379
      %404 = vmatprep.subr.bf16.mxu0 0
      %405 = vmatpush1.bf16.msra.mxu0 0
      %406 = vmatprep.subr.bf16.mxu0 0
      %407 = vmatpush1.bf16.msra.mxu0 0
      %408 = vmatprep.subr.bf16.mxu0 0
      %409 = vmatpush1.bf16.msra.mxu0 0
      %410 = vmatprep.subr.bf16.mxu0 0
      %411 = vmatpush1.bf16.msra.mxu0 0
      %412 = vmatprep.subr.bf16.mxu0 0
      %413 = vmatpush1.bf16.msra.mxu0 0
      %414 = vmatprep.subr.bf16.mxu0 0
      %415 = vmatpush1.bf16.msra.mxu0 0
      %416 = vmatprep.subr.bf16.mxu0 0
      %417 = vmatpush1.bf16.msra.mxu0 0
      %418 = vmatprep.subr.bf16.mxu0 0
      %419 = vmatpush1.bf16.msra.mxu0 0
      %420 = vmatprep.mubr.bf16.mxu0 0
      %421 = vmatmul.mubr.bf16.gmra.mrb[0].mxu0 %v203
      %v422 = vpop.f32.mrb[0].mxu0
      %v423 = vadd.f32 %v326, %v422
      %v424 = vpop.f32.mrb[0].mxu0
      %v425 = vpop.f32.mrb[0].mxu0
      %v426 = vadd.f32 %v329, %v425
      %v427 = vpop.f32.mrb[0].mxu0
      %428 = vmatprep.mubr.bf16.mxu0 0
      %429 = vmatmul.mubr.bf16.gmra.mrb[0].mxu0 %v204
      %v430 = vpop.f32.mrb[0].mxu0
      %v431 = vadd.f32 %v334, %v430
      %v432 = vpop.f32.mrb[0].mxu0
      %v433 = vpop.f32.mrb[0].mxu0
      %v434 = vadd.f32 %v337, %v433
      %v435 = vpop.f32.mrb[0].mxu0
      %436 = vdwg.mxu0
      %v437 = vld [vmem:[%s3] sm:$0x1]
      %v439 = vlaneseq
      %v440 = vshrl.u32 %v439, 7
      %v441 = vsub.s32 0, %v440
      %v442 = vrot.slane %v437, %v441
      %v444 = vadd.f32 %v423, %v442
      %v445 = vadd.f32 %v426, %v442
      %v446 = vadd.f32 %v431, %v442
      %v447 = vadd.f32 %v434, %v442
      %v448 = vmax.f32 %v444, 0.0
      %v449 = vmax.f32 %v445, 0.0
      %v450 = vmax.f32 %v446, 0.0
      %v451 = vmax.f32 %v447, 0.0
      %452 = vst [vmem:[%s197] sm:$0xff] %v448
      %453 = vst [vmem:[%s197 + $0x8] sm:$0xff] %v449
      %454 = vst [vmem:[%s197 + $0x10] sm:$0xff] %v450
      %455 = vst [vmem:[%s197 + $0x18] sm:$0xff] %v451
      %p456 = scmp.lt.s32.totalorder %s15, 1
      %s457 = scalar_select %p456, %s15, 1
      %s458 = smul.addr %s457, 4
      %s459 = smul.addr %s458, 8
      %s460 = scalar_lea.vmem %s4, %s459
      // Predicated region
      $region37: #{transformer_forward.14} parent=35 // pred_check
        %p461 = pneg %p122
      $region38: #{transformer_forward.14} parent=35 // pred_check_branch
        %463 = sbr.rel (%p461) target = $region40
      $region39: #{transformer_forward.14} parent=35 // pred_region
        _
      $region40: #{transformer_forward.14} parent=35 // pred_fallthru
        _
    $region36: #{transformer_forward.14} parent=5 // pred_fallthru
      _
    %p464 = scmp.le.s32.totalorder 2, %s10
    // Predicated region
    $region41: #{transformer_forward.14} parent=5 // pred_check
      %p465 = pneg %p464
    $region42: #{transformer_forward.14} parent=5 // pred_check_branch
      %467 = sbr.rel (%p465) target = $region44
    $region43: #{transformer_forward.14} parent=5 // pred_region
      %s468 = ssub.s32 %s10, 2
      // Predicated region
      $region45: #{transformer_forward.14} parent=43 // pred_check
        %p469 = pneg %p128
      $region46: #{transformer_forward.14} parent=43 // pred_check_branch
        %471 = sbr.rel (%p469) target = $region48
      $region47: #{transformer_forward.14} parent=43 // pred_region
        %p472 = scmp.lt.s32.totalorder %s16, 1
        %s473 = scalar_select %p472, %s16, 1
        %s474 = smul.addr %s473, 4
        %s475 = smul.addr %s474, 8
        %s476 = scalar_lea.vmem %s4, %s475
      $region48: #{transformer_forward.14} parent=43 // pred_fallthru
        _
    $region44: #{transformer_forward.14} parent=5 // pred_fallthru
      _
  $region6: #{transformer_forward.14} parent=0 // loop_footer
    %s14 = sadd.s32 1, %s10
  $region7: #{transformer_forward.14} parent=0 // loop_footer_branch
    %9 = sbr.rel target = $region3
  $region8: #{transformer_forward.14} parent=0 // loop_exit
    _

// kernel: transformer_forward.15
$region0: #{transformer_forward.15}
  #allocation0 [shape = 'u32[]', space=smem, size = 0x4, offset = 0x4, fixed_abs, tag = 'smem constant byte address 0x4 - core index']
  #allocation1 [shape = 'u32[144,128]{1,0:T(1,128)}', space=vmem, size = 0x12000, scoped, tag = 'internal scratch']
  %s0 = inlined_call_operand.vmem [shape: f32[2,17,256], index: 0, kind: input, shape index: {}]
  %s1 = inlined_call_operand.vmem [shape: bf16[256,64], index: 1, kind: input, shape index: {}]
  %s2 = inlined_call_operand.vmem [shape: bf16[256,64], index: 2, kind: input, shape index: {}]
  %s3 = inlined_call_operand.vmem [shape: f32[1,64], index: 3, kind: input, shape index: {}]
  %s4 = inlined_call_operand.vmem [shape: bf16[2,16,64], index: 4, kind: output, shape index: {}]
  %s5 = sld [smem:[#allocation0]]
  $region49: #{transformer_forward.15} parent=0
    _
  %s7 = ssub.s32 1, %s5
  %s8 = scalar_select 0, %s7, %s5
  loop: start=0, step=1, limit=4
  $region2: #{transformer_forward.15} parent=0 // loop_pre_header
    _
  $region3: #{transformer_forward.15} parent=0 // loop_header
    %s10 = sphi 0, %s14
    %p11 = scmp.ge.s32.totalorder %s10, 4
    %s20 = sphi 0, %s22
    %s23 = sphi 0, %s20
    %s24 = sphi 0, %s23
    %s40 = sphi 0, %s24
    %s44 = sphi 0, %s44
    %s46 = sphi 0, %s44
    %s47 = sphi 0, %s46
    %s61 = sphi 0, %s47
    %s65 = sphi 0, %s65
    %s67 = sphi 0, %s65
    %s68 = sphi 0, %s67
    %s82 = sphi 0, %s68
    %s86 = sphi 0, %s86
    %s88 = sphi 0, %s86
    %s89 = sphi 0, %s88
    %s103 = sphi 0, %s89
    %s109 = sphi 0, %s111
    %s112 = sphi 0, %s109
    %s113 = sphi 0, %s112
    %s129 = sphi 0, %s113
  $region4: #{transformer_forward.15} parent=0 // loop_header_branch
    %13 = sbr.rel (%p11) target = $region8
  $region5: #{transformer_forward.15} parent=0 // loop_body
    %s15 = ssub.s32 %s10, 1
    %s16 = ssub.s32 %s10, 2
    %s17 = sadd.s32 %s10, 1
    %s18 = ssub.s32 %s10, %s17
    %p19 = scmp.eq.s32.totalorder %s18, 0
    %s21 = sadd.s32 %s20, 1
    %s22 = scalar_select %p19, %s20, %s21
    %p25 = pneg %p19
    %p26 = scmp.eq.s32.totalorder %s10, 1
    %p27 = por %p25, %p26
    %p28 = scmp.ne.s32.totalorder %s20, %s23
    %p29 = scmp.eq.s32.totalorder %s10, 0
    %p30 = por %p28, %p29
    %p31 = scmp.ne.s32.totalorder %s20, %s23
    %p32 = scmp.eq.s32.totalorder %s15, 1
    %p33 = por %p31, %p32
    %p34 = scmp.ne.s32.totalorder %s23, %s24
    %p35 = scmp.eq.s32.totalorder %s15, 0
    %p36 = por %p34, %p35
    %p37 = scmp.ne.s32.totalorder %s23, %s24
    %p38 = scmp.eq.s32.totalorder %s16, 1
    %p39 = por %p37, %p38
    %p41 = scmp.ne.s32.totalorder %s24, %s40
    %p42 = scmp.eq.s32.totalorder %s16, 0
    %p43 = por %p41, %p42
    %s45 = sadd.s32 %s44, 1
    %p48 = scmp.eq.s32.totalorder %s10, 1
    %p49 = scmp.ne.s32.totalorder %s44, %s46
    %p50 = scmp.eq.s32.totalorder %s10, 0
    %p51 = por %p49, %p50
    %p52 = scmp.ne.s32.totalorder %s44, %s46
    %p53 = scmp.eq.s32.totalorder %s15, 1
    %p54 = por %p52, %p53
    %p55 = scmp.ne.s32.totalorder %s46, %s47
    %p56 = scmp.eq.s32.totalorder %s15, 0
    %p57 = por %p55, %p56
    %p58 = scmp.ne.s32.totalorder %s46, %s47
    %p59 = scmp.eq.s32.totalorder %s16, 1
    %p60 = por %p58, %p59
    %p62 = scmp.ne.s32.totalorder %s47, %s61
    %p63 = scmp.eq.s32.totalorder %s16, 0
    %p64 = por %p62, %p63
    %s66 = sadd.s32 %s65, 1
    %p69 = scmp.eq.s32.totalorder %s10, 1
    %p70 = scmp.ne.s32.totalorder %s65, %s67
    %p71 = scmp.eq.s32.totalorder %s10, 0
    %p72 = por %p70, %p71
    %p73 = scmp.ne.s32.totalorder %s65, %s67
    %p74 = scmp.eq.s32.totalorder %s15, 1
    %p75 = por %p73, %p74
    %p76 = scmp.ne.s32.totalorder %s67, %s68
    %p77 = scmp.eq.s32.totalorder %s15, 0
    %p78 = por %p76, %p77
    %p79 = scmp.ne.s32.totalorder %s67, %s68
    %p80 = scmp.eq.s32.totalorder %s16, 1
    %p81 = por %p79, %p80
    %p83 = scmp.ne.s32.totalorder %s68, %s82
    %p84 = scmp.eq.s32.totalorder %s16, 0
    %p85 = por %p83, %p84
    %s87 = sadd.s32 %s86, 1
    %p90 = scmp.eq.s32.totalorder %s10, 1
    %p91 = scmp.ne.s32.totalorder %s86, %s88
    %p92 = scmp.eq.s32.totalorder %s10, 0
    %p93 = por %p91, %p92
    %p94 = scmp.ne.s32.totalorder %s86, %s88
    %p95 = scmp.eq.s32.totalorder %s15, 1
    %p96 = por %p94, %p95
    %p97 = scmp.ne.s32.totalorder %s88, %s89
    %p98 = scmp.eq.s32.totalorder %s15, 0
    %p99 = por %p97, %p98
    %p100 = scmp.ne.s32.totalorder %s88, %s89
    %p101 = scmp.eq.s32.totalorder %s16, 1
    %p102 = por %p100, %p101
    %p104 = scmp.ne.s32.totalorder %s89, %s103
    %p105 = scmp.eq.s32.totalorder %s16, 0
    %p106 = por %p104, %p105
    %s107 = ssub.s32 %s10, %s17
    %p108 = scmp.eq.s32.totalorder %s107, 0
    %s110 = sadd.s32 %s109, 1
    %s111 = scalar_select %p108, %s109, %s110
    %p114 = pneg %p108
    %p115 = scmp.eq.s32.totalorder %s10, 1
    %p116 = por %p114, %p115
    %p117 = scmp.ne.s32.totalorder %s109, %s112
    %p118 = scmp.eq.s32.totalorder %s10, 0
    %p119 = por %p117, %p118
    %p120 = scmp.ne.s32.totalorder %s109, %s112
    %p121 = scmp.eq.s32.totalorder %s15, 1
    %p122 = por %p120, %p121
    %p123 = scmp.ne.s32.totalorder %s112, %s113
    %p124 = scmp.eq.s32.totalorder %s15, 0
    %p125 = por %p123, %p124
    %p126 = scmp.ne.s32.totalorder %s112, %s113
    %p127 = scmp.eq.s32.totalorder %s16, 1
    %p128 = por %p126, %p127
    %p130 = scmp.ne.s32.totalorder %s113, %s129
    %p131 = scmp.eq.s32.totalorder %s16, 0
    %p132 = por %p130, %p131
    %p133 = scmp.le.s32.totalorder 1, %s10
    %p134 = scmp.lt.s32.totalorder %s10, 3
    %p135 = pnand %p133, %p134
    %p136 = pneg %p135
    // Predicated region
    $region9: #{transformer_forward.15} parent=5 // pred_check
      _
    $region10: #{transformer_forward.15} parent=5 // pred_check_branch
      %138 = sbr.rel (%p135) target = $region12
    $region11: #{transformer_forward.15} parent=5 // pred_region
      %s139 = ssub.s32 %s10, 1
      // Predicated region
      $region13: #{transformer_forward.15} parent=11 // pred_check
        %p140 = pneg %p57
      $region14: #{transformer_forward.15} parent=11 // pred_check_branch
        %142 = sbr.rel (%p140) target = $region16
      $region15: #{transformer_forward.15} parent=11 // pred_region
        _
      $region16: #{transformer_forward.15} parent=11 // pred_fallthru
        _
      // Predicated region
      $region17: #{transformer_forward.15} parent=11 // pred_check
        %p143 = pneg %p78
      $region18: #{transformer_forward.15} parent=11 // pred_check_branch
        %145 = sbr.rel (%p143) target = $region20
      $region19: #{transformer_forward.15} parent=11 // pred_region
        _
      $region20: #{transformer_forward.15} parent=11 // pred_fallthru
        _
      // Predicated region
      $region21: #{transformer_forward.15} parent=11 // pred_check
        %p146 = pneg %p99
      $region22: #{transformer_forward.15} parent=11 // pred_check_branch
        %148 = sbr.rel (%p146) target = $region24
      $region23: #{transformer_forward.15} parent=11 // pred_region
        _
      $region24: #{transformer_forward.15} parent=11 // pred_fallthru
        _
    $region12: #{transformer_forward.15} parent=5 // pred_fallthru
      _
    %p149 = scmp.lt.s32.totalorder %s10, 2
    // Predicated region
    $region25: #{transformer_forward.15} parent=5 // pred_check
      %p150 = pneg %p149
    $region26: #{transformer_forward.15} parent=5 // pred_check_branch
      %152 = sbr.rel (%p150) target = $region28
    $region27: #{transformer_forward.15} parent=5 // pred_region
      // Predicated region
      $region29: #{transformer_forward.15} parent=27 // pred_check
        %p153 = pneg %p30
      $region30: #{transformer_forward.15} parent=27 // pred_check_branch
        %155 = sbr.rel (%p153) target = $region32
      $region31: #{transformer_forward.15} parent=27 // pred_region
        %p156 = scmp.lt.s32.totalorder %s10, 1
        %s157 = scalar_select %p156, %s10, 1
        %s158 = smul.addr %s157, 6
        %s159 = smul.addr %s158, 8
        %s160 = scalar_lea.vmem %s0, %s159
      $region32: #{transformer_forward.15} parent=27 // pred_fallthru
        _
    $region28: #{transformer_forward.15} parent=5 // pred_fallthru
      _
    %p161 = scmp.le.s32.totalorder 1, %s10
    %p162 = scmp.lt.s32.totalorder %s10, 3
    %p163 = pnand %p161, %p162
    %p164 = pneg %p163
    // Predicated region
    $region33: #{transformer_forward.15} parent=5 // pred_check
      _
    $region34: #{transformer_forward.15} parent=5 // pred_check_branch
      %166 = sbr.rel (%p163) target = $region36
    $region35: #{transformer_forward.15} parent=5 // pred_region
      %s167 = ssub.s32 %s10, 1
      %p168 = scmp.lt.s32.totalorder %s15, 1
      %s169 = scalar_select %p168, %s15, 1
      %s170 = smul.addr %s169, 6
      %s171 = smul.addr %s170, 8
      %s172 = scalar_lea.vmem %s0, %s171
      %p173 = pneg %p36
      %p174 = pneg %p33
      %p175 = pneg %p57
      %p176 = pneg %p54
      %p177 = pneg %p78
      %p178 = pneg %p75
      %p179 = pneg %p99
      %p180 = pneg %p96
      %p181 = pneg %p125
      %p182 = pneg %p122
      %p183 = scmp.lt.s32.totalorder %s15, 1
      %s184 = scalar_select %p183, %s15, 1
      %s185 = smul.addr %s184, 2
      %s186 = smul.addr %s185, 4
      %s187 = scalar_lea.vmem %s4, %s186
      %p188 = scmp.lt.s32.totalorder %s15, 1
      %s189 = scalar_select %p188, %s15, 1
      %s190 = smul.addr %s189, 6
      %s191 = smul.addr %s190, 8
      %s192 = scalar_lea.vmem %s0, %s191
      %p193 = scmp.lt.s32.totalorder %s15, 1
      %s194 = scalar_select %p193, %s15, 1
      %s195 = smul.addr %s194, 2
      %s196 = smul.addr %s195, 4
      %s197 = scalar_lea.vmem %s4, %s196
      %v199 = vld [vmem:[%s192] sm:$0xff]
      %v200 = vld [vmem:[%s192 + $0x8] sm:$0xff]
      %v201 = vld [vmem:[%s192 + $0x10] sm:$0xff]
      %v202 = vld [vmem:[%s192 + $0x18] sm:$0xff]
      %v203 = vpack.c.bf16 %v201, %v199
      %v204 = vpack.c.bf16 %v202, %v200
      %v205 = vld [vmem:[%s192] sm:$0xfe]
      %v206 = vld [vmem:[%s192 + $0x8] sm:$0xfe]
      %v207 = vld [vmem:[%s192 + $0x20] sm:$0x1]
      %v208 = vld [vmem:[%s192 + $0x28] sm:$0x1]
      %v209 = vpack.c.bf16 %v201, %v205
      %v210 = vpack.c.bf16 %v202, %v206
      %v211 = vpack.c.bf16 %v207, %v207
      %v212 = vpack.c.bf16 %v208, %v208
      %v213 = vld [vmem:[%s1] sm:$0xf]
      %v214 = vld [vmem:[%s1 + $0x4] sm:$0xf]
      %v215 = vld [vmem:[%s1 + $0x8] sm:$0xf]
      %v216 = vld [vmem:[%s1 + $0xc] sm:$0xf]
      %v217 = vld [vmem:[%s1 + $0x10] sm:$0xf]
      %v218 = vld [vmem:[%s1 + $0x14] sm:$0xf]
      %v219 = vld [vmem:[%s1 + $0x18] sm:$0xf]
      %v220 = vld [vmem:[%s1 + $0x1c] sm:$0xf]
      %v221 = vld [vmem:[%s1 + $0x20] sm:$0xf]
      %v222 = vld [vmem:[%s1 + $0x24] sm:$0xf]
      %v223 = vld [vmem:[%s1 + $0x28] sm:$0xf]
      %v224 = vld [vmem:[%s1 + $0x2c] sm:$0xf]
      %v225 = vld [vmem:[%s1 + $0x30] sm:$0xf]
      %v226 = vld [vmem:[%s1 + $0x34] sm:$0xf]
      %v227 = vld [vmem:[%s1 + $0x38] sm:$0xf]
      %v228 = vld [vmem:[%s1 + $0x3c] sm:$0xf]
      %v229 = vld [vmem:[%s1 + $0x40] sm:$0xf]
      %v230 = vld [vmem:[%s1 + $0x44] sm:$0xf]
      %v231 = vld [vmem:[%s1 + $0x48] sm:$0xf]
      %v232 = vld [vmem:[%s1 + $0x4c] sm:$0xf]
      %v233 = vld [vmem:[%s1 + $0x50] sm:$0xf]
      %v234 = vld [vmem:[%s1 + $0x54] sm:$0xf]
      %v235 = vld [vmem:[%s1 + $0x58] sm:$0xf]
      %v236 = vld [vmem:[%s1 + $0x5c] sm:$0xf]
      %v237 = vld [vmem:[%s1 + $0x60] sm:$0xf]
      %v238 = vld [vmem:[%s1 + $0x64] sm:$0xf]
      %v239 = vld [vmem:[%s1 + $0x68] sm:$0xf]
      %v240 = vld [vmem:[%s1 + $0x6c] sm:$0xf]
      %v241 = vld [vmem:[%s1 + $0x70] sm:$0xf]
      %v242 = vld [vmem:[%s1 + $0x74] sm:$0xf]
      %v243 = vld [vmem:[%s1 + $0x78] sm:$0xf]
      %v244 = vld [vmem:[%s1 + $0x7c] sm:$0xf]
      %v245 = vld [vmem:[%s2] sm:$0xf]
      %v246 = vld [vmem:[%s2 + $0x4] sm:$0xf]
      %v247 = vld [vmem:[%s2 + $0x8] sm:$0xf]
      %v248 = vld [vmem:[%s2 + $0xc] sm:$0xf]
      %v249 = vld [vmem:[%s2 + $0x10] sm:$0xf]
      %v250 = vld [vmem:[%s2 + $0x14] sm:$0xf]
      %v251 = vld [vmem:[%s2 + $0x18] sm:$0xf]
      %v252 = vld [vmem:[%s2 + $0x1c] sm:$0xf]
      %v253 = vld [vmem:[%s2 + $0x20] sm:$0xf]
      %v254 = vld [vmem:[%s2 + $0x24] sm:$0xf]
      %v255 = vld [vmem:[%s2 + $0x28] sm:$0xf]
      %v256 = vld [vmem:[%s2 + $0x2c] sm:$0xf]
      %v257 = vld [vmem:[%s2 + $0x30] sm:$0xf]
      %v258 = vld [vmem:[%s2 + $0x34] sm:$0xf]
      %v259 = vld [vmem:[%s2 + $0x38] sm:$0xf]
      %v260 = vld [vmem:[%s2 + $0x3c] sm:$0xf]
      %v261 = vld [vmem:[%s2 + $0x40] sm:$0xf]
      %v262 = vld [vmem:[%s2 + $0x44] sm:$0xf]
      %v263 = vld [vmem:[%s2 + $0x48] sm:$0xf]
      %v264 = vld [vmem:[%s2 + $0x4c] sm:$0xf]
      %v265 = vld [vmem:[%s2 + $0x50] sm:$0xf]
      %v266 = vld [vmem:[%s2 + $0x54] sm:$0xf]
      %v267 = vld [vmem:[%s2 + $0x58] sm:$0xf]
      %v268 = vld [vmem:[%s2 + $0x5c] sm:$0xf]
      %v269 = vld [vmem:[%s2 + $0x60] sm:$0xf]
      %v270 = vld [vmem:[%s2 + $0x64] sm:$0xf]
      %v271 = vld [vmem:[%s2 + $0x68] sm:$0xf]
      %v272 = vld [vmem:[%s2 + $0x6c] sm:$0xf]
      %v273 = vld [vmem:[%s2 + $0x70] sm:$0xf]
      %v274 = vld [vmem:[%s2 + $0x74] sm:$0xf]
      %v275 = vld [vmem:[%s2 + $0x78] sm:$0xf]
      %v276 = vld [vmem:[%s2 + $0x7c] sm:$0xf]
      %vm277 = vsmask.f32 7424
      %v279 = vshrl.u32 %v209, 16
      %v281 = vshll.u32 %v209, 16
      %v283 = vrot.slane %v281, 1
      %v284 = vor.u32 %v279, %v283
      %v286 = vshll.u32 %v211, 16
      %v288 = vrot.slane %v286, 1
      %v289 = vsel %vm277, %v284, %v288
      %v291 = vshrl.u32 %v210, 16
      %v293 = vshll.u32 %v210, 16
      %v295 = vrot.slane %v293, 1
      %v296 = vor.u32 %v291, %v295
      %v298 = vshll.u32 %v212, 16
      %v300 = vrot.slane %v298, 1
      %v301 = vsel %vm277, %v296, %v300
      %v336 = vunpack.c.l.b16 %v245
      %v337 = vunpack.c.l.b16 %v246
      %v338 = vunpack.c.l.b16 %v247
      %v339 = vunpack.c.l.b16 %v248
      %v340 = vunpack.c.l.b16 %v249
      %v341 = vunpack.c.l.b16 %v250
      %v342 = vunpack.c.l.b16 %v251
      %v343 = vunpack.c.l.b16 %v252
      %v344 = vunpack.c.l.b16 %v253
      %v345 = vunpack.c.l.b16 %v254
      %v346 = vunpack.c.l.b16 %v255
      %v347 = vunpack.c.l.b16 %v256
      %v348 = vunpack.c.l.b16 %v257
      %v349 = vunpack.c.l.b16 %v258
      %v350 = vunpack.c.l.b16 %v259
      %v351 = vunpack.c.l.b16 %v260
      %v352 = vunpack.c.l.b16 %v261
      %v353 = vunpack.c.l.b16 %v262
      %v354 = vunpack.c.l.b16 %v263
      %v355 = vunpack.c.l.b16 %v264
      %v356 = vunpack.c.l.b16 %v265
      %v357 = vunpack.c.l.b16 %v266
      %v358 = vunpack.c.l.b16 %v267
      %v359 = vunpack.c.l.b16 %v268
      %v360 = vunpack.c.l.b16 %v269
      %v361 = vunpack.c.l.b16 %v270
      %v362 = vunpack.c.l.b16 %v271
      %v363 = vunpack.c.l.b16 %v272
      %v364 = vunpack.c.l.b16 %v273
      %v365 = vunpack.c.l.b16 %v274
      %v366 = vunpack.c.l.b16 %v275
      %v367 = vunpack.c.l.b16 %v276
      %v368 = vpack.c.b16 %v337, %v336
      %v369 = vpack.c.b16 %v339, %v338
      %v370 = vpack.c.b16 %v341, %v340
      %v371 = vpack.c.b16 %v343, %v342
      %v372 = vpack.c.b16 %v345, %v344
      %v373 = vpack.c.b16 %v347, %v346
      %v374 = vpack.c.b16 %v349, %v348
      %v375 = vpack.c.b16 %v351, %v350
      %v376 = vpack.c.b16 %v353, %v352
      %v377 = vpack.c.b16 %v355, %v354
      %v378 = vpack.c.b16 %v357, %v356
      %v379 = vpack.c.b16 %v359, %v358
      %v380 = vpack.c.b16 %v361, %v360
      %v381 = vpack.c.b16 %v363, %v362
      %v382 = vpack.c.b16 %v365, %v364
      %v383 = vpack.c.b16 %v367, %v366
      %400 = vmatprep.subr.bf16.mxu0 0
      %401 = vmatpush1.bf16.msra.mxu0 %v368
      %402 = vmatprep.subr.bf16.mxu0 0
      %403 = vmatpush1.bf16.msra.mxu0 %v369
      %404 = vmatprep.subr.bf16.mxu0 0
      %405 = vmatpush1.bf16.msra.mxu0 %v370
      %406 = vmatprep.subr.bf16.mxu0 0
      %407 = vmatpush1.bf16.msra.mxu0 %v371
      %408 = vmatprep.subr.bf16.mxu0 0
      %409 = vmatpush1.bf16.msra.mxu0 %v372
      %410 = vmatprep.subr.bf16.mxu0 0
      %411 = vmatpush1.bf16.msra.mxu0 %v373
      %412 = vmatprep.subr.bf16.mxu0 0
      %413 = vmatpush1.bf16.msra.mxu0 %v374
      %414 = vmatprep.subr.bf16.mxu0 0
      %415 = vmatpush1.bf16.msra.mxu0 %v375
      %416 = vmatprep.subr.bf16.mxu0 0
      %417 = vmatpush1.bf16.msra.mxu0 %v376
      %418 = vmatprep.subr.bf16.mxu0 0
      %419 = vmatpush1.bf16.msra.mxu0 %v377
      %420 = vmatprep.subr.bf16.mxu0 0
      %421 = vmatpush1.bf16.msra.mxu0 %v378
      %422 = vmatprep.subr.bf16.mxu0 0
      %423 = vmatpush1.bf16.msra.mxu0 %v379
      %424 = vmatprep.subr.bf16.mxu0 0
      %425 = vmatpush1.bf16.msra.mxu0 %v380
      %426 = vmatprep.subr.bf16.mxu0 0
      %427 = vmatpush1.bf16.msra.mxu0 %v381
      %428 = vmatprep.subr.bf16.mxu0 0
      %429 = vmatpush1.bf16.msra.mxu0 %v382
      %430 = vmatprep.subr.bf16.mxu0 0
      %431 = vmatpush1.bf16.msra.mxu0 %v383
      %432 = vmatprep.mubr.bf16.mxu0 %v301
      %433 = vmatmul.mubr.bf16.gmra.mrb[0].mxu0 %v289
      %v434 = vpop.f32.mrb[0].mxu0
      %v435 = vadd.f32 0.0, %v434
      %v436 = vpop.f32.mrb[0].mxu0
      %v437 = vpop.f32.mrb[0].mxu0
      %v438 = vadd.f32 0.0, %v437
      %v439 = vpop.f32.mrb[0].mxu0
      %440 = vdwg.mxu0
      %v473 = vunpack.c.l.b16 %v213
      %v474 = vunpack.c.l.b16 %v214
      %v475 = vunpack.c.l.b16 %v215
      %v476 = vunpack.c.l.b16 %v216
      %v477 = vunpack.c.l.b16 %v217
      %v478 = vunpack.c.l.b16 %v218
      %v479 = vunpack.c.l.b16 %v219
      %v480 = vunpack.c.l.b16 %v220
      %v481 = vunpack.c.l.b16 %v221
      %v482 = vunpack.c.l.b16 %v222
      %v483 = vunpack.c.l.b16 %v223
      %v484 = vunpack.c.l.b16 %v224
      %v485 = vunpack.c.l.b16 %v225
      %v486 = vunpack.c.l.b16 %v226
      %v487 = vunpack.c.l.b16 %v227
      %v488 = vunpack.c.l.b16 %v228
      %v489 = vunpack.c.l.b16 %v229
      %v490 = vunpack.c.l.b16 %v230
      %v491 = vunpack.c.l.b16 %v231
      %v492 = vunpack.c.l.b16 %v232
      %v493 = vunpack.c.l.b16 %v233
      %v494 = vunpack.c.l.b16 %v234
      %v495 = vunpack.c.l.b16 %v235
      %v496 = vunpack.c.l.b16 %v236
      %v497 = vunpack.c.l.b16 %v237
      %v498 = vunpack.c.l.b16 %v238
      %v499 = vunpack.c.l.b16 %v239
      %v500 = vunpack.c.l.b16 %v240
      %v501 = vunpack.c.l.b16 %v241
      %v502 = vunpack.c.l.b16 %v242
      %v503 = vunpack.c.l.b16 %v243
      %v504 = vunpack.c.l.b16 %v244
      %v505 = vpack.c.b16 %v474, %v473
      %v506 = vpack.c.b16 %v476, %v475
      %v507 = vpack.c.b16 %v478, %v477
      %v508 = vpack.c.b16 %v480, %v479
      %v509 = vpack.c.b16 %v482, %v481
      %v510 = vpack.c.b16 %v484, %v483
      %v511 = vpack.c.b16 %v486, %v485
      %v512 = vpack.c.b16 %v488, %v487
      %v513 = vpack.c.b16 %v490, %v489
      %v514 = vpack.c.b16 %v492, %v491
      %v515 = vpack.c.b16 %v494, %v493
      %v516 = vpack.c.b16 %v496, %v495
      %v517 = vpack.c.b16 %v498, %v497
      %v518 = vpack.c.b16 %v500, %v499
      %v519 = vpack.c.b16 %v502, %v501
      %v520 = vpack.c.b16 %v504, %v503
      %537 = vmatprep.subr.bf16.mxu0 0
      %538 = vmatpush1.bf16.msra.mxu0 %v505
      %539 = vmatprep.subr.bf16.mxu0 0
      %540 = vmatpush1.bf16.msra.mxu0 %v506
      %541 = vmatprep.subr.bf16.mxu0 0
      %542 = vmatpush1.bf16.msra.mxu0 %v507
      %543 = vmatprep.subr.bf16.mxu0 0
      %544 = vmatpush1.bf16.msra.mxu0 %v508
      %545 = vmatprep.subr.bf16.mxu0 0
      %546 = vmatpush1.bf16.msra.mxu0 %v509
      %547 = vmatprep.subr.bf16.mxu0 0
      %548 = vmatpush1.bf16.msra.mxu0 %v510
      %549 = vmatprep.subr.bf16.mxu0 0
      %550 = vmatpush1.bf16.msra.mxu0 %v511
      %551 = vmatprep.subr.bf16.mxu0 0
      %552 = vmatpush1.bf16.msra.mxu0 %v512
      %553 = vmatprep.subr.bf16.mxu0 0
      %554 = vmatpush1.bf16.msra.mxu0 %v513
      %555 = vmatprep.subr.bf16.mxu0 0
      %556 = vmatpush1.bf16.msra.mxu0 %v514
      %557 = vmatprep.subr.bf16.mxu0 0
      %558 = vmatpush1.bf16.msra.mxu0 %v515
      %559 = vmatprep.subr.bf16.mxu0 0
      %560 = vmatpush1.bf16.msra.mxu0 %v516
      %561 = vmatprep.subr.bf16.mxu0 0
      %562 = vmatpush1.bf16.msra.mxu0 %v517
      %563 = vmatprep.subr.bf16.mxu0 0
      %564 = vmatpush1.bf16.msra.mxu0 %v518
      %565 = vmatprep.subr.bf16.mxu0 0
      %566 = vmatpush1.bf16.msra.mxu0 %v519
      %567 = vmatprep.subr.bf16.mxu0 0
      %568 = vmatpush1.bf16.msra.mxu0 %v520
      %569 = vmatprep.mubr.bf16.mxu0 %v204
      %570 = vmatmul.mubr.bf16.gmra.mrb[0].mxu0 %v203
      %v571 = vpop.f32.mrb[0].mxu0
      %v572 = vadd.f32 %v435, %v571
      %v573 = vpop.f32.mrb[0].mxu0
      %v574 = vpop.f32.mrb[0].mxu0
      %v575 = vadd.f32 %v438, %v574
      %v576 = vpop.f32.mrb[0].mxu0
      %577 = vdwg.mxu0
      %v578 = vld [vmem:[%s3] sm:$0x1]
      %v580 = vlaneseq
      %v581 = vshrl.u32 %v580, 7
      %v582 = vsub.s32 0, %v581
      %v583 = vrot.slane %v578, %v582
      %v585 = vadd.f32 %v572, %v583
      %v586 = vadd.f32 %v575, %v583
      %v587 = vmax.f32 %v585, 0.0
      %v588 = vmax.f32 %v586, 0.0
      %v589 = vpack.c.bf16 %v588, %v587
      %v591 = vunpack.c.l.b16 %v589
      %v592 = vunpack.c.h.b16 %v589
      %v593 = vpack.c.b16 %v591, %v591
      %v594 = vpack.c.b16 %v592, %v592
      %vm597 = vcmask 519168
      %598 = vst.msk [vmem:[%s197] sm:$0xf] %vm597, %v593
      %599 = vst.msk [vmem:[%s197 + $0x4] sm:$0xf] %vm597, %v594
      %p600 = scmp.lt.s32.totalorder %s15, 1
      %s601 = scalar_select %p600, %s15, 1
      %s602 = smul.addr %s601, 2
      %s603 = smul.addr %s602, 4
      %s604 = scalar_lea.vmem %s4, %s603
      // Predicated region
      $region37: #{transformer_forward.15} parent=35 // pred_check
        %p605 = pneg %p122
      $region38: #{transformer_forward.15} parent=35 // pred_check_branch
        %607 = sbr.rel (%p605) target = $region40
      $region39: #{transformer_forward.15} parent=35 // pred_region
        _
      $region40: #{transformer_forward.15} parent=35 // pred_fallthru
        _
    $region36: #{transformer_forward.15} parent=5 // pred_fallthru
      _
    %p608 = scmp.le.s32.totalorder 2, %s10
    // Predicated region
    $region41: #{transformer_forward.15} parent=5 // pred_check
      %p609 = pneg %p608
    $region42: #{transformer_forward.15} parent=5 // pred_check_branch
      %611 = sbr.rel (%p609) target = $region44
    $region43: #{transformer_forward.15} parent=5 // pred_region
      %s612 = ssub.s32 %s10, 2
      // Predicated region
      $region45: #{transformer_forward.15} parent=43 // pred_check
        %p613 = pneg %p128
      $region46: #{transformer_forward.15} parent=43 // pred_check_branch
        %615 = sbr.rel (%p613) target = $region48
      $region47: #{transformer_forward.15} parent=43 // pred_region
        %p616 = scmp.lt.s32.totalorder %s16, 1
        %s617 = scalar_select %p616, %s16, 1
        %s618 = smul.addr %s617, 2
        %s619 = smul.addr %s618, 4
        %s620 = scalar_lea.vmem %s4, %s619
      $region48: #{transformer_forward.15} parent=43 // pred_fallthru
        _
    $region44: #{transformer_forward.15} parent=5 // pred_fallthru
      _
  $region6: #{transformer_forward.15} parent=0 // loop_footer
    %s14 = sadd.s32 1, %s10
  $region7: #{transformer_forward.15} parent=0 // loop_footer_branch
    %9 = sbr.rel target = $region3
  $region8: #{transformer_forward.15} parent=0 // loop_exit
    _

// kernel: transformer_forward.17
$region0: #{transformer_forward.17}
  #allocation0 [shape = 'u32[]', space=smem, size = 0x4, offset = 0x4, fixed_abs, tag = 'smem constant byte address 0x4 - core index']
  #allocation1 [shape = 'u32[144,128]{1,0:T(1,128)}', space=vmem, size = 0x12000, scoped, tag = 'internal scratch']
  #allocation2 [shape = 'f32[32,768]{1,0:T(8,128)}', space=vmem, size = 0x18000, scoped, tag = 'scratch operand']
  %s0 = inlined_call_operand.vmem [shape: bf16[32,256], index: 0, kind: input, shape index: {}]
  %s1 = inlined_call_operand.vmem [shape: bf16[256,768], index: 1, kind: input, shape index: {}]
  %s2 = inlined_call_operand.vmem [shape: f32[1,768], index: 2, kind: input, shape index: {}]
  %s3 = inlined_call_operand.vmem [shape: bf16[32,768], index: 3, kind: output, shape index: {}]
  %s4 = sld [smem:[#allocation0]]
  $region30: #{transformer_forward.17} parent=0
    _
  %s6 = ssub.s32 1, %s4
  %s7 = scalar_select 0, %s6, %s4
  // Predicated region
  $region2: #{transformer_forward.17} parent=0 // pred_check
    _
  $region3: #{transformer_forward.17} parent=0 // pred_check_branch
    %9 = sbr.rel (0) target = $region5
  $region4: #{transformer_forward.17} parent=0 // pred_region
    _
  $region5: #{transformer_forward.17} parent=0 // pred_fallthru
    _
  // Predicated region
  $region6: #{transformer_forward.17} parent=0 // pred_check
    _
  $region7: #{transformer_forward.17} parent=0 // pred_check_branch
    %11 = sbr.rel (0) target = $region9
  $region8: #{transformer_forward.17} parent=0 // pred_region
    _
  $region9: #{transformer_forward.17} parent=0 // pred_fallthru
    _
  // Predicated region
  $region10: #{transformer_forward.17} parent=0 // pred_check
    _
  $region11: #{transformer_forward.17} parent=0 // pred_check_branch
    %13 = sbr.rel (0) target = $region13
  $region12: #{transformer_forward.17} parent=0 // pred_region
    _
  $region13: #{transformer_forward.17} parent=0 // pred_fallthru
    _
  %p14 = scmp.eq.s32.totalorder 0, 0
  // Predicated region
  $region14: #{transformer_forward.17} parent=0 // pred_check
    %p15 = pneg %p14
  $region15: #{transformer_forward.17} parent=0 // pred_check_branch
    %17 = sbr.rel (%p15) target = $region17
  $region16: #{transformer_forward.17} parent=0 // pred_region
    %18 = vst [vmem:[#allocation2] sm:$0xff] 0.0
    %19 = vst [vmem:[#allocation2 + $0x8] sm:$0xff] 0.0
    %20 = vst [vmem:[#allocation2 + $0x10] sm:$0xff] 0.0
    %21 = vst [vmem:[#allocation2 + $0x18] sm:$0xff] 0.0
    %22 = vst [vmem:[#allocation2 + $0x20] sm:$0xff] 0.0
    %23 = vst [vmem:[#allocation2 + $0x28] sm:$0xff] 0.0
    %24 = vst [vmem:[#allocation2 + $0x30] sm:$0xff] 0.0
    %25 = vst [vmem:[#allocation2 + $0x38] sm:$0xff] 0.0
    %26 = vst [vmem:[#allocation2 + $0x40] sm:$0xff] 0.0
    %27 = vst [vmem:[#allocation2 + $0x48] sm:$0xff] 0.0
    %28 = vst [vmem:[#allocation2 + $0x50] sm:$0xff] 0.0
    %29 = vst [vmem:[#allocation2 + $0x58] sm:$0xff] 0.0
    %30 = vst [vmem:[#allocation2 + $0x60] sm:$0xff] 0.0
    %31 = vst [vmem:[#allocation2 + $0x68] sm:$0xff] 0.0
    %32 = vst [vmem:[#allocation2 + $0x70] sm:$0xff] 0.0
    %33 = vst [vmem:[#allocation2 + $0x78] sm:$0xff] 0.0
    %34 = vst [vmem:[#allocation2 + $0x80] sm:$0xff] 0.0
    %35 = vst [vmem:[#allocation2 + $0x88] sm:$0xff] 0.0
    %36 = vst [vmem:[#allocation2 + $0x90] sm:$0xff] 0.0
    %37 = vst [vmem:[#allocation2 + $0x98] sm:$0xff] 0.0
    %38 = vst [vmem:[#allocation2 + $0xa0] sm:$0xff] 0.0
    %39 = vst [vmem:[#allocation2 + $0xa8] sm:$0xff] 0.0
    %40 = vst [vmem:[#allocation2 + $0xb0] sm:$0xff] 0.0
    %41 = vst [vmem:[#allocation2 + $0xb8] sm:$0xff] 0.0
  $region17: #{transformer_forward.17} parent=0 // pred_fallthru
    _
  %v42 = vld [vmem:[#allocation2] sm:$0xff]
  %v43 = vld [vmem:[#allocation2 + $0x8] sm:$0xff]
  %v44 = vld [vmem:[#allocation2 + $0x10] sm:$0xff]
  %v45 = vld [vmem:[#allocation2 + $0x18] sm:$0xff]
  %v46 = vld [vmem:[#allocation2 + $0x20] sm:$0xff]
  %v47 = vld [vmem:[#allocation2 + $0x28] sm:$0xff]
  %v48 = vld [vmem:[#allocation2 + $0x30] sm:$0xff]
  %v49 = vld [vmem:[#allocation2 + $0x38] sm:$0xff]
  %v50 = vld [vmem:[#allocation2 + $0x40] sm:$0xff]
  %v51 = vld [vmem:[#allocation2 + $0x48] sm:$0xff]
  %v52 = vld [vmem:[#allocation2 + $0x50] sm:$0xff]
  %v53 = vld [vmem:[#allocation2 + $0x58] sm:$0xff]
  %v54 = vld [vmem:[#allocation2 + $0x60] sm:$0xff]
  %v55 = vld [vmem:[#allocation2 + $0x68] sm:$0xff]
  %v56 = vld [vmem:[#allocation2 + $0x70] sm:$0xff]
  %v57 = vld [vmem:[#allocation2 + $0x78] sm:$0xff]
  %v58 = vld [vmem:[#allocation2 + $0x80] sm:$0xff]
  %v59 = vld [vmem:[#allocation2 + $0x88] sm:$0xff]
  %v60 = vld [vmem:[#allocation2 + $0x90] sm:$0xff]
  %v61 = vld [vmem:[#allocation2 + $0x98] sm:$0xff]
  %v62 = vld [vmem:[#allocation2 + $0xa0] sm:$0xff]
  %v63 = vld [vmem:[#allocation2 + $0xa8] sm:$0xff]
  %v64 = vld [vmem:[#allocation2 + $0xb0] sm:$0xff]
  %v65 = vld [vmem:[#allocation2 + $0xb8] sm:$0xff]
  %v66 = vld [vmem:[%s0] sm:$0xff]
  %v67 = vld [vmem:[%s0 + $0x8] sm:$0xff]
  %v68 = vld [vmem:[%s0 + $0x10] sm:$0xff]
  %v69 = vld [vmem:[%s0 + $0x18] sm:$0xff]
  %v70 = vld [vmem:[%s1] sm:$0xff]
  %v71 = vld [vmem:[%s1 + $0x8] sm:$0xff]
  %v72 = vld [vmem:[%s1 + $0x10] sm:$0xff]
  %v73 = vld [vmem:[%s1 + $0x18] sm:$0xff]
  %v74 = vld [vmem:[%s1 + $0x20] sm:$0xff]
  %v75 = vld [vmem:[%s1 + $0x28] sm:$0xff]
  %v76 = vld [vmem:[%s1 + $0x30] sm:$0xff]
  %v77 = vld [vmem:[%s1 + $0x38] sm:$0xff]
  %v78 = vld [vmem:[%s1 + $0x40] sm:$0xff]
  %v79 = vld [vmem:[%s1 + $0x48] sm:$0xff]
  %v80 = vld [vmem:[%s1 + $0x50] sm:$0xff]
  %v81 = vld [vmem:[%s1 + $0x58] sm:$0xff]
  %v82 = vld [vmem:[%s1 + $0x60] sm:$0xff]
  %v83 = vld [vmem:[%s1 + $0x68] sm:$0xff]
  %v84 = vld [vmem:[%s1 + $0x70] sm:$0xff]
  %v85 = vld [vmem:[%s1 + $0x78] sm:$0xff]
  %v86 = vld [vmem:[%s1 + $0x80] sm:$0xff]
  %v87 = vld [vmem:[%s1 + $0x88] sm:$0xff]
  %v88 = vld [vmem:[%s1 + $0x90] sm:$0xff]
  %v89 = vld [vmem:[%s1 + $0x98] sm:$0xff]
  %v90 = vld [vmem:[%s1 + $0xa0] sm:$0xff]
  %v91 = vld [vmem:[%s1 + $0xa8] sm:$0xff]
  %v92 = vld [vmem:[%s1 + $0xb0] sm:$0xff]
  %v93 = vld [vmem:[%s1 + $0xb8] sm:$0xff]
  %v94 = vld [vmem:[%s1 + $0xc0] sm:$0xff]
  %v95 = vld [vmem:[%s1 + $0xc8] sm:$0xff]
  %v96 = vld [vmem:[%s1 + $0xd0] sm:$0xff]
  %v97 = vld [vmem:[%s1 + $0xd8] sm:$0xff]
  %v98 = vld [vmem:[%s1 + $0xe0] sm:$0xff]
  %v99 = vld [vmem:[%s1 + $0xe8] sm:$0xff]
  %v100 = vld [vmem:[%s1 + $0xf0] sm:$0xff]
  %v101 = vld [vmem:[%s1 + $0xf8] sm:$0xff]
  %v102 = vld [vmem:[%s1 + $0x100] sm:$0xff]
  %v103 = vld [vmem:[%s1 + $0x108] sm:$0xff]
  %v104 = vld [vmem:[%s1 + $0x110] sm:$0xff]
  %v105 = vld [vmem:[%s1 + $0x118] sm:$0xff]
  %v106 = vld [vmem:[%s1 + $0x120] sm:$0xff]
  %v107 = vld [vmem:[%s1 + $0x128] sm:$0xff]
  %v108 = vld [vmem:[%s1 + $0x130] sm:$0xff]
  %v109 = vld [vmem:[%s1 + $0x138] sm:$0xff]
  %v110 = vld [vmem:[%s1 + $0x140] sm:$0xff]
  %v111 = vld [vmem:[%s1 + $0x148] sm:$0xff]
  %v112 = vld [vmem:[%s1 + $0x150] sm:$0xff]
  %v113 = vld [vmem:[%s1 + $0x158] sm:$0xff]
  %v114 = vld [vmem:[%s1 + $0x160] sm:$0xff]
  %v115 = vld [vmem:[%s1 + $0x168] sm:$0xff]
  %v116 = vld [vmem:[%s1 + $0x170] sm:$0xff]
  %v117 = vld [vmem:[%s1 + $0x178] sm:$0xff]
  %v118 = vld [vmem:[%s1 + $0x180] sm:$0xff]
  %v119 = vld [vmem:[%s1 + $0x188] sm:$0xff]
  %v120 = vld [vmem:[%s1 + $0x190] sm:$0xff]
  %v121 = vld [vmem:[%s1 + $0x198] sm:$0xff]
  %v122 = vld [vmem:[%s1 + $0x1a0] sm:$0xff]
  %v123 = vld [vmem:[%s1 + $0x1a8] sm:$0xff]
  %v124 = vld [vmem:[%s1 + $0x1b0] sm:$0xff]
  %v125 = vld [vmem:[%s1 + $0x1b8] sm:$0xff]
  %v126 = vld [vmem:[%s1 + $0x1c0] sm:$0xff]
  %v127 = vld [vmem:[%s1 + $0x1c8] sm:$0xff]
  %v128 = vld [vmem:[%s1 + $0x1d0] sm:$0xff]
  %v129 = vld [vmem:[%s1 + $0x1d8] sm:$0xff]
  %v130 = vld [vmem:[%s1 + $0x1e0] sm:$0xff]
  %v131 = vld [vmem:[%s1 + $0x1e8] sm:$0xff]
  %v132 = vld [vmem:[%s1 + $0x1f0] sm:$0xff]
  %v133 = vld [vmem:[%s1 + $0x1f8] sm:$0xff]
  %v134 = vld [vmem:[%s1 + $0x200] sm:$0xff]
  %v135 = vld [vmem:[%s1 + $0x208] sm:$0xff]
  %v136 = vld [vmem:[%s1 + $0x210] sm:$0xff]
  %v137 = vld [vmem:[%s1 + $0x218] sm:$0xff]
  %v138 = vld [vmem:[%s1 + $0x220] sm:$0xff]
  %v139 = vld [vmem:[%s1 + $0x228] sm:$0xff]
  %v140 = vld [vmem:[%s1 + $0x230] sm:$0xff]
  %v141 = vld [vmem:[%s1 + $0x238] sm:$0xff]
  %v142 = vld [vmem:[%s1 + $0x240] sm:$0xff]
  %v143 = vld [vmem:[%s1 + $0x248] sm:$0xff]
  %v144 = vld [vmem:[%s1 + $0x250] sm:$0xff]
  %v145 = vld [vmem:[%s1 + $0x258] sm:$0xff]
  %v146 = vld [vmem:[%s1 + $0x260] sm:$0xff]
  %v147 = vld [vmem:[%s1 + $0x268] sm:$0xff]
  %v148 = vld [vmem:[%s1 + $0x270] sm:$0xff]
  %v149 = vld [vmem:[%s1 + $0x278] sm:$0xff]
  %v150 = vld [vmem:[%s1 + $0x280] sm:$0xff]
  %v151 = vld [vmem:[%s1 + $0x288] sm:$0xff]
  %v152 = vld [vmem:[%s1 + $0x290] sm:$0xff]
  %v153 = vld [vmem:[%s1 + $0x298] sm:$0xff]
  %v154 = vld [vmem:[%s1 + $0x2a0] sm:$0xff]
  %v155 = vld [vmem:[%s1 + $0x2a8] sm:$0xff]
  %v156 = vld [vmem:[%s1 + $0x2b0] sm:$0xff]
  %v157 = vld [vmem:[%s1 + $0x2b8] sm:$0xff]
  %v158 = vld [vmem:[%s1 + $0x2c0] sm:$0xff]
  %v159 = vld [vmem:[%s1 + $0x2c8] sm:$0xff]
  %v160 = vld [vmem:[%s1 + $0x2d0] sm:$0xff]
  %v161 = vld [vmem:[%s1 + $0x2d8] sm:$0xff]
  %v162 = vld [vmem:[%s1 + $0x2e0] sm:$0xff]
  %v163 = vld [vmem:[%s1 + $0x2e8] sm:$0xff]
  %v164 = vld [vmem:[%s1 + $0x2f0] sm:$0xff]
  %v165 = vld [vmem:[%s1 + $0x2f8] sm:$0xff]
  %v170 = vunpack.c.l.b16 %v66
  %v171 = vunpack.c.h.b16 %v66
  %v172 = vunpack.c.l.b16 %v67
  %v173 = vunpack.c.h.b16 %v67
  %v174 = vunpack.c.l.b16 %v68
  %v175 = vunpack.c.h.b16 %v68
  %v176 = vunpack.c.l.b16 %v69
  %v177 = vunpack.c.h.b16 %v69
  %v178 = vpack.c.b16 %v172, %v170
  %v179 = vpack.c.b16 %v173, %v171
  %v180 = vpack.c.b16 %v176, %v174
  %v181 = vpack.c.b16 %v177, %v175
  %v282 = vunpack.c.l.b16 %v70
  %v283 = vunpack.c.h.b16 %v70
  %v284 = vunpack.c.l.b16 %v71
  %v285 = vunpack.c.h.b16 %v71
  %v286 = vunpack.c.l.b16 %v72
  %v287 = vunpack.c.h.b16 %v72
  %v288 = vunpack.c.l.b16 %v73
  %v289 = vunpack.c.h.b16 %v73
  %v290 = vunpack.c.l.b16 %v74
  %v291 = vunpack.c.h.b16 %v74
  %v292 = vunpack.c.l.b16 %v75
  %v293 = vunpack.c.h.b16 %v75
  %v294 = vunpack.c.l.b16 %v76
  %v295 = vunpack.c.h.b16 %v76
  %v296 = vunpack.c.l.b16 %v77
  %v297 = vunpack.c.h.b16 %v77
  %v298 = vunpack.c.l.b16 %v78
  %v299 = vunpack.c.h.b16 %v78
  %v300 = vunpack.c.l.b16 %v79
  %v301 = vunpack.c.h.b16 %v79
  %v302 = vunpack.c.l.b16 %v80
  %v303 = vunpack.c.h.b16 %v80
  %v304 = vunpack.c.l.b16 %v81
  %v305 = vunpack.c.h.b16 %v81
  %v306 = vunpack.c.l.b16 %v82
  %v307 = vunpack.c.h.b16 %v82
  %v308 = vunpack.c.l.b16 %v83
  %v309 = vunpack.c.h.b16 %v83
  %v310 = vunpack.c.l.b16 %v84
  %v311 = vunpack.c.h.b16 %v84
  %v312 = vunpack.c.l.b16 %v85
  %v313 = vunpack.c.h.b16 %v85
  %v314 = vunpack.c.l.b16 %v86
  %v315 = vunpack.c.h.b16 %v86
  %v316 = vunpack.c.l.b16 %v87
  %v317 = vunpack.c.h.b16 %v87
  %v318 = vunpack.c.l.b16 %v88
  %v319 = vunpack.c.h.b16 %v88
  %v320 = vunpack.c.l.b16 %v89
  %v321 = vunpack.c.h.b16 %v89
  %v322 = vunpack.c.l.b16 %v90
  %v323 = vunpack.c.h.b16 %v90
  %v324 = vunpack.c.l.b16 %v91
  %v325 = vunpack.c.h.b16 %v91
  %v326 = vunpack.c.l.b16 %v92
  %v327 = vunpack.c.h.b16 %v92
  %v328 = vunpack.c.l.b16 %v93
  %v329 = vunpack.c.h.b16 %v93
  %v330 = vunpack.c.l.b16 %v94
  %v331 = vunpack.c.h.b16 %v94
  %v332 = vunpack.c.l.b16 %v95
  %v333 = vunpack.c.h.b16 %v95
  %v334 = vunpack.c.l.b16 %v96
  %v335 = vunpack.c.h.b16 %v96
  %v336 = vunpack.c.l.b16 %v97
  %v337 = vunpack.c.h.b16 %v97
  %v338 = vunpack.c.l.b16 %v98
  %v339 = vunpack.c.h.b16 %v98
  %v340 = vunpack.c.l.b16 %v99
  %v341 = vunpack.c.h.b16 %v99
  %v342 = vunpack.c.l.b16 %v100
  %v343 = vunpack.c.h.b16 %v100
  %v344 = vunpack.c.l.b16 %v101
  %v345 = vunpack.c.h.b16 %v101
  %v346 = vunpack.c.l.b16 %v102
  %v347 = vunpack.c.h.b16 %v102
  %v348 = vunpack.c.l.b16 %v103
  %v349 = vunpack.c.h.b16 %v103
  %v350 = vunpack.c.l.b16 %v104
  %v351 = vunpack.c.h.b16 %v104
  %v352 = vunpack.c.l.b16 %v105
  %v353 = vunpack.c.h.b16 %v105
  %v354 = vunpack.c.l.b16 %v106
  %v355 = vunpack.c.h.b16 %v106
  %v356 = vunpack.c.l.b16 %v107
  %v357 = vunpack.c.h.b16 %v107
  %v358 = vunpack.c.l.b16 %v108
  %v359 = vunpack.c.h.b16 %v108
  %v360 = vunpack.c.l.b16 %v109
  %v361 = vunpack.c.h.b16 %v109
  %v362 = vunpack.c.l.b16 %v110
  %v363 = vunpack.c.h.b16 %v110
  %v364 = vunpack.c.l.b16 %v111
  %v365 = vunpack.c.h.b16 %v111
  %v366 = vunpack.c.l.b16 %v112
  %v367 = vunpack.c.h.b16 %v112
  %v368 = vunpack.c.l.b16 %v113
  %v369 = vunpack.c.h.b16 %v113
  %v370 = vunpack.c.l.b16 %v114
  %v371 = vunpack.c.h.b16 %v114
  %v372 = vunpack.c.l.b16 %v115
  %v373 = vunpack.c.h.b16 %v115
  %v374 = vunpack.c.l.b16 %v116
  %v375 = vunpack.c.h.b16 %v116
  %v376 = vunpack.c.l.b16 %v117
  %v377 = vunpack.c.h.b16 %v117
  %v378 = vunpack.c.l.b16 %v118
  %v379 = vunpack.c.h.b16 %v118
  %v380 = vunpack.c.l.b16 %v119
  %v381 = vunpack.c.h.b16 %v119
  %v382 = vunpack.c.l.b16 %v120
  %v383 = vunpack.c.h.b16 %v120
  %v384 = vunpack.c.l.b16 %v121
  %v385 = vunpack.c.h.b16 %v121
  %v386 = vunpack.c.l.b16 %v122
  %v387 = vunpack.c.h.b16 %v122
  %v388 = vunpack.c.l.b16 %v123
  %v389 = vunpack.c.h.b16 %v123
  %v390 = vunpack.c.l.b16 %v124
  %v391 = vunpack.c.h.b16 %v124
  %v392 = vunpack.c.l.b16 %v125
  %v393 = vunpack.c.h.b16 %v125
  %v394 = vunpack.c.l.b16 %v126
  %v395 = vunpack.c.h.b16 %v126
  %v396 = vunpack.c.l.b16 %v127
  %v397 = vunpack.c.h.b16 %v127
  %v398 = vunpack.c.l.b16 %v128
  %v399 = vunpack.c.h.b16 %v128
  %v400 = vunpack.c.l.b16 %v129
  %v401 = vunpack.c.h.b16 %v129
  %v402 = vunpack.c.l.b16 %v130
  %v403 = vunpack.c.h.b16 %v130
  %v404 = vunpack.c.l.b16 %v131
  %v405 = vunpack.c.h.b16 %v131
  %v406 = vunpack.c.l.b16 %v132
  %v407 = vunpack.c.h.b16 %v132
  %v408 = vunpack.c.l.b16 %v133
  %v409 = vunpack.c.h.b16 %v133
  %v410 = vunpack.c.l.b16 %v134
  %v411 = vunpack.c.h.b16 %v134
  %v412 = vunpack.c.l.b16 %v135
  %v413 = vunpack.c.h.b16 %v135
  %v414 = vunpack.c.l.b16 %v136
  %v415 = vunpack.c.h.b16 %v136
  %v416 = vunpack.c.l.b16 %v137
  %v417 = vunpack.c.h.b16 %v137
  %v418 = vunpack.c.l.b16 %v138
  %v419 = vunpack.c.h.b16 %v138
  %v420 = vunpack.c.l.b16 %v139
  %v421 = vunpack.c.h.b16 %v139
  %v422 = vunpack.c.l.b16 %v140
  %v423 = vunpack.c.h.b16 %v140
  %v424 = vunpack.c.l.b16 %v141
  %v425 = vunpack.c.h.b16 %v141
  %v426 = vunpack.c.l.b16 %v142
  %v427 = vunpack.c.h.b16 %v142
  %v428 = vunpack.c.l.b16 %v143
  %v429 = vunpack.c.h.b16 %v143
  %v430 = vunpack.c.l.b16 %v144
  %v431 = vunpack.c.h.b16 %v144
  %v432 = vunpack.c.l.b16 %v145
  %v433 = vunpack.c.h.b16 %v145
  %v434 = vunpack.c.l.b16 %v146
  %v435 = vunpack.c.h.b16 %v146
  %v436 = vunpack.c.l.b16 %v147
  %v437 = vunpack.c.h.b16 %v147
  %v438 = vunpack.c.l.b16 %v148
  %v439 = vunpack.c.h.b16 %v148
  %v440 = vunpack.c.l.b16 %v149
  %v441 = vunpack.c.h.b16 %v149
  %v442 = vunpack.c.l.b16 %v150
  %v443 = vunpack.c.h.b16 %v150
  %v444 = vunpack.c.l.b16 %v151
  %v445 = vunpack.c.h.b16 %v151
  %v446 = vunpack.c.l.b16 %v152
  %v447 = vunpack.c.h.b16 %v152
  %v448 = vunpack.c.l.b16 %v153
  %v449 = vunpack.c.h.b16 %v153
  %v450 = vunpack.c.l.b16 %v154
  %v451 = vunpack.c.h.b16 %v154
  %v452 = vunpack.c.l.b16 %v155
  %v453 = vunpack.c.h.b16 %v155
  %v454 = vunpack.c.l.b16 %v156
  %v455 = vunpack.c.h.b16 %v156
  %v456 = vunpack.c.l.b16 %v157
  %v457 = vunpack.c.h.b16 %v157
  %v458 = vunpack.c.l.b16 %v158
  %v459 = vunpack.c.h.b16 %v158
  %v460 = vunpack.c.l.b16 %v159
  %v461 = vunpack.c.h.b16 %v159
  %v462 = vunpack.c.l.b16 %v160
  %v463 = vunpack.c.h.b16 %v160
  %v464 = vunpack.c.l.b16 %v161
  %v465 = vunpack.c.h.b16 %v161
  %v466 = vunpack.c.l.b16 %v162
  %v467 = vunpack.c.h.b16 %v162
  %v468 = vunpack.c.l.b16 %v163
  %v469 = vunpack.c.h.b16 %v163
  %v470 = vunpack.c.l.b16 %v164
  %v471 = vunpack.c.h.b16 %v164
  %v472 = vunpack.c.l.b16 %v165
  %v473 = vunpack.c.h.b16 %v165
  %v474 = vpack.c.b16 %v288, %v282
  %v475 = vpack.c.b16 %v289, %v283
  %v476 = vpack.c.b16 %v290, %v284
  %v477 = vpack.c.b16 %v291, %v285
  %v478 = vpack.c.b16 %v292, %v286
  %v479 = vpack.c.b16 %v293, %v287
  %v480 = vpack.c.b16 %v300, %v294
  %v481 = vpack.c.b16 %v301, %v295
  %v482 = vpack.c.b16 %v302, %v296
  %v483 = vpack.c.b16 %v303, %v297
  %v484 = vpack.c.b16 %v304, %v298
  %v485 = vpack.c.b16 %v305, %v299
  %v486 = vpack.c.b16 %v312, %v306
  %v487 = vpack.c.b16 %v313, %v307
  %v488 = vpack.c.b16 %v314, %v308
  %v489 = vpack.c.b16 %v315, %v309
  %v490 = vpack.c.b16 %v316, %v310
  %v491 = vpack.c.b16 %v317, %v311
  %v492 = vpack.c.b16 %v324, %v318
  %v493 = vpack.c.b16 %v325, %v319
  %v494 = vpack.c.b16 %v326, %v320
  %v495 = vpack.c.b16 %v327, %v321
  %v496 = vpack.c.b16 %v328, %v322
  %v497 = vpack.c.b16 %v329, %v323
  %v498 = vpack.c.b16 %v336, %v330
  %v499 = vpack.c.b16 %v337, %v331
  %v500 = vpack.c.b16 %v338, %v332
  %v501 = vpack.c.b16 %v339, %v333
  %v502 = vpack.c.b16 %v340, %v334
  %v503 = vpack.c.b16 %v341, %v335
  %v504 = vpack.c.b16 %v348, %v342
  %v505 = vpack.c.b16 %v349, %v343
  %v506 = vpack.c.b16 %v350, %v344
  %v507 = vpack.c.b16 %v351, %v345
  %v508 = vpack.c.b16 %v352, %v346
  %v509 = vpack.c.b16 %v353, %v347
  %v510 = vpack.c.b16 %v360, %v354
  %v511 = vpack.c.b16 %v361, %v355
  %v512 = vpack.c.b16 %v362, %v356
  %v513 = vpack.c.b16 %v363, %v357
  %v514 = vpack.c.b16 %v364, %v358
  %v515 = vpack.c.b16 %v365, %v359
  %v516 = vpack.c.b16 %v372, %v366
  %v517 = vpack.c.b16 %v373, %v367
  %v518 = vpack.c.b16 %v374, %v368
  %v519 = vpack.c.b16 %v375, %v369
  %v520 = vpack.c.b16 %v376, %v370
  %v521 = vpack.c.b16 %v377, %v371
  %v522 = vpack.c.b16 %v384, %v378
  %v523 = vpack.c.b16 %v385, %v379
  %v524 = vpack.c.b16 %v386, %v380
  %v525 = vpack.c.b16 %v387, %v381
  %v526 = vpack.c.b16 %v388, %v382
  %v527 = vpack.c.b16 %v389, %v383
  %v528 = vpack.c.b16 %v396, %v390
  %v529 = vpack.c.b16 %v397, %v391
  %v530 = vpack.c.b16 %v398, %v392
  %v531 = vpack.c.b16 %v399, %v393
  %v532 = vpack.c.b16 %v400, %v394
  %v533 = vpack.c.b16 %v401, %v395
  %v534 = vpack.c.b16 %v408, %v402
  %v535 = vpack.c.b16 %v409, %v403
  %v536 = vpack.c.b16 %v410, %v404
  %v537 = vpack.c.b16 %v411, %v405
  %v538 = vpack.c.b16 %v412, %v406
  %v539 = vpack.c.b16 %v413, %v407
  %v540 = vpack.c.b16 %v420, %v414
  %v541 = vpack.c.b16 %v421, %v415
  %v542 = vpack.c.b16 %v422, %v416
  %v543 = vpack.c.b16 %v423, %v417
  %v544 = vpack.c.b16 %v424, %v418
  %v545 = vpack.c.b16 %v425, %v419
  %v546 = vpack.c.b16 %v432, %v426
  %v547 = vpack.c.b16 %v433, %v427
  %v548 = vpack.c.b16 %v434, %v428
  %v549 = vpack.c.b16 %v435, %v429
  %v550 = vpack.c.b16 %v436, %v430
  %v551 = vpack.c.b16 %v437, %v431
  %v552 = vpack.c.b16 %v444, %v438
  %v553 = vpack.c.b16 %v445, %v439
  %v554 = vpack.c.b16 %v446, %v440
  %v555 = vpack.c.b16 %v447, %v441
  %v556 = vpack.c.b16 %v448, %v442
  %v557 = vpack.c.b16 %v449, %v443
  %v558 = vpack.c.b16 %v456, %v450
  %v559 = vpack.c.b16 %v457, %v451
  %v560 = vpack.c.b16 %v458, %v452
  %v561 = vpack.c.b16 %v459, %v453
  %v562 = vpack.c.b16 %v460, %v454
  %v563 = vpack.c.b16 %v461, %v455
  %v564 = vpack.c.b16 %v468, %v462
  %v565 = vpack.c.b16 %v469, %v463
  %v566 = vpack.c.b16 %v470, %v464
  %v567 = vpack.c.b16 %v471, %v465
  %v568 = vpack.c.b16 %v472, %v466
  %v569 = vpack.c.b16 %v473, %v467
  %666 = vmatprep.subr.bf16.mxu0 %v475
  %667 = vmatpush1.bf16.msra.mxu0 %v474
  %668 = vmatprep.subr.bf16.mxu0 %v481
  %669 = vmatpush1.bf16.msra.mxu0 %v480
  %670 = vmatprep.subr.bf16.mxu0 %v487
  %671 = vmatpush1.bf16.msra.mxu0 %v486
  %672 = vmatprep.subr.bf16.mxu0 %v493
  %673 = vmatpush1.bf16.msra.mxu0 %v492
  %674 = vmatprep.subr.bf16.mxu0 %v499
  %675 = vmatpush1.bf16.msra.mxu0 %v498
  %676 = vmatprep.subr.bf16.mxu0 %v505
  %677 = vmatpush1.bf16.msra.mxu0 %v504
  %678 = vmatprep.subr.bf16.mxu0 %v511
  %679 = vmatpush1.bf16.msra.mxu0 %v510
  %680 = vmatprep.subr.bf16.mxu0 %v517
  %681 = vmatpush1.bf16.msra.mxu0 %v516
  %682 = vmatprep.subr.bf16.mxu0 %v523
  %683 = vmatpush1.bf16.msra.mxu0 %v522
  %684 = vmatprep.subr.bf16.mxu0 %v529
  %685 = vmatpush1.bf16.msra.mxu0 %v528
  %686 = vmatprep.subr.bf16.mxu0 %v535
  %687 = vmatpush1.bf16.msra.mxu0 %v534
  %688 = vmatprep.subr.bf16.mxu0 %v541
  %689 = vmatpush1.bf16.msra.mxu0 %v540
  %690 = vmatprep.subr.bf16.mxu0 %v547
  %691 = vmatpush1.bf16.msra.mxu0 %v546
  %692 = vmatprep.subr.bf16.mxu0 %v553
  %693 = vmatpush1.bf16.msra.mxu0 %v552
  %694 = vmatprep.subr.bf16.mxu0 %v559
  %695 = vmatpush1.bf16.msra.mxu0 %v558
  %696 = vmatprep.subr.bf16.mxu0 %v565
  %697 = vmatpush1.bf16.msra.mxu0 %v564
  %698 = vmatprep.mubr.bf16.mxu0 %v179
  %699 = vmatmul.mubr.bf16.gmra.mrb[0].mxu0 %v178
  %v700 = vpop.f32.mrb[0].mxu0
  %v701 = vadd.f32 0.0, %v700
  %v702 = vpop.f32.mrb[0].mxu0
  %v703 = vadd.f32 0.0, %v702
  %v704 = vpop.f32.mrb[0].mxu0
  %v705 = vadd.f32 0.0, %v704
  %v706 = vpop.f32.mrb[0].mxu0
  %v707 = vadd.f32 0.0, %v706
  %708 = vmatprep.mubr.bf16.mxu0 %v181
  %709 = vmatmul.mubr.bf16.gmra.mrb[0].mxu0 %v180
  %v710 = vpop.f32.mrb[0].mxu0
  %v711 = vadd.f32 0.0, %v710
  %v712 = vpop.f32.mrb[0].mxu0
  %v713 = vadd.f32 0.0, %v712
  %v714 = vpop.f32.mrb[0].mxu0
  %v715 = vadd.f32 0.0, %v714
  %v716 = vpop.f32.mrb[0].mxu0
  %v717 = vadd.f32 0.0, %v716
  %718 = vdwg.mxu0
  %719 = vmatprep.subr.bf16.mxu0 %v477
  %720 = vmatpush1.bf16.msra.mxu0 %v476
  %721 = vmatprep.subr.bf16.mxu0 %v483
  %722 = vmatpush1.bf16.msra.mxu0 %v482
  %723 = vmatprep.subr.bf16.mxu0 %v489
  %724 = vmatpush1.bf16.msra.mxu0 %v488
  %725 = vmatprep.subr.bf16.mxu0 %v495
  %726 = vmatpush1.bf16.msra.mxu0 %v494
  %727 = vmatprep.subr.bf16.mxu0 %v501
  %728 = vmatpush1.bf16.msra.mxu0 %v500
  %729 = vmatprep.subr.bf16.mxu0 %v507
  %730 = vmatpush1.bf16.msra.mxu0 %v506
  %731 = vmatprep.subr.bf16.mxu0 %v513
  %732 = vmatpush1.bf16.msra.mxu0 %v512
  %733 = vmatprep.subr.bf16.mxu0 %v519
  %734 = vmatpush1.bf16.msra.mxu0 %v518
  %735 = vmatprep.subr.bf16.mxu0 %v525
  %736 = vmatpush1.bf16.msra.mxu0 %v524
  %737 = vmatprep.subr.bf16.mxu0 %v531
  %738 = vmatpush1.bf16.msra.mxu0 %v530
  %739 = vmatprep.subr.bf16.mxu0 %v537
  %740 = vmatpush1.bf16.msra.mxu0 %v536
  %741 = vmatprep.subr.bf16.mxu0 %v543
  %742 = vmatpush1.bf16.msra.mxu0 %v542
  %743 = vmatprep.subr.bf16.mxu0 %v549
  %744 = vmatpush1.bf16.msra.mxu0 %v548
  %745 = vmatprep.subr.bf16.mxu0 %v555
  %746 = vmatpush1.bf16.msra.mxu0 %v554
  %747 = vmatprep.subr.bf16.mxu0 %v561
  %748 = vmatpush1.bf16.msra.mxu0 %v560
  %749 = vmatprep.subr.bf16.mxu0 %v567
  %750 = vmatpush1.bf16.msra.mxu0 %v566
  %751 = vmatprep.mubr.bf16.mxu0 %v179
  %752 = vmatmul.mubr.bf16.gmra.mrb[0].mxu0 %v178
  %v753 = vpop.f32.mrb[0].mxu0
  %v754 = vadd.f32 0.0, %v753
  %v755 = vpop.f32.mrb[0].mxu0
  %v756 = vadd.f32 0.0, %v755
  %v757 = vpop.f32.mrb[0].mxu0
  %v758 = vadd.f32 0.0, %v757
  %v759 = vpop.f32.mrb[0].mxu0
  %v760 = vadd.f32 0.0, %v759
  %761 = vmatprep.mubr.bf16.mxu0 %v181
  %762 = vmatmul.mubr.bf16.gmra.mrb[0].mxu0 %v180
  %v763 = vpop.f32.mrb[0].mxu0
  %v764 = vadd.f32 0.0, %v763
  %v765 = vpop.f32.mrb[0].mxu0
  %v766 = vadd.f32 0.0, %v765
  %v767 = vpop.f32.mrb[0].mxu0
  %v768 = vadd.f32 0.0, %v767
  %v769 = vpop.f32.mrb[0].mxu0
  %v770 = vadd.f32 0.0, %v769
  %771 = vdwg.mxu0
  %772 = vmatprep.subr.bf16.mxu0 %v479
  %773 = vmatpush1.bf16.msra.mxu0 %v478
  %774 = vmatprep.subr.bf16.mxu0 %v485
  %775 = vmatpush1.bf16.msra.mxu0 %v484
  %776 = vmatprep.subr.bf16.mxu0 %v491
  %777 = vmatpush1.bf16.msra.mxu0 %v490
  %778 = vmatprep.subr.bf16.mxu0 %v497
  %779 = vmatpush1.bf16.msra.mxu0 %v496
  %780 = vmatprep.subr.bf16.mxu0 %v503
  %781 = vmatpush1.bf16.msra.mxu0 %v502
  %782 = vmatprep.subr.bf16.mxu0 %v509
  %783 = vmatpush1.bf16.msra.mxu0 %v508
  %784 = vmatprep.subr.bf16.mxu0 %v515
  %785 = vmatpush1.bf16.msra.mxu0 %v514
  %786 = vmatprep.subr.bf16.mxu0 %v521
  %787 = vmatpush1.bf16.msra.mxu0 %v520
  %788 = vmatprep.subr.bf16.mxu0 %v527
  %789 = vmatpush1.bf16.msra.mxu0 %v526
  %790 = vmatprep.subr.bf16.mxu0 %v533
  %791 = vmatpush1.bf16.msra.mxu0 %v532
  %792 = vmatprep.subr.bf16.mxu0 %v539
  %793 = vmatpush1.bf16.msra.mxu0 %v538
  %794 = vmatprep.subr.bf16.mxu0 %v545
  %795 = vmatpush1.bf16.msra.mxu0 %v544
  %796 = vmatprep.subr.bf16.mxu0 %v551
  %797 = vmatpush1.bf16.msra.mxu0 %v550
  %798 = vmatprep.subr.bf16.mxu0 %v557
  %799 = vmatpush1.bf16.msra.mxu0 %v556
  %800 = vmatprep.subr.bf16.mxu0 %v563
  %801 = vmatpush1.bf16.msra.mxu0 %v562
  %802 = vmatprep.subr.bf16.mxu0 %v569
  %803 = vmatpush1.bf16.msra.mxu0 %v568
  %804 = vmatprep.mubr.bf16.mxu0 %v179
  %805 = vmatmul.mubr.bf16.gmra.mrb[0].mxu0 %v178
  %v806 = vpop.f32.mrb[0].mxu0
  %v807 = vadd.f32 0.0, %v806
  %v808 = vpop.f32.mrb[0].mxu0
  %v809 = vadd.f32 0.0, %v808
  %v810 = vpop.f32.mrb[0].mxu0
  %v811 = vadd.f32 0.0, %v810
  %v812 = vpop.f32.mrb[0].mxu0
  %v813 = vadd.f32 0.0, %v812
  %814 = vmatprep.mubr.bf16.mxu0 %v181
  %815 = vmatmul.mubr.bf16.gmra.mrb[0].mxu0 %v180
  %v816 = vpop.f32.mrb[0].mxu0
  %v817 = vadd.f32 0.0, %v816
  %v818 = vpop.f32.mrb[0].mxu0
  %v819 = vadd.f32 0.0, %v818
  %v820 = vpop.f32.mrb[0].mxu0
  %v821 = vadd.f32 0.0, %v820
  %v822 = vpop.f32.mrb[0].mxu0
  %v823 = vadd.f32 0.0, %v822
  %824 = vdwg.mxu0
  %v825 = vadd.f32 %v42, %v701
  %v826 = vadd.f32 %v43, %v703
  %v827 = vadd.f32 %v44, %v754
  %v828 = vadd.f32 %v45, %v756
  %v829 = vadd.f32 %v46, %v807
  %v830 = vadd.f32 %v47, %v809
  %v831 = vadd.f32 %v48, %v705
  %v832 = vadd.f32 %v49, %v707
  %v833 = vadd.f32 %v50, %v758
  %v834 = vadd.f32 %v51, %v760
  %v835 = vadd.f32 %v52, %v811
  %v836 = vadd.f32 %v53, %v813
  %v837 = vadd.f32 %v54, %v711
  %v838 = vadd.f32 %v55, %v713
  %v839 = vadd.f32 %v56, %v764
  %v840 = vadd.f32 %v57, %v766
  %v841 = vadd.f32 %v58, %v817
  %v842 = vadd.f32 %v59, %v819
  %v843 = vadd.f32 %v60, %v715
  %v844 = vadd.f32 %v61, %v717
  %v845 = vadd.f32 %v62, %v768
  %v846 = vadd.f32 %v63, %v770
  %v847 = vadd.f32 %v64, %v821
  %v848 = vadd.f32 %v65, %v823
  %849 = vst [vmem:[#allocation2] sm:$0xff] %v825
  %850 = vst [vmem:[#allocation2 + $0x8] sm:$0xff] %v826
  %851 = vst [vmem:[#allocation2 + $0x10] sm:$0xff] %v827
  %852 = vst [vmem:[#allocation2 + $0x18] sm:$0xff] %v828
  %853 = vst [vmem:[#allocation2 + $0x20] sm:$0xff] %v829
  %854 = vst [vmem:[#allocation2 + $0x28] sm:$0xff] %v830
  %855 = vst [vmem:[#allocation2 + $0x30] sm:$0xff] %v831
  %856 = vst [vmem:[#allocation2 + $0x38] sm:$0xff] %v832
  %857 = vst [vmem:[#allocation2 + $0x40] sm:$0xff] %v833
  %858 = vst [vmem:[#allocation2 + $0x48] sm:$0xff] %v834
  %859 = vst [vmem:[#allocation2 + $0x50] sm:$0xff] %v835
  %860 = vst [vmem:[#allocation2 + $0x58] sm:$0xff] %v836
  %861 = vst [vmem:[#allocation2 + $0x60] sm:$0xff] %v837
  %862 = vst [vmem:[#allocation2 + $0x68] sm:$0xff] %v838
  %863 = vst [vmem:[#allocation2 + $0x70] sm:$0xff] %v839
  %864 = vst [vmem:[#allocation2 + $0x78] sm:$0xff] %v840
  %865 = vst [vmem:[#allocation2 + $0x80] sm:$0xff] %v841
  %866 = vst [vmem:[#allocation2 + $0x88] sm:$0xff] %v842
  %867 = vst [vmem:[#allocation2 + $0x90] sm:$0xff] %v843
  %868 = vst [vmem:[#allocation2 + $0x98] sm:$0xff] %v844
  %869 = vst [vmem:[#allocation2 + $0xa0] sm:$0xff] %v845
  %870 = vst [vmem:[#allocation2 + $0xa8] sm:$0xff] %v846
  %871 = vst [vmem:[#allocation2 + $0xb0] sm:$0xff] %v847
  %872 = vst [vmem:[#allocation2 + $0xb8] sm:$0xff] %v848
  // Predicated region
  $region18: #{transformer_forward.17} parent=0 // pred_check
    %p873 = pneg %p14
  $region19: #{transformer_forward.17} parent=0 // pred_check_branch
    %875 = sbr.rel (%p873) target = $region21
  $region20: #{transformer_forward.17} parent=0 // pred_region
    %v876 = vld [vmem:[#allocation2] sm:$0xff]
    %v877 = vld [vmem:[#allocation2 + $0x8] sm:$0xff]
    %v878 = vld [vmem:[#allocation2 + $0x10] sm:$0xff]
    %v879 = vld [vmem:[#allocation2 + $0x18] sm:$0xff]
    %v880 = vld [vmem:[#allocation2 + $0x20] sm:$0xff]
    %v881 = vld [vmem:[#allocation2 + $0x28] sm:$0xff]
    %v882 = vld [vmem:[#allocation2 + $0x30] sm:$0xff]
    %v883 = vld [vmem:[#allocation2 + $0x38] sm:$0xff]
    %v884 = vld [vmem:[#allocation2 + $0x40] sm:$0xff]
    %v885 = vld [vmem:[#allocation2 + $0x48] sm:$0xff]
    %v886 = vld [vmem:[#allocation2 + $0x50] sm:$0xff]
    %v887 = vld [vmem:[#allocation2 + $0x58] sm:$0xff]
    %v888 = vld [vmem:[#allocation2 + $0x60] sm:$0xff]
    %v889 = vld [vmem:[#allocation2 + $0x68] sm:$0xff]
    %v890 = vld [vmem:[#allocation2 + $0x70] sm:$0xff]
    %v891 = vld [vmem:[#allocation2 + $0x78] sm:$0xff]
    %v892 = vld [vmem:[#allocation2 + $0x80] sm:$0xff]
    %v893 = vld [vmem:[#allocation2 + $0x88] sm:$0xff]
    %v894 = vld [vmem:[#allocation2 + $0x90] sm:$0xff]
    %v895 = vld [vmem:[#allocation2 + $0x98] sm:$0xff]
    %v896 = vld [vmem:[#allocation2 + $0xa0] sm:$0xff]
    %v897 = vld [vmem:[#allocation2 + $0xa8] sm:$0xff]
    %v898 = vld [vmem:[#allocation2 + $0xb0] sm:$0xff]
    %v899 = vld [vmem:[#allocation2 + $0xb8] sm:$0xff]
    %v900 = vld [vmem:[%s2] sm:$0x3f]
    %v902 = vlaneseq
    %v903 = vshrl.u32 %v902, 7
    %v904 = vsub.s32 0, %v903
    %v905 = vrot.slane %v900, %v904
    %v906 = vlaneseq
    %v907 = vshrl.u32 %v906, 7
    %v908 = vsub.s32 1, %v907
    %v909 = vrot.slane %v900, %v908
    %v910 = vlaneseq
    %v911 = vshrl.u32 %v910, 7
    %v912 = vsub.s32 2, %v911
    %v913 = vrot.slane %v900, %v912
    %v914 = vlaneseq
    %v915 = vshrl.u32 %v914, 7
    %v916 = vsub.s32 3, %v915
    %v917 = vrot.slane %v900, %v916
    %v918 = vlaneseq
    %v919 = vshrl.u32 %v918, 7
    %v920 = vsub.s32 4, %v919
    %v921 = vrot.slane %v900, %v920
    %v922 = vlaneseq
    %v923 = vshrl.u32 %v922, 7
    %v924 = vsub.s32 5, %v923
    %v925 = vrot.slane %v900, %v924
    %v932 = vadd.f32 %v876, %v905
    %v933 = vadd.f32 %v877, %v909
    %v934 = vadd.f32 %v878, %v913
    %v935 = vadd.f32 %v879, %v917
    %v936 = vadd.f32 %v880, %v921
    %v937 = vadd.f32 %v881, %v925
    %v938 = vadd.f32 %v882, %v905
    %v939 = vadd.f32 %v883, %v909
    %v940 = vadd.f32 %v884, %v913
    %v941 = vadd.f32 %v885, %v917
    %v942 = vadd.f32 %v886, %v921
    %v943 = vadd.f32 %v887, %v925
    %v944 = vadd.f32 %v888, %v905
    %v945 = vadd.f32 %v889, %v909
    %v946 = vadd.f32 %v890, %v913
    %v947 = vadd.f32 %v891, %v917
    %v948 = vadd.f32 %v892, %v921
    %v949 = vadd.f32 %v893, %v925
    %v950 = vadd.f32 %v894, %v905
    %v951 = vadd.f32 %v895, %v909
    %v952 = vadd.f32 %v896, %v913
    %v953 = vadd.f32 %v897, %v917
    %v954 = vadd.f32 %v898, %v921
    %v955 = vadd.f32 %v899, %v925
    %v956 = vpack.c.bf16 %v938, %v932
    %v957 = vpack.c.bf16 %v939, %v933
    %v958 = vpack.c.bf16 %v940, %v934
    %v959 = vpack.c.bf16 %v941, %v935
    %v960 = vpack.c.bf16 %v942, %v936
    %v961 = vpack.c.bf16 %v943, %v937
    %v962 = vpack.c.bf16 %v950, %v944
    %v963 = vpack.c.bf16 %v951, %v945
    %v964 = vpack.c.bf16 %v952, %v946
    %v965 = vpack.c.bf16 %v953, %v947
    %v966 = vpack.c.bf16 %v954, %v948
    %v967 = vpack.c.bf16 %v955, %v949
    %v980 = vunpack.c.l.b16 %v956
    %v981 = vunpack.c.l.b16 %v957
    %v982 = vunpack.c.l.b16 %v958
    %v983 = vunpack.c.l.b16 %v959
    %v984 = vunpack.c.l.b16 %v960
    %v985 = vunpack.c.l.b16 %v961
    %v986 = vunpack.c.h.b16 %v956
    %v987 = vunpack.c.h.b16 %v957
    %v988 = vunpack.c.h.b16 %v958
    %v989 = vunpack.c.h.b16 %v959
    %v990 = vunpack.c.h.b16 %v960
    %v991 = vunpack.c.h.b16 %v961
    %v992 = vunpack.c.l.b16 %v962
    %v993 = vunpack.c.l.b16 %v963
    %v994 = vunpack.c.l.b16 %v964
    %v995 = vunpack.c.l.b16 %v965
    %v996 = vunpack.c.l.b16 %v966
    %v997 = vunpack.c.l.b16 %v967
    %v998 = vunpack.c.h.b16 %v962
    %v999 = vunpack.c.h.b16 %v963
    %v1000 = vunpack.c.h.b16 %v964
    %v1001 = vunpack.c.h.b16 %v965
    %v1002 = vunpack.c.h.b16 %v966
    %v1003 = vunpack.c.h.b16 %v967
    %v1004 = vpack.c.b16 %v981, %v980
    %v1005 = vpack.c.b16 %v983, %v982
    %v1006 = vpack.c.b16 %v985, %v984
    %v1007 = vpack.c.b16 %v987, %v986
    %v1008 = vpack.c.b16 %v989, %v988
    %v1009 = vpack.c.b16 %v991, %v990
    %v1010 = vpack.c.b16 %v993, %v992
    %v1011 = vpack.c.b16 %v995, %v994
    %v1012 = vpack.c.b16 %v997, %v996
    %v1013 = vpack.c.b16 %v999, %v998
    %v1014 = vpack.c.b16 %v1001, %v1000
    %v1015 = vpack.c.b16 %v1003, %v1002
    %1028 = vst [vmem:[%s3] sm:$0xff] %v1004
    %1029 = vst [vmem:[%s3 + $0x8] sm:$0xff] %v1005
    %1030 = vst [vmem:[%s3 + $0x10] sm:$0xff] %v1006
    %1031 = vst [vmem:[%s3 + $0x18] sm:$0xff] %v1007
    %1032 = vst [vmem:[%s3 + $0x20] sm:$0xff] %v1008
    %1033 = vst [vmem:[%s3 + $0x28] sm:$0xff] %v1009
    %1034 = vst [vmem:[%s3 + $0x30] sm:$0xff] %v1010
    %1035 = vst [vmem:[%s3 + $0x38] sm:$0xff] %v1011
    %1036 = vst [vmem:[%s3 + $0x40] sm:$0xff] %v1012
    %1037 = vst [vmem:[%s3 + $0x48] sm:$0xff] %v1013
    %1038 = vst [vmem:[%s3 + $0x50] sm:$0xff] %v1014
    %1039 = vst [vmem:[%s3 + $0x58] sm:$0xff] %v1015
  $region21: #{transformer_forward.17} parent=0 // pred_fallthru
    _
  // Predicated region
  $region22: #{transformer_forward.17} parent=0 // pred_check
    _
  $region23: #{transformer_forward.17} parent=0 // pred_check_branch
    %1041 = sbr.rel (0) target = $region25
  $region24: #{transformer_forward.17} parent=0 // pred_region
    _
  $region25: #{transformer_forward.17} parent=0 // pred_fallthru
    _
  // Predicated region
  $region26: #{transformer_forward.17} parent=0 // pred_check
    _
  $region27: #{transformer_forward.17} parent=0 // pred_check_branch
    %1043 = sbr.rel (0) target = $region29
  $region28: #{transformer_forward.17} parent=0 // pred_region
    _
  $region29: #{transformer_forward.17} parent=0 // pred_fallthru
    _

// kernel: transformer_forward.18
$region0: #{transformer_forward.18}
  #allocation0 [shape = 'u32[]', space=smem, size = 0x4, offset = 0x4, fixed_abs, tag = 'smem constant byte address 0x4 - core index']
  #allocation1 [shape = 'u32[144,128]{1,0:T(1,128)}', space=vmem, size = 0x12000, scoped, tag = 'internal scratch']
  #allocation2 [shape = 'f32[16,1]{1,0:T(8,128)}', space=vmem, size = 0x2000, scoped, tag = 'scratch operand']
  #allocation3 [shape = 'f32[16,1]{1,0:T(8,128)}', space=vmem, size = 0x2000, scoped, tag = 'scratch operand']
  #allocation4 [shape = 'f32[16,128]{1,0:T(8,128)}', space=vmem, size = 0x2000, scoped, tag = 'scratch operand']
  %s0 = inlined_call_operand.vmem [shape: bf16[2,16,768], index: 0, kind: input, shape index: {}, may-alias: {0,1,2}]
  %s1 = inlined_call_operand.vmem [shape: bf16[2,16,768], index: 1, kind: input, shape index: {}, may-alias: {0,1,2}]
  %s2 = inlined_call_operand.vmem [shape: bf16[2,16,768], index: 2, kind: input, shape index: {}, may-alias: {0,1,2}]
  %s3 = inlined_call_operand.vmem [shape: bf16[2,16,256], index: 3, kind: output, shape index: {}]
  %s4 = sld [smem:[#allocation0]]
  $region213: #{transformer_forward.18} parent=0
    _
  %s6 = ssub.s32 1, %s4
  %s7 = scalar_select 0, %s6, %s4
  $region1: #{transformer_forward.18} parent=0
    #allocation5 [shape = 'u8[8192]{0}', space=vmem, size = 0x2000, scoped, tag = 'input window, operand 0']
    #allocation6 [shape = 'u8[8192]{0}', space=vmem, size = 0x2000, scoped, tag = 'input window, operand 1']
    #allocation7 [shape = 'u8[8192]{0}', space=vmem, size = 0x2000, scoped, tag = 'input window, operand 2']
    #allocation8 [shape = 'u8[8192]{0}', space=vmem, size = 0x2000, scoped, tag = 'output window, operand 0']
    loop: start=0, step=1, limit=6
    $region2: #{transformer_forward.18} parent=1 // loop_pre_header
      _
    $region3: #{transformer_forward.18} parent=1 // loop_header
      %s9 = sphi 0, %s13
      %p10 = scmp.ge.s32.totalorder %s9, 6
      %s16 = sphi 0, %s42
      %s17 = sphi 0, %s38
      %s18 = sphi 0, %s34
      %s19 = sphi 0, %s30
      %s20 = sphi 0, %s16
      %s21 = sphi 0, %s17
      %s22 = sphi 0, %s18
      %s23 = sphi 0, %s19
      %s24 = sphi 0, %s20
      %s25 = sphi 0, %s21
      %s26 = sphi 0, %s22
      %s27 = sphi 0, %s23
      %s49 = sphi 0, %s51
      %s52 = sphi 0, %s49
      %s53 = sphi 0, %s52
      %s69 = sphi 0, %s53
      %s81 = sphi 0, %s83
      %s84 = sphi 0, %s81
      %s85 = sphi 0, %s84
      %s101 = sphi 0, %s85
      %s113 = sphi 0, %s115
      %s116 = sphi 0, %s113
      %s117 = sphi 0, %s116
      %s133 = sphi 0, %s117
      %s143 = sphi 0, %s145
      %s146 = sphi 0, %s143
      %s147 = sphi 0, %s146
      %s163 = sphi 0, %s147
    $region4: #{transformer_forward.18} parent=1 // loop_header_branch
      %12 = sbr.rel (%p10) target = $region8
    $region5: #{transformer_forward.18} parent=1 // loop_body
      %s14 = ssub.s32 %s9, 1
      %s15 = ssub.s32 %s9, 2
      %s28 = sadd.s32 1, %s19
      %p29 = scmp.ge.s32.totalorder %s28, 1
      %s30 = scalar_select %p29, 0, %s28
      %s31 = sadd.s32 1, %s18
      %s32 = scalar_select %p29, %s31, %s18
      %p33 = scmp.ge.s32.totalorder %s32, 1
      %s34 = scalar_select %p33, 0, %s32
      %s35 = sadd.s32 1, %s17
      %s36 = scalar_select %p33, %s35, %s17
      %p37 = scmp.ge.s32.totalorder %s36, 2
      %s38 = scalar_select %p37, 0, %s36
      %s39 = sadd.s32 1, %s16
      %s40 = scalar_select %p37, %s39, %s16
      %p41 = scmp.ge.s32.totalorder %s40, 2
      %s42 = scalar_select %p41, 0, %s40
      %s43 = ssub.s32 %s16, %s42
      %s44 = ssub.s32 %s18, %s34
      %s45 = sor.u32 %s43, %s44
      %s46 = ssub.s32 %s17, %s38
      %s47 = sor.u32 %s45, %s46
      %p48 = scmp.eq.s32.totalorder %s47, 0
      %s50 = sadd.s32 %s49, 1
      %s51 = scalar_select %p48, %s49, %s50
      %p54 = pneg %p48
      %p55 = scmp.eq.s32.totalorder %s9, 3
      %p56 = por %p54, %p55
      %p57 = scmp.ne.s32.totalorder %s49, %s52
      %p58 = scmp.eq.s32.totalorder %s9, 0
      %p59 = por %p57, %p58
      %p60 = scmp.ne.s32.totalorder %s49, %s52
      %p61 = scmp.eq.s32.totalorder %s14, 3
      %p62 = por %p60, %p61
      %p63 = scmp.ne.s32.totalorder %s52, %s53
      %p64 = scmp.eq.s32.totalorder %s14, 0
      %p65 = por %p63, %p64
      %p66 = scmp.ne.s32.totalorder %s52, %s53
      %p67 = scmp.eq.s32.totalorder %s15, 3
      %p68 = por %p66, %p67
      %p70 = scmp.ne.s32.totalorder %s53, %s69
      %p71 = scmp.eq.s32.totalorder %s15, 0
      %p72 = por %p70, %p71
      %s73 = sadd.s32 %s17, 2
      %s74 = sadd.s32 %s38, 2
      %s75 = ssub.s32 %s16, %s42
      %s76 = ssub.s32 %s19, %s30
      %s77 = sor.u32 %s75, %s76
      %s78 = ssub.s32 %s73, %s74
      %s79 = sor.u32 %s77, %s78
      %p80 = scmp.eq.s32.totalorder %s79, 0
      %s82 = sadd.s32 %s81, 1
      %s83 = scalar_select %p80, %s81, %s82
      %p86 = pneg %p80
      %p87 = scmp.eq.s32.totalorder %s9, 3
      %p88 = por %p86, %p87
      %p89 = scmp.ne.s32.totalorder %s81, %s84
      %p90 = scmp.eq.s32.totalorder %s9, 0
      %p91 = por %p89, %p90
      %p92 = scmp.ne.s32.totalorder %s81, %s84
      %p93 = scmp.eq.s32.totalorder %s14, 3
      %p94 = por %p92, %p93
      %p95 = scmp.ne.s32.totalorder %s84, %s85
      %p96 = scmp.eq.s32.totalorder %s14, 0
      %p97 = por %p95, %p96
      %p98 = scmp.ne.s32.totalorder %s84, %s85
      %p99 = scmp.eq.s32.totalorder %s15, 3
      %p100 = por %p98, %p99
      %p102 = scmp.ne.s32.totalorder %s85, %s101
      %p103 = scmp.eq.s32.totalorder %s15, 0
      %p104 = por %p102, %p103
      %s105 = sadd.s32 %s17, 4
      %s106 = sadd.s32 %s38, 4
      %s107 = ssub.s32 %s16, %s42
      %s108 = ssub.s32 %s19, %s30
      %s109 = sor.u32 %s107, %s108
      %s110 = ssub.s32 %s105, %s106
      %s111 = sor.u32 %s109, %s110
      %p112 = scmp.eq.s32.totalorder %s111, 0
      %s114 = sadd.s32 %s113, 1
      %s115 = scalar_select %p112, %s113, %s114
      %p118 = pneg %p112
      %p119 = scmp.eq.s32.totalorder %s9, 3
      %p120 = por %p118, %p119
      %p121 = scmp.ne.s32.totalorder %s113, %s116
      %p122 = scmp.eq.s32.totalorder %s9, 0
      %p123 = por %p121, %p122
      %p124 = scmp.ne.s32.totalorder %s113, %s116
      %p125 = scmp.eq.s32.totalorder %s14, 3
      %p126 = por %p124, %p125
      %p127 = scmp.ne.s32.totalorder %s116, %s117
      %p128 = scmp.eq.s32.totalorder %s14, 0
      %p129 = por %p127, %p128
      %p130 = scmp.ne.s32.totalorder %s116, %s117
      %p131 = scmp.eq.s32.totalorder %s15, 3
      %p132 = por %p130, %p131
      %p134 = scmp.ne.s32.totalorder %s117, %s133
      %p135 = scmp.eq.s32.totalorder %s15, 0
      %p136 = por %p134, %p135
      %s137 = ssub.s32 %s16, %s42
      %s138 = ssub.s32 %s18, %s34
      %s139 = sor.u32 %s137, %s138
      %s140 = ssub.s32 %s17, %s38
      %s141 = sor.u32 %s139, %s140
      %p142 = scmp.eq.s32.totalorder %s141, 0
      %s144 = sadd.s32 %s143, 1
      %s145 = scalar_select %p142, %s143, %s144
      %p148 = pneg %p142
      %p149 = scmp.eq.s32.totalorder %s9, 3
      %p150 = por %p148, %p149
      %p151 = scmp.ne.s32.totalorder %s143, %s146
      %p152 = scmp.eq.s32.totalorder %s9, 0
      %p153 = por %p151, %p152
      %p154 = scmp.ne.s32.totalorder %s143, %s146
      %p155 = scmp.eq.s32.totalorder %s14, 3
      %p156 = por %p154, %p155
      %p157 = scmp.ne.s32.totalorder %s146, %s147
      %p158 = scmp.eq.s32.totalorder %s14, 0
      %p159 = por %p157, %p158
      %p160 = scmp.ne.s32.totalorder %s146, %s147
      %p161 = scmp.eq.s32.totalorder %s15, 3
      %p162 = por %p160, %p161
      %p164 = scmp.ne.s32.totalorder %s147, %s163
      %p165 = scmp.eq.s32.totalorder %s15, 0
      %p166 = por %p164, %p165
      %p167 = scmp.le.s32.totalorder 1, %s9
      %p168 = scmp.lt.s32.totalorder %s9, 5
      %p169 = pnand %p167, %p168
      %p170 = pneg %p169
      // Predicated region
      $region9: #{transformer_forward.18} parent=5 // pred_check
        _
      $region10: #{transformer_forward.18} parent=5 // pred_check_branch
        %172 = sbr.rel (%p169) target = $region12
      $region11: #{transformer_forward.18} parent=5 // pred_region
        %s173 = ssub.s32 %s9, 1
      $region12: #{transformer_forward.18} parent=5 // pred_fallthru
        _
      %p174 = scmp.lt.s32.totalorder %s9, 4
      // Predicated region
      $region13: #{transformer_forward.18} parent=5 // pred_check
        %p175 = pneg %p174
      $region14: #{transformer_forward.18} parent=5 // pred_check_branch
        %177 = sbr.rel (%p175) target = $region16
      $region15: #{transformer_forward.18} parent=5 // pred_region
        // Predicated region
        $region17: #{transformer_forward.18} parent=15 // pred_check
          %p178 = pneg %p59
        $region18: #{transformer_forward.18} parent=15 // pred_check_branch
          %180 = sbr.rel (%p178) target = $region20
        $region19: #{transformer_forward.18} parent=15 // pred_region
          %s181 = sand.u32 %s49, 1
          %s182 = sand.u32 %s49, 1
          %s183 = smul.addr %s182, 8
          %s184 = scalar_lea.vmem [#allocation5], %s183
          %s185 = smul.u32 2, %s18
          %s186 = smul.addr %s185, 6
          %s187 = sadd.s32 %s17, %s186
          %s188 = smul.addr %s16, 12
          %s189 = sadd.s32 %s187, %s188
          %s190 = smul.addr %s189, 4
          %s191 = scalar_lea.vmem %s0, %s190
          // Predicated region
          $region21: #{transformer_forward.18} parent=19 // pred_check
            _
          $region22: #{transformer_forward.18} parent=19 // pred_check_branch
            %193 = sbr.rel (0) target = $region24
          $region23: #{transformer_forward.18} parent=19 // pred_region
            // Predicated region
            $region25: #{transformer_forward.18} parent=23 // pred_check
              _
            $region26: #{transformer_forward.18} parent=23 // pred_check_branch
              %195 = sbr.rel target = $region28
            $region27: #{transformer_forward.18} parent=23 // pred_region
              // Predicated region
              $region40: #{transformer_forward.18} parent=27 // pred_check
                _
              $region41: #{transformer_forward.18} parent=27 // pred_check_branch
                %212 = sbr.rel (0) target = $region43
              $region42: #{transformer_forward.18} parent=27 // pred_region
                loop: start=0, step=1, limit=1
                $region44: #{transformer_forward.18} parent=42 // loop_pre_header
                  _
                $region45: #{transformer_forward.18} parent=42 // loop_header
                  %s214 = sphi 0, %s218
                  %p215 = scmp.ge.s32.totalorder %s214, 1
                  %s219 = sphi %s191, %s191
                  %s220 = sphi %s184, %s184
                $region46: #{transformer_forward.18} parent=42 // loop_header_branch
                  %217 = sbr.rel (%p215) target = $region50
                $region47: #{transformer_forward.18} parent=42 // loop_body
                  _
                $region48: #{transformer_forward.18} parent=42 // loop_footer
                  %s218 = sadd.s32 1, %s214
                $region49: #{transformer_forward.18} parent=42 // loop_footer_branch
                  %213 = sbr.rel target = $region45
                $region50: #{transformer_forward.18} parent=42 // loop_exit
                  _
                loop: start=0, step=1, limit=1
                $region51: #{transformer_forward.18} parent=42 // loop_pre_header
                  _
                $region52: #{transformer_forward.18} parent=42 // loop_header
                  %s223 = sphi 0, %s227
                  %p224 = scmp.ge.s32.totalorder %s223, 1
                  %s228 = sphi %s191, %s191
                  %s229 = sphi %s184, %s184
                $region53: #{transformer_forward.18} parent=42 // loop_header_branch
                  %226 = sbr.rel (%p224) target = $region57
                $region54: #{transformer_forward.18} parent=42 // loop_body
                  %v230 = vld [vmem:[%s228] sm:$0xf]
                  %231 = vst [vmem:[%s229] sm:$0xf] %v230
                  %v232 = vld [vmem:[%s228 + $0x18] sm:$0xf]
                  %233 = vst [vmem:[%s229 + $0x4] sm:$0xf] %v232
                $region55: #{transformer_forward.18} parent=42 // loop_footer
                  %s227 = sadd.s32 1, %s223
                $region56: #{transformer_forward.18} parent=42 // loop_footer_branch
                  %222 = sbr.rel target = $region52
                $region57: #{transformer_forward.18} parent=42 // loop_exit
                  _
              $region43: #{transformer_forward.18} parent=27 // pred_fallthru
                _
            $region28: #{transformer_forward.18} parent=23 // pred_fallthru
              _
            // Predicated region
            $region29: #{transformer_forward.18} parent=23 // pred_check
              _
            $region30: #{transformer_forward.18} parent=23 // pred_check_branch
              %197 = sbr.rel (0) target = $region32
            $region31: #{transformer_forward.18} parent=23 // pred_region
              loop: start=0, step=1, limit=1
              $region33: #{transformer_forward.18} parent=31 // loop_pre_header
                _
              $region34: #{transformer_forward.18} parent=31 // loop_header
                %s200 = sphi 0, %s204
                %p201 = scmp.ge.s32.totalorder %s200, 1
                %s205 = sphi %s191, %s191
                %s206 = sphi %s184, %s184
              $region35: #{transformer_forward.18} parent=31 // loop_header_branch
                %203 = sbr.rel (%p201) target = $region39
              $region36: #{transformer_forward.18} parent=31 // loop_body
                %v207 = vld [vmem:[%s205] sm:$0xf]
                %208 = vst [vmem:[%s206] sm:$0xf] %v207
                %v209 = vld [vmem:[%s205 + $0x18] sm:$0xf]
                %210 = vst [vmem:[%s206 + $0x4] sm:$0xf] %v209
              $region37: #{transformer_forward.18} parent=31 // loop_footer
                %s204 = sadd.s32 1, %s200
              $region38: #{transformer_forward.18} parent=31 // loop_footer_branch
                %199 = sbr.rel target = $region34
              $region39: #{transformer_forward.18} parent=31 // loop_exit
                _
            $region32: #{transformer_forward.18} parent=23 // pred_fallthru
              _
          $region24: #{transformer_forward.18} parent=19 // pred_fallthru
            _
          %234 = vnop
        $region20: #{transformer_forward.18} parent=15 // pred_fallthru
          _
        // Predicated region
        $region58: #{transformer_forward.18} parent=15 // pred_check
          %p235 = pneg %p91
        $region59: #{transformer_forward.18} parent=15 // pred_check_branch
          %237 = sbr.rel (%p235) target = $region61
        $region60: #{transformer_forward.18} parent=15 // pred_region
          %s238 = sand.u32 %s81, 1
          %s239 = sand.u32 %s81, 1
          %s240 = smul.addr %s239, 8
          %s241 = scalar_lea.vmem [#allocation6], %s240
          %s242 = sadd.s32 %s17, 2
          %s243 = smul.u32 2, %s19
          %s244 = smul.addr %s243, 6
          %s245 = sadd.s32 %s242, %s244
          %s246 = smul.addr %s16, 12
          %s247 = sadd.s32 %s245, %s246
          %s248 = smul.addr %s247, 4
          %s249 = scalar_lea.vmem %s1, %s248
          // Predicated region
          $region62: #{transformer_forward.18} parent=60 // pred_check
            _
          $region63: #{transformer_forward.18} parent=60 // pred_check_branch
            %251 = sbr.rel (0) target = $region65
          $region64: #{transformer_forward.18} parent=60 // pred_region
            // Predicated region
            $region66: #{transformer_forward.18} parent=64 // pred_check
              _
            $region67: #{transformer_forward.18} parent=64 // pred_check_branch
              %253 = sbr.rel target = $region69
            $region68: #{transformer_forward.18} parent=64 // pred_region
              // Predicated region
              $region81: #{transformer_forward.18} parent=68 // pred_check
                _
              $region82: #{transformer_forward.18} parent=68 // pred_check_branch
                %270 = sbr.rel (0) target = $region84
              $region83: #{transformer_forward.18} parent=68 // pred_region
                loop: start=0, step=1, limit=1
                $region85: #{transformer_forward.18} parent=83 // loop_pre_header
                  _
                $region86: #{transformer_forward.18} parent=83 // loop_header
                  %s272 = sphi 0, %s276
                  %p273 = scmp.ge.s32.totalorder %s272, 1
                  %s277 = sphi %s249, %s249
                  %s278 = sphi %s241, %s241
                $region87: #{transformer_forward.18} parent=83 // loop_header_branch
                  %275 = sbr.rel (%p273) target = $region91
                $region88: #{transformer_forward.18} parent=83 // loop_body
                  _
                $region89: #{transformer_forward.18} parent=83 // loop_footer
                  %s276 = sadd.s32 1, %s272
                $region90: #{transformer_forward.18} parent=83 // loop_footer_branch
                  %271 = sbr.rel target = $region86
                $region91: #{transformer_forward.18} parent=83 // loop_exit
                  _
                loop: start=0, step=1, limit=1
                $region92: #{transformer_forward.18} parent=83 // loop_pre_header
                  _
                $region93: #{transformer_forward.18} parent=83 // loop_header
                  %s281 = sphi 0, %s285
                  %p282 = scmp.ge.s32.totalorder %s281, 1
                  %s286 = sphi %s249, %s249
                  %s287 = sphi %s241, %s241
                $region94: #{transformer_forward.18} parent=83 // loop_header_branch
                  %284 = sbr.rel (%p282) target = $region98
                $region95: #{transformer_forward.18} parent=83 // loop_body
                  %v288 = vld [vmem:[%s286] sm:$0xf]
                  %289 = vst [vmem:[%s287] sm:$0xf] %v288
                  %v290 = vld [vmem:[%s286 + $0x18] sm:$0xf]
                  %291 = vst [vmem:[%s287 + $0x4] sm:$0xf] %v290
                $region96: #{transformer_forward.18} parent=83 // loop_footer
                  %s285 = sadd.s32 1, %s281
                $region97: #{transformer_forward.18} parent=83 // loop_footer_branch
                  %280 = sbr.rel target = $region93
                $region98: #{transformer_forward.18} parent=83 // loop_exit
                  _
              $region84: #{transformer_forward.18} parent=68 // pred_fallthru
                _
            $region69: #{transformer_forward.18} parent=64 // pred_fallthru
              _
            // Predicated region
            $region70: #{transformer_forward.18} parent=64 // pred_check
              _
            $region71: #{transformer_forward.18} parent=64 // pred_check_branch
              %255 = sbr.rel (0) target = $region73
            $region72: #{transformer_forward.18} parent=64 // pred_region
              loop: start=0, step=1, limit=1
              $region74: #{transformer_forward.18} parent=72 // loop_pre_header
                _
              $region75: #{transformer_forward.18} parent=72 // loop_header
                %s258 = sphi 0, %s262
                %p259 = scmp.ge.s32.totalorder %s258, 1
                %s263 = sphi %s249, %s249
                %s264 = sphi %s241, %s241
              $region76: #{transformer_forward.18} parent=72 // loop_header_branch
                %261 = sbr.rel (%p259) target = $region80
              $region77: #{transformer_forward.18} parent=72 // loop_body
                %v265 = vld [vmem:[%s263] sm:$0xf]
                %266 = vst [vmem:[%s264] sm:$0xf] %v265
                %v267 = vld [vmem:[%s263 + $0x18] sm:$0xf]
                %268 = vst [vmem:[%s264 + $0x4] sm:$0xf] %v267
              $region78: #{transformer_forward.18} parent=72 // loop_footer
                %s262 = sadd.s32 1, %s258
              $region79: #{transformer_forward.18} parent=72 // loop_footer_branch
                %257 = sbr.rel target = $region75
              $region80: #{transformer_forward.18} parent=72 // loop_exit
                _
            $region73: #{transformer_forward.18} parent=64 // pred_fallthru
              _
          $region65: #{transformer_forward.18} parent=60 // pred_fallthru
            _
          %292 = vnop
        $region61: #{transformer_forward.18} parent=15 // pred_fallthru
          _
        // Predicated region
        $region99: #{transformer_forward.18} parent=15 // pred_check
          %p293 = pneg %p123
        $region100: #{transformer_forward.18} parent=15 // pred_check_branch
          %295 = sbr.rel (%p293) target = $region102
        $region101: #{transformer_forward.18} parent=15 // pred_region
          %s296 = sand.u32 %s113, 1
          %s297 = sand.u32 %s113, 1
          %s298 = smul.addr %s297, 8
          %s299 = scalar_lea.vmem [#allocation7], %s298
          %s300 = sadd.s32 %s17, 4
          %s301 = smul.u32 2, %s19
          %s302 = smul.addr %s301, 6
          %s303 = sadd.s32 %s300, %s302
          %s304 = smul.addr %s16, 12
          %s305 = sadd.s32 %s303, %s304
          %s306 = smul.addr %s305, 4
          %s307 = scalar_lea.vmem %s2, %s306
          // Predicated region
          $region103: #{transformer_forward.18} parent=101 // pred_check
            _
          $region104: #{transformer_forward.18} parent=101 // pred_check_branch
            %309 = sbr.rel (0) target = $region106
          $region105: #{transformer_forward.18} parent=101 // pred_region
            // Predicated region
            $region107: #{transformer_forward.18} parent=105 // pred_check
              _
            $region108: #{transformer_forward.18} parent=105 // pred_check_branch
              %311 = sbr.rel target = $region110
            $region109: #{transformer_forward.18} parent=105 // pred_region
              // Predicated region
              $region122: #{transformer_forward.18} parent=109 // pred_check
                _
              $region123: #{transformer_forward.18} parent=109 // pred_check_branch
                %328 = sbr.rel (0) target = $region125
              $region124: #{transformer_forward.18} parent=109 // pred_region
                loop: start=0, step=1, limit=1
                $region126: #{transformer_forward.18} parent=124 // loop_pre_header
                  _
                $region127: #{transformer_forward.18} parent=124 // loop_header
                  %s330 = sphi 0, %s334
                  %p331 = scmp.ge.s32.totalorder %s330, 1
                  %s335 = sphi %s307, %s307
                  %s336 = sphi %s299, %s299
                $region128: #{transformer_forward.18} parent=124 // loop_header_branch
                  %333 = sbr.rel (%p331) target = $region132
                $region129: #{transformer_forward.18} parent=124 // loop_body
                  _
                $region130: #{transformer_forward.18} parent=124 // loop_footer
                  %s334 = sadd.s32 1, %s330
                $region131: #{transformer_forward.18} parent=124 // loop_footer_branch
                  %329 = sbr.rel target = $region127
                $region132: #{transformer_forward.18} parent=124 // loop_exit
                  _
                loop: start=0, step=1, limit=1
                $region133: #{transformer_forward.18} parent=124 // loop_pre_header
                  _
                $region134: #{transformer_forward.18} parent=124 // loop_header
                  %s339 = sphi 0, %s343
                  %p340 = scmp.ge.s32.totalorder %s339, 1
                  %s344 = sphi %s307, %s307
                  %s345 = sphi %s299, %s299
                $region135: #{transformer_forward.18} parent=124 // loop_header_branch
                  %342 = sbr.rel (%p340) target = $region139
                $region136: #{transformer_forward.18} parent=124 // loop_body
                  %v346 = vld [vmem:[%s344] sm:$0xf]
                  %347 = vst [vmem:[%s345] sm:$0xf] %v346
                  %v348 = vld [vmem:[%s344 + $0x18] sm:$0xf]
                  %349 = vst [vmem:[%s345 + $0x4] sm:$0xf] %v348
                $region137: #{transformer_forward.18} parent=124 // loop_footer
                  %s343 = sadd.s32 1, %s339
                $region138: #{transformer_forward.18} parent=124 // loop_footer_branch
                  %338 = sbr.rel target = $region134
                $region139: #{transformer_forward.18} parent=124 // loop_exit
                  _
              $region125: #{transformer_forward.18} parent=109 // pred_fallthru
                _
            $region110: #{transformer_forward.18} parent=105 // pred_fallthru
              _
            // Predicated region
            $region111: #{transformer_forward.18} parent=105 // pred_check
              _
            $region112: #{transformer_forward.18} parent=105 // pred_check_branch
              %313 = sbr.rel (0) target = $region114
            $region113: #{transformer_forward.18} parent=105 // pred_region
              loop: start=0, step=1, limit=1
              $region115: #{transformer_forward.18} parent=113 // loop_pre_header
                _
              $region116: #{transformer_forward.18} parent=113 // loop_header
                %s316 = sphi 0, %s320
                %p317 = scmp.ge.s32.totalorder %s316, 1
                %s321 = sphi %s307, %s307
                %s322 = sphi %s299, %s299
              $region117: #{transformer_forward.18} parent=113 // loop_header_branch
                %319 = sbr.rel (%p317) target = $region121
              $region118: #{transformer_forward.18} parent=113 // loop_body
                %v323 = vld [vmem:[%s321] sm:$0xf]
                %324 = vst [vmem:[%s322] sm:$0xf] %v323
                %v325 = vld [vmem:[%s321 + $0x18] sm:$0xf]
                %326 = vst [vmem:[%s322 + $0x4] sm:$0xf] %v325
              $region119: #{transformer_forward.18} parent=113 // loop_footer
                %s320 = sadd.s32 1, %s316
              $region120: #{transformer_forward.18} parent=113 // loop_footer_branch
                %315 = sbr.rel target = $region116
              $region121: #{transformer_forward.18} parent=113 // loop_exit
                _
            $region114: #{transformer_forward.18} parent=105 // pred_fallthru
              _
          $region106: #{transformer_forward.18} parent=101 // pred_fallthru
            _
          %350 = vnop
        $region102: #{transformer_forward.18} parent=15 // pred_fallthru
          _
      $region16: #{transformer_forward.18} parent=5 // pred_fallthru
        _
      %p351 = scmp.le.s32.totalorder 1, %s9
      %p352 = scmp.lt.s32.totalorder %s9, 5
      %p353 = pnand %p351, %p352
      %p354 = pneg %p353
      // Predicated region
      $region140: #{transformer_forward.18} parent=5 // pred_check
        _
      $region141: #{transformer_forward.18} parent=5 // pred_check_branch
        %356 = sbr.rel (%p353) target = $region143
      $region142: #{transformer_forward.18} parent=5 // pred_region
        %s357 = ssub.s32 %s9, 1
        %s358 = sand.u32 %s52, 1
        %s359 = sand.u32 %s52, 1
        %s360 = smul.addr %s359, 8
        %s361 = scalar_lea.vmem [#allocation5], %s360
        // Predicated region
        $region144: #{transformer_forward.18} parent=142 // pred_check
          %p362 = pneg %p65
        $region145: #{transformer_forward.18} parent=142 // pred_check_branch
          %364 = sbr.rel (%p362) target = $region147
        $region146: #{transformer_forward.18} parent=142 // pred_region
          _
        $region147: #{transformer_forward.18} parent=142 // pred_fallthru
          _
        %s365 = sand.u32 %s84, 1
        %s366 = sand.u32 %s84, 1
        %s367 = smul.addr %s366, 8
        %s368 = scalar_lea.vmem [#allocation6], %s367
        // Predicated region
        $region148: #{transformer_forward.18} parent=142 // pred_check
          %p369 = pneg %p97
        $region149: #{transformer_forward.18} parent=142 // pred_check_branch
          %371 = sbr.rel (%p369) target = $region151
        $region150: #{transformer_forward.18} parent=142 // pred_region
          _
        $region151: #{transformer_forward.18} parent=142 // pred_fallthru
          _
        %s372 = sand.u32 %s116, 1
        %s373 = sand.u32 %s116, 1
        %s374 = smul.addr %s373, 8
        %s375 = scalar_lea.vmem [#allocation7], %s374
        // Predicated region
        $region152: #{transformer_forward.18} parent=142 // pred_check
          %p376 = pneg %p129
        $region153: #{transformer_forward.18} parent=142 // pred_check_branch
          %378 = sbr.rel (%p376) target = $region155
        $region154: #{transformer_forward.18} parent=142 // pred_region
          _
        $region155: #{transformer_forward.18} parent=142 // pred_fallthru
          _
        %s379 = sand.u32 %s52, 1
        %s380 = sand.u32 %s52, 1
        %s381 = smul.addr %s380, 8
        %s382 = scalar_lea.vmem [#allocation5], %s381
        %p383 = pneg %p65
        %p384 = pneg %p62
        %s385 = sand.u32 %s84, 1
        %s386 = sand.u32 %s84, 1
        %s387 = smul.addr %s386, 8
        %s388 = scalar_lea.vmem [#allocation6], %s387
        %p389 = pneg %p97
        %p390 = pneg %p94
        %s391 = sand.u32 %s116, 1
        %s392 = sand.u32 %s116, 1
        %s393 = smul.addr %s392, 8
        %s394 = scalar_lea.vmem [#allocation7], %s393
        %p395 = pneg %p129
        %p396 = pneg %p126
        %p397 = pneg %p159
        %p398 = pneg %p156
        %s399 = sand.u32 %s146, 1
        %s400 = sand.u32 %s146, 1
        %s401 = smul.addr %s400, 8
        %s402 = scalar_lea.vmem [#allocation8], %s401
        %s403 = smul.u32 2, %s22
        %s404 = sadd.s32 %s21, 2
        %s405 = smul.u32 2, %s23
        %s406 = sadd.s32 %s21, 4
        %s407 = smul.u32 2, %s23
        %s408 = smul.u32 2, %s22
        %p410 = scmp.eq.s32.totalorder %s23, 0
        // Predicated region
        $region156: #{transformer_forward.18} parent=142 // pred_check
          %p411 = pneg %p410
        $region157: #{transformer_forward.18} parent=142 // pred_check_branch
          %413 = sbr.rel (%p411) target = $region159
        $region158: #{transformer_forward.18} parent=142 // pred_region
          %vm414 = vcmask 7168
          %415 = vst.msk [vmem:[#allocation2] sm:$0xff] %vm414, -inf
          %416 = vst.msk [vmem:[#allocation2 + $0x8] sm:$0xff] %vm414, -inf
          %417 = vst.msk [vmem:[#allocation3] sm:$0xff] %vm414, 0.0
          %418 = vst.msk [vmem:[#allocation3 + $0x8] sm:$0xff] %vm414, 0.0
          %419 = vst [vmem:[#allocation4] sm:$0xff] 0.0
          %420 = vst [vmem:[#allocation4 + $0x8] sm:$0xff] 0.0
        $region159: #{transformer_forward.18} parent=142 // pred_fallthru
          _
        %v421 = vld [vmem:[%s361] sm:$0xf]
        %v422 = vld [vmem:[%s361 + $0x4] sm:$0xf]
        %v423 = vld [vmem:[%s368] sm:$0xf]
        %v424 = vld [vmem:[%s368 + $0x4] sm:$0xf]
        %v425 = vld [vmem:[%s375] sm:$0xf]
        %v426 = vld [vmem:[%s375 + $0x4] sm:$0xf]
        %v429 = vunpack.c.l.b16 %v421
        %v430 = vunpack.c.l.b16 %v422
        %v431 = vpack.c.b16 %v430, %v429
        %v435 = vunpack.c.l.b16 %v423
        %v436 = vunpack.c.l.b16 %v424
        %v437 = vpack.c.b16 %v436, %v435
        %439 = vmatprep.subr.bf16.mxu0 0
        %440 = vmatpush1.bf16.xpose.msra.mxu0 %v437
        %441 = vmatprep.subr.bf16.mxu0 0
        %442 = vmatpush1.bf16.xpose.msra.mxu0 0
        %443 = vmatprep.subr.bf16.mxu0 0
        %444 = vmatpush1.bf16.xpose.msra.mxu0 0
        %445 = vmatprep.subr.bf16.mxu0 0
        %446 = vmatpush1.bf16.xpose.msra.mxu0 0
        %447 = vmatprep.subr.bf16.mxu0 0
        %448 = vmatpush1.bf16.xpose.msra.mxu0 0
        %449 = vmatprep.subr.bf16.mxu0 0
        %450 = vmatpush1.bf16.xpose.msra.mxu0 0
        %451 = vmatprep.subr.bf16.mxu0 0
        %452 = vmatpush1.bf16.xpose.msra.mxu0 0
        %453 = vmatprep.subr.bf16.mxu0 0
        %454 = vmatpush1.bf16.xpose.msra.mxu0 0
        %455 = vmatprep.subr.bf16.mxu0 0
        %456 = vmatpush1.bf16.xpose.msra.mxu0 0
        %457 = vmatprep.subr.bf16.mxu0 0
        %458 = vmatpush1.bf16.xpose.msra.mxu0 0
        %459 = vmatprep.subr.bf16.mxu0 0
        %460 = vmatpush1.bf16.xpose.msra.mxu0 0
        %461 = vmatprep.subr.bf16.mxu0 0
        %462 = vmatpush1.bf16.xpose.msra.mxu0 0
        %463 = vmatprep.subr.bf16.mxu0 0
        %464 = vmatpush1.bf16.xpose.msra.mxu0 0
        %465 = vmatprep.subr.bf16.mxu0 0
        %466 = vmatpush1.bf16.xpose.msra.mxu0 0
        %467 = vmatprep.subr.bf16.mxu0 0
        %468 = vmatpush1.bf16.xpose.msra.mxu0 0
        %469 = vmatprep.subr.bf16.mxu0 0
        %470 = vmatpush1.bf16.xpose.msra.mxu0 0
        %471 = vmatprep.mubr.bf16.mxu0 0
        %472 = vmatmul.mubr.bf16.gmra.mrb[0].mxu0 %v431
        %v473 = vpop.f32.mrb[0].mxu0
        %v474 = vadd.f32 0.0, %v473
        %v475 = vpop.f32.mrb[0].mxu0
        %v476 = vpop.f32.mrb[0].mxu0
        %v477 = vadd.f32 0.0, %v476
        %v478 = vpop.f32.mrb[0].mxu0
        %479 = vdwg.mxu0
        %v480 = vmul.f32 %v474, 0.088388346
        %v481 = vmul.f32 %v477, 0.088388346
        %v482 = vld [vmem:[#allocation2] sm:$0xff]
        %v483 = vld [vmem:[#allocation2 + $0x8] sm:$0xff]
        %vm484 = vcmask 130048
        %v485 = vsel %vm484, %v480, -inf
        %486 = vmax.xlane.f32.xlu0 %v485
        %v487 = vpop.xlane.xlu0 %486
        %v488 = vsel %vm484, %v481, -inf
        %489 = vmax.xlane.f32.xlu0 %v488
        %v490 = vpop.xlane.xlu0 %489
        %v491 = vmax.f32 %v482, %v487
        %v492 = vmax.f32 %v483, %v490
        %v493 = vsub.f32 %v482, %v491
        %v494 = vsub.f32 %v483, %v492
        %v495 = vmul.f32 %v493, 1.442695
        %v496 = vpow.pop %v495
        %v497 = vmul.f32 %v494, 1.442695
        %v498 = vpow.pop %v497
        %500 = vset.pattern.permute.xlu0 0
        %501 = vperm.xlu0 %500, %v491
        %v502 = vpop.permute.xlu0 %501
        %505 = vset.pattern.permute.xlu0 0
        %506 = vperm.xlu0 %505, %v492
        %v507 = vpop.permute.xlu0 %506
        %v509 = vsub.f32 %v480, %v502
        %v510 = vsub.f32 %v481, %v507
        %v511 = vmul.f32 %v509, 1.442695
        %v512 = vpow.pop %v511
        %v513 = vmul.f32 %v510, 1.442695
        %v514 = vpow.pop %v513
        %v515 = vld [vmem:[#allocation3] sm:$0xff]
        %v516 = vld [vmem:[#allocation3 + $0x8] sm:$0xff]
        %v517 = vmul.f32 %v496, %v515
        %v518 = vmul.f32 %v498, %v516
        %v519 = vsel %vm484, %v512, 0.0
        %520 = vadd.xlane.f32.xlu0 %v519
        %v521 = vpop.xlane.xlu0 %520
        %v522 = vsel %vm484, %v514, 0.0
        %523 = vadd.xlane.f32.xlu0 %v522
        %v524 = vpop.xlane.xlu0 %523
        %v525 = vadd.f32 %v517, %v521
        %v526 = vadd.f32 %v518, %v524
        %vm527 = vcmask 7168
        %528 = vst.msk [vmem:[#allocation3] sm:$0xff] %vm527, %v525
        %529 = vst.msk [vmem:[#allocation3 + $0x8] sm:$0xff] %vm527, %v526
        %v530 = vld [vmem:[#allocation4] sm:$0xff]
        %v531 = vld [vmem:[#allocation4 + $0x8] sm:$0xff]
        %533 = vset.pattern.permute.xlu0 0
        %534 = vperm.xlu0 %533, %v496
        %v535 = vpop.permute.xlu0 %534
        %538 = vset.pattern.permute.xlu0 0
        %539 = vperm.xlu0 %538, %v498
        %v540 = vpop.permute.xlu0 %539
        %v542 = vmul.f32 %v535, %v530
        %v543 = vmul.f32 %v540, %v531
        %v544 = vpack.c.bf16 %v514, %v512
        %v547 = vunpack.c.l.b16 %v425
        %v548 = vunpack.c.l.b16 %v426
        %v549 = vpack.c.b16 %v548, %v547
        %v552 = vsel %vm484, %v544, 0
        %554 = vmatprep.subr.bf16.mxu0 0
        %555 = vmatpush1.bf16.msra.mxu0 %v549
        %556 = vmatprep.subr.bf16.mxu0 0
        %557 = vmatpush1.bf16.msra.mxu0 0
        %558 = vmatprep.subr.bf16.mxu0 0
        %559 = vmatpush1.bf16.msra.mxu0 0
        %560 = vmatprep.subr.bf16.mxu0 0
        %561 = vmatpush1.bf16.msra.mxu0 0
        %562 = vmatprep.subr.bf16.mxu0 0
        %563 = vmatpush1.bf16.msra.mxu0 0
        %564 = vmatprep.subr.bf16.mxu0 0
        %565 = vmatpush1.bf16.msra.mxu0 0
        %566 = vmatprep.subr.bf16.mxu0 0
        %567 = vmatpush1.bf16.msra.mxu0 0
        %568 = vmatprep.subr.bf16.mxu0 0
        %569 = vmatpush1.bf16.msra.mxu0 0
        %570 = vmatprep.subr.bf16.mxu0 0
        %571 = vmatpush1.bf16.msra.mxu0 0
        %572 = vmatprep.subr.bf16.mxu0 0
        %573 = vmatpush1.bf16.msra.mxu0 0
        %574 = vmatprep.subr.bf16.mxu0 0
        %575 = vmatpush1.bf16.msra.mxu0 0
        %576 = vmatprep.subr.bf16.mxu0 0
        %577 = vmatpush1.bf16.msra.mxu0 0
        %578 = vmatprep.subr.bf16.mxu0 0
        %579 = vmatpush1.bf16.msra.mxu0 0
        %580 = vmatprep.subr.bf16.mxu0 0
        %581 = vmatpush1.bf16.msra.mxu0 0
        %582 = vmatprep.subr.bf16.mxu0 0
        %583 = vmatpush1.bf16.msra.mxu0 0
        %584 = vmatprep.subr.bf16.mxu0 0
        %585 = vmatpush1.bf16.msra.mxu0 0
        %586 = vmatprep.mubr.bf16.mxu0 0
        %587 = vmatmul.mubr.bf16.gmra.mrb[0].mxu0 %v552
        %v588 = vpop.f32.mrb[0].mxu0
        %v589 = vadd.f32 0.0, %v588
        %v590 = vpop.f32.mrb[0].mxu0
        %v591 = vpop.f32.mrb[0].mxu0
        %v592 = vadd.f32 0.0, %v591
        %v593 = vpop.f32.mrb[0].mxu0
        %594 = vdwg.mxu0
        %v595 = vadd.f32 %v542, %v589
        %v596 = vadd.f32 %v543, %v592
        %597 = vst [vmem:[#allocation4] sm:$0xff] %v595
        %598 = vst [vmem:[#allocation4 + $0x8] sm:$0xff] %v596
        %599 = vst.msk [vmem:[#allocation2] sm:$0xff] %vm527, %v491
        %600 = vst.msk [vmem:[#allocation2 + $0x8] sm:$0xff] %vm527, %v492
        // Predicated region
        $region160: #{transformer_forward.18} parent=142 // pred_check
          %p601 = pneg %p410
        $region161: #{transformer_forward.18} parent=142 // pred_check_branch
          %603 = sbr.rel (%p601) target = $region163
        $region162: #{transformer_forward.18} parent=142 // pred_region
          %v604 = vld [vmem:[#allocation3] sm:$0xff]
          %v605 = vld [vmem:[#allocation3 + $0x8] sm:$0xff]
          %v606 = vrcp.pop %v604
          %v607 = vrcp.pop %v605
          %v608 = vld [vmem:[#allocation4] sm:$0xff]
          %v609 = vld [vmem:[#allocation4 + $0x8] sm:$0xff]
          %611 = vset.pattern.permute.xlu0 0
          %612 = vperm.xlu0 %611, %v606
          %v613 = vpop.permute.xlu0 %612
          %616 = vset.pattern.permute.xlu0 0
          %617 = vperm.xlu0 %616, %v607
          %v618 = vpop.permute.xlu0 %617
          %v620 = vmul.f32 %v608, %v613
          %v621 = vmul.f32 %v609, %v618
          %v622 = vpack.c.bf16 %v621, %v620
          %v624 = vunpack.c.l.b16 %v622
          %v625 = vunpack.c.h.b16 %v622
          %v626 = vpack.c.b16 %v624, %v624
          %v627 = vpack.c.b16 %v625, %v625
          %630 = vst [vmem:[%s402] sm:$0xf] %v626
          %631 = vst [vmem:[%s402 + $0x4] sm:$0xf] %v627
        $region163: #{transformer_forward.18} parent=142 // pred_fallthru
          _
        %s632 = sand.u32 %s146, 1
        %s633 = sand.u32 %s146, 1
        %s634 = smul.addr %s633, 8
        %s635 = scalar_lea.vmem [#allocation8], %s634
        // Predicated region
        $region164: #{transformer_forward.18} parent=142 // pred_check
          %p636 = pneg %p156
        $region165: #{transformer_forward.18} parent=142 // pred_check_branch
          %638 = sbr.rel (%p636) target = $region167
        $region166: #{transformer_forward.18} parent=142 // pred_region
          %s639 = smul.u32 2, %s22
          %s640 = smul.addr %s639, 2
          %s641 = sadd.s32 %s21, %s640
          %s642 = smul.addr %s20, 4
          %s643 = sadd.s32 %s641, %s642
          %s644 = smul.addr %s643, 4
          %s645 = scalar_lea.vmem %s3, %s644
          // Predicated region
          $region168: #{transformer_forward.18} parent=166 // pred_check
            _
          $region169: #{transformer_forward.18} parent=166 // pred_check_branch
            %647 = sbr.rel (0) target = $region171
          $region170: #{transformer_forward.18} parent=166 // pred_region
            // Predicated region
            $region172: #{transformer_forward.18} parent=170 // pred_check
              _
            $region173: #{transformer_forward.18} parent=170 // pred_check_branch
              %649 = sbr.rel target = $region175
            $region174: #{transformer_forward.18} parent=170 // pred_region
              // Predicated region
              $region187: #{transformer_forward.18} parent=174 // pred_check
                _
              $region188: #{transformer_forward.18} parent=174 // pred_check_branch
                %666 = sbr.rel (0) target = $region190
              $region189: #{transformer_forward.18} parent=174 // pred_region
                loop: start=0, step=1, limit=1
                $region191: #{transformer_forward.18} parent=189 // loop_pre_header
                  _
                $region192: #{transformer_forward.18} parent=189 // loop_header
                  %s668 = sphi 0, %s672
                  %p669 = scmp.ge.s32.totalorder %s668, 1
                  %s673 = sphi %s635, %s635
                  %s674 = sphi %s645, %s645
                $region193: #{transformer_forward.18} parent=189 // loop_header_branch
                  %671 = sbr.rel (%p669) target = $region197
                $region194: #{transformer_forward.18} parent=189 // loop_body
                  _
                $region195: #{transformer_forward.18} parent=189 // loop_footer
                  %s672 = sadd.s32 1, %s668
                $region196: #{transformer_forward.18} parent=189 // loop_footer_branch
                  %667 = sbr.rel target = $region192
                $region197: #{transformer_forward.18} parent=189 // loop_exit
                  _
                loop: start=0, step=1, limit=1
                $region198: #{transformer_forward.18} parent=189 // loop_pre_header
                  _
                $region199: #{transformer_forward.18} parent=189 // loop_header
                  %s677 = sphi 0, %s681
                  %p678 = scmp.ge.s32.totalorder %s677, 1
                  %s682 = sphi %s635, %s635
                  %s683 = sphi %s645, %s645
                $region200: #{transformer_forward.18} parent=189 // loop_header_branch
                  %680 = sbr.rel (%p678) target = $region204
                $region201: #{transformer_forward.18} parent=189 // loop_body
                  %v684 = vld [vmem:[%s682] sm:$0xf]
                  %685 = vst [vmem:[%s683] sm:$0xf] %v684
                  %v686 = vld [vmem:[%s682 + $0x4] sm:$0xf]
                  %687 = vst [vmem:[%s683 + $0x8] sm:$0xf] %v686
                $region202: #{transformer_forward.18} parent=189 // loop_footer
                  %s681 = sadd.s32 1, %s677
                $region203: #{transformer_forward.18} parent=189 // loop_footer_branch
                  %676 = sbr.rel target = $region199
                $region204: #{transformer_forward.18} parent=189 // loop_exit
                  _
              $region190: #{transformer_forward.18} parent=174 // pred_fallthru
                _
            $region175: #{transformer_forward.18} parent=170 // pred_fallthru
              _
            // Predicated region
            $region176: #{transformer_forward.18} parent=170 // pred_check
              _
            $region177: #{transformer_forward.18} parent=170 // pred_check_branch
              %651 = sbr.rel (0) target = $region179
            $region178: #{transformer_forward.18} parent=170 // pred_region
              loop: start=0, step=1, limit=1
              $region180: #{transformer_forward.18} parent=178 // loop_pre_header
                _
              $region181: #{transformer_forward.18} parent=178 // loop_header
                %s654 = sphi 0, %s658
                %p655 = scmp.ge.s32.totalorder %s654, 1
                %s659 = sphi %s635, %s635
                %s660 = sphi %s645, %s645
              $region182: #{transformer_forward.18} parent=178 // loop_header_branch
                %657 = sbr.rel (%p655) target = $region186
              $region183: #{transformer_forward.18} parent=178 // loop_body
                %v661 = vld [vmem:[%s659] sm:$0xf]
                %662 = vst [vmem:[%s660] sm:$0xf] %v661
                %v663 = vld [vmem:[%s659 + $0x4] sm:$0xf]
                %664 = vst [vmem:[%s660 + $0x8] sm:$0xf] %v663
              $region184: #{transformer_forward.18} parent=178 // loop_footer
                %s658 = sadd.s32 1, %s654
              $region185: #{transformer_forward.18} parent=178 // loop_footer_branch
                %653 = sbr.rel target = $region181
              $region186: #{transformer_forward.18} parent=178 // loop_exit
                _
            $region179: #{transformer_forward.18} parent=170 // pred_fallthru
              _
          $region171: #{transformer_forward.18} parent=166 // pred_fallthru
            _
          %688 = vnop
        $region167: #{transformer_forward.18} parent=142 // pred_fallthru
          _
      $region143: #{transformer_forward.18} parent=5 // pred_fallthru
        _
      %p689 = scmp.le.s32.totalorder 2, %s9
      // Predicated region
      $region205: #{transformer_forward.18} parent=5 // pred_check
        %p690 = pneg %p689
      $region206: #{transformer_forward.18} parent=5 // pred_check_branch
        %692 = sbr.rel (%p690) target = $region208
      $region207: #{transformer_forward.18} parent=5 // pred_region
        %s693 = ssub.s32 %s9, 2
        // Predicated region
        $region209: #{transformer_forward.18} parent=207 // pred_check
          %p694 = pneg %p162
        $region210: #{transformer_forward.18} parent=207 // pred_check_branch
          %696 = sbr.rel (%p694) target = $region212
        $region211: #{transformer_forward.18} parent=207 // pred_region
          %s697 = sand.u32 %s147, 1
          %s698 = sand.u32 %s147, 1
          %s699 = smul.addr %s698, 8
          %s700 = scalar_lea.vmem [#allocation8], %s699
        $region212: #{transformer_forward.18} parent=207 // pred_fallthru
          _
      $region208: #{transformer_forward.18} parent=5 // pred_fallthru
        _
    $region6: #{transformer_forward.18} parent=1 // loop_footer
      %s13 = sadd.s32 1, %s9
    $region7: #{transformer_forward.18} parent=1 // loop_footer_branch
      %8 = sbr.rel target = $region3
    $region8: #{transformer_forward.18} parent=1 // loop_exit
      _

// kernel: transformer_forward.19
$region0: #{transformer_forward.19}
  #allocation0 [shape = 'u32[]', space=smem, size = 0x4, offset = 0x4, fixed_abs, tag = 'smem constant byte address 0x4 - core index']
  #allocation1 [shape = 'u32[144,128]{1,0:T(1,128)}', space=vmem, size = 0x12000, scoped, tag = 'internal scratch']
  #allocation2 [shape = 'f32[32,256]{1,0:T(8,128)}', space=vmem, size = 0x8000, scoped, tag = 'scratch operand']
  %s0 = inlined_call_operand.vmem [shape: bf16[32,256], index: 0, kind: input, shape index: {}]
  %s1 = inlined_call_operand.vmem [shape: bf16[256,256], index: 1, kind: input, shape index: {}]
  %s2 = inlined_call_operand.vmem [shape: f32[1,256], index: 2, kind: input, shape index: {}]
  %s3 = inlined_call_operand.vmem [shape: bf16[32,256], index: 3, kind: input, shape index: {}]
  %s4 = inlined_call_operand.vmem [shape: f32[1,256], index: 4, kind: input, shape index: {}]
  %s5 = inlined_call_operand.vmem [shape: f32[1,256], index: 5, kind: input, shape index: {}]
  %s6 = inlined_call_operand.vmem [shape: bf16[32,256], index: 6, kind: output, shape index: {}]
  %s7 = sld [smem:[#allocation0]]
  $region42: #{transformer_forward.19} parent=0
    _
  %s9 = ssub.s32 1, %s7
  %s10 = scalar_select 0, %s9, %s7
  // Predicated region
  $region2: #{transformer_forward.19} parent=0 // pred_check
    _
  $region3: #{transformer_forward.19} parent=0 // pred_check_branch
    %12 = sbr.rel (0) target = $region5
  $region4: #{transformer_forward.19} parent=0 // pred_region
    _
  $region5: #{transformer_forward.19} parent=0 // pred_fallthru
    _
  // Predicated region
  $region6: #{transformer_forward.19} parent=0 // pred_check
    _
  $region7: #{transformer_forward.19} parent=0 // pred_check_branch
    %14 = sbr.rel (0) target = $region9
  $region8: #{transformer_forward.19} parent=0 // pred_region
    _
  $region9: #{transformer_forward.19} parent=0 // pred_fallthru
    _
  // Predicated region
  $region10: #{transformer_forward.19} parent=0 // pred_check
    _
  $region11: #{transformer_forward.19} parent=0 // pred_check_branch
    %16 = sbr.rel (0) target = $region13
  $region12: #{transformer_forward.19} parent=0 // pred_region
    _
  $region13: #{transformer_forward.19} parent=0 // pred_fallthru
    _
  // Predicated region
  $region14: #{transformer_forward.19} parent=0 // pred_check
    _
  $region15: #{transformer_forward.19} parent=0 // pred_check_branch
    %18 = sbr.rel (0) target = $region17
  $region16: #{transformer_forward.19} parent=0 // pred_region
    _
  $region17: #{transformer_forward.19} parent=0 // pred_fallthru
    _
  // Predicated region
  $region18: #{transformer_forward.19} parent=0 // pred_check
    _
  $region19: #{transformer_forward.19} parent=0 // pred_check_branch
    %20 = sbr.rel (0) target = $region21
  $region20: #{transformer_forward.19} parent=0 // pred_region
    _
  $region21: #{transformer_forward.19} parent=0 // pred_fallthru
    _
  // Predicated region
  $region22: #{transformer_forward.19} parent=0 // pred_check
    _
  $region23: #{transformer_forward.19} parent=0 // pred_check_branch
    %22 = sbr.rel (0) target = $region25
  $region24: #{transformer_forward.19} parent=0 // pred_region
    _
  $region25: #{transformer_forward.19} parent=0 // pred_fallthru
    _
  %p23 = scmp.eq.s32.totalorder 0, 0
  // Predicated region
  $region26: #{transformer_forward.19} parent=0 // pred_check
    %p24 = pneg %p23
  $region27: #{transformer_forward.19} parent=0 // pred_check_branch
    %26 = sbr.rel (%p24) target = $region29
  $region28: #{transformer_forward.19} parent=0 // pred_region
    %27 = vst [vmem:[#allocation2] sm:$0xff] 0.0
    %28 = vst [vmem:[#allocation2 + $0x8] sm:$0xff] 0.0
    %29 = vst [vmem:[#allocation2 + $0x10] sm:$0xff] 0.0
    %30 = vst [vmem:[#allocation2 + $0x18] sm:$0xff] 0.0
    %31 = vst [vmem:[#allocation2 + $0x20] sm:$0xff] 0.0
    %32 = vst [vmem:[#allocation2 + $0x28] sm:$0xff] 0.0
    %33 = vst [vmem:[#allocation2 + $0x30] sm:$0xff] 0.0
    %34 = vst [vmem:[#allocation2 + $0x38] sm:$0xff] 0.0
  $region29: #{transformer_forward.19} parent=0 // pred_fallthru
    _
  %v35 = vld [vmem:[#allocation2] sm:$0xff]
  %v36 = vld [vmem:[#allocation2 + $0x8] sm:$0xff]
  %v37 = vld [vmem:[#allocation2 + $0x10] sm:$0xff]
  %v38 = vld [vmem:[#allocation2 + $0x18] sm:$0xff]
  %v39 = vld [vmem:[#allocation2 + $0x20] sm:$0xff]
  %v40 = vld [vmem:[#allocation2 + $0x28] sm:$0xff]
  %v41 = vld [vmem:[#allocation2 + $0x30] sm:$0xff]
  %v42 = vld [vmem:[#allocation2 + $0x38] sm:$0xff]
  %v43 = vld [vmem:[%s0] sm:$0xff]
  %v44 = vld [vmem:[%s0 + $0x8] sm:$0xff]
  %v45 = vld [vmem:[%s0 + $0x10] sm:$0xff]
  %v46 = vld [vmem:[%s0 + $0x18] sm:$0xff]
  %v47 = vld [vmem:[%s1] sm:$0xff]
  %v48 = vld [vmem:[%s1 + $0x8] sm:$0xff]
  %v49 = vld [vmem:[%s1 + $0x10] sm:$0xff]
  %v50 = vld [vmem:[%s1 + $0x18] sm:$0xff]
  %v51 = vld [vmem:[%s1 + $0x20] sm:$0xff]
  %v52 = vld [vmem:[%s1 + $0x28] sm:$0xff]
  %v53 = vld [vmem:[%s1 + $0x30] sm:$0xff]
  %v54 = vld [vmem:[%s1 + $0x38] sm:$0xff]
  %v55 = vld [vmem:[%s1 + $0x40] sm:$0xff]
  %v56 = vld [vmem:[%s1 + $0x48] sm:$0xff]
  %v57 = vld [vmem:[%s1 + $0x50] sm:$0xff]
  %v58 = vld [vmem:[%s1 + $0x58] sm:$0xff]
  %v59 = vld [vmem:[%s1 + $0x60] sm:$0xff]
  %v60 = vld [vmem:[%s1 + $0x68] sm:$0xff]
  %v61 = vld [vmem:[%s1 + $0x70] sm:$0xff]
  %v62 = vld [vmem:[%s1 + $0x78] sm:$0xff]
  %v63 = vld [vmem:[%s1 + $0x80] sm:$0xff]
  %v64 = vld [vmem:[%s1 + $0x88] sm:$0xff]
  %v65 = vld [vmem:[%s1 + $0x90] sm:$0xff]
  %v66 = vld [vmem:[%s1 + $0x98] sm:$0xff]
  %v67 = vld [vmem:[%s1 + $0xa0] sm:$0xff]
  %v68 = vld [vmem:[%s1 + $0xa8] sm:$0xff]
  %v69 = vld [vmem:[%s1 + $0xb0] sm:$0xff]
  %v70 = vld [vmem:[%s1 + $0xb8] sm:$0xff]
  %v71 = vld [vmem:[%s1 + $0xc0] sm:$0xff]
  %v72 = vld [vmem:[%s1 + $0xc8] sm:$0xff]
  %v73 = vld [vmem:[%s1 + $0xd0] sm:$0xff]
  %v74 = vld [vmem:[%s1 + $0xd8] sm:$0xff]
  %v75 = vld [vmem:[%s1 + $0xe0] sm:$0xff]
  %v76 = vld [vmem:[%s1 + $0xe8] sm:$0xff]
  %v77 = vld [vmem:[%s1 + $0xf0] sm:$0xff]
  %v78 = vld [vmem:[%s1 + $0xf8] sm:$0xff]
  %v83 = vunpack.c.l.b16 %v43
  %v84 = vunpack.c.h.b16 %v43
  %v85 = vunpack.c.l.b16 %v44
  %v86 = vunpack.c.h.b16 %v44
  %v87 = vunpack.c.l.b16 %v45
  %v88 = vunpack.c.h.b16 %v45
  %v89 = vunpack.c.l.b16 %v46
  %v90 = vunpack.c.h.b16 %v46
  %v91 = vpack.c.b16 %v85, %v83
  %v92 = vpack.c.b16 %v86, %v84
  %v93 = vpack.c.b16 %v89, %v87
  %v94 = vpack.c.b16 %v90, %v88
  %v131 = vunpack.c.l.b16 %v47
  %v132 = vunpack.c.h.b16 %v47
  %v133 = vunpack.c.l.b16 %v48
  %v134 = vunpack.c.h.b16 %v48
  %v135 = vunpack.c.l.b16 %v49
  %v136 = vunpack.c.h.b16 %v49
  %v137 = vunpack.c.l.b16 %v50
  %v138 = vunpack.c.h.b16 %v50
  %v139 = vunpack.c.l.b16 %v51
  %v140 = vunpack.c.h.b16 %v51
  %v141 = vunpack.c.l.b16 %v52
  %v142 = vunpack.c.h.b16 %v52
  %v143 = vunpack.c.l.b16 %v53
  %v144 = vunpack.c.h.b16 %v53
  %v145 = vunpack.c.l.b16 %v54
  %v146 = vunpack.c.h.b16 %v54
  %v147 = vunpack.c.l.b16 %v55
  %v148 = vunpack.c.h.b16 %v55
  %v149 = vunpack.c.l.b16 %v56
  %v150 = vunpack.c.h.b16 %v56
  %v151 = vunpack.c.l.b16 %v57
  %v152 = vunpack.c.h.b16 %v57
  %v153 = vunpack.c.l.b16 %v58
  %v154 = vunpack.c.h.b16 %v58
  %v155 = vunpack.c.l.b16 %v59
  %v156 = vunpack.c.h.b16 %v59
  %v157 = vunpack.c.l.b16 %v60
  %v158 = vunpack.c.h.b16 %v60
  %v159 = vunpack.c.l.b16 %v61
  %v160 = vunpack.c.h.b16 %v61
  %v161 = vunpack.c.l.b16 %v62
  %v162 = vunpack.c.h.b16 %v62
  %v163 = vunpack.c.l.b16 %v63
  %v164 = vunpack.c.h.b16 %v63
  %v165 = vunpack.c.l.b16 %v64
  %v166 = vunpack.c.h.b16 %v64
  %v167 = vunpack.c.l.b16 %v65
  %v168 = vunpack.c.h.b16 %v65
  %v169 = vunpack.c.l.b16 %v66
  %v170 = vunpack.c.h.b16 %v66
  %v171 = vunpack.c.l.b16 %v67
  %v172 = vunpack.c.h.b16 %v67
  %v173 = vunpack.c.l.b16 %v68
  %v174 = vunpack.c.h.b16 %v68
  %v175 = vunpack.c.l.b16 %v69
  %v176 = vunpack.c.h.b16 %v69
  %v177 = vunpack.c.l.b16 %v70
  %v178 = vunpack.c.h.b16 %v70
  %v179 = vunpack.c.l.b16 %v71
  %v180 = vunpack.c.h.b16 %v71
  %v181 = vunpack.c.l.b16 %v72
  %v182 = vunpack.c.h.b16 %v72
  %v183 = vunpack.c.l.b16 %v73
  %v184 = vunpack.c.h.b16 %v73
  %v185 = vunpack.c.l.b16 %v74
  %v186 = vunpack.c.h.b16 %v74
  %v187 = vunpack.c.l.b16 %v75
  %v188 = vunpack.c.h.b16 %v75
  %v189 = vunpack.c.l.b16 %v76
  %v190 = vunpack.c.h.b16 %v76
  %v191 = vunpack.c.l.b16 %v77
  %v192 = vunpack.c.h.b16 %v77
  %v193 = vunpack.c.l.b16 %v78
  %v194 = vunpack.c.h.b16 %v78
  %v195 = vpack.c.b16 %v133, %v131
  %v196 = vpack.c.b16 %v134, %v132
  %v197 = vpack.c.b16 %v137, %v135
  %v198 = vpack.c.b16 %v138, %v136
  %v199 = vpack.c.b16 %v141, %v139
  %v200 = vpack.c.b16 %v142, %v140
  %v201 = vpack.c.b16 %v145, %v143
  %v202 = vpack.c.b16 %v146, %v144
  %v203 = vpack.c.b16 %v149, %v147
  %v204 = vpack.c.b16 %v150, %v148
  %v205 = vpack.c.b16 %v153, %v151
  %v206 = vpack.c.b16 %v154, %v152
  %v207 = vpack.c.b16 %v157, %v155
  %v208 = vpack.c.b16 %v158, %v156
  %v209 = vpack.c.b16 %v161, %v159
  %v210 = vpack.c.b16 %v162, %v160
  %v211 = vpack.c.b16 %v165, %v163
  %v212 = vpack.c.b16 %v166, %v164
  %v213 = vpack.c.b16 %v169, %v167
  %v214 = vpack.c.b16 %v170, %v168
  %v215 = vpack.c.b16 %v173, %v171
  %v216 = vpack.c.b16 %v174, %v172
  %v217 = vpack.c.b16 %v177, %v175
  %v218 = vpack.c.b16 %v178, %v176
  %v219 = vpack.c.b16 %v181, %v179
  %v220 = vpack.c.b16 %v182, %v180
  %v221 = vpack.c.b16 %v185, %v183
  %v222 = vpack.c.b16 %v186, %v184
  %v223 = vpack.c.b16 %v189, %v187
  %v224 = vpack.c.b16 %v190, %v188
  %v225 = vpack.c.b16 %v193, %v191
  %v226 = vpack.c.b16 %v194, %v192
  %259 = vmatprep.subr.bf16.mxu0 %v196
  %260 = vmatpush1.bf16.msra.mxu0 %v195
  %261 = vmatprep.subr.bf16.mxu0 %v198
  %262 = vmatpush1.bf16.msra.mxu0 %v197
  %263 = vmatprep.subr.bf16.mxu0 %v200
  %264 = vmatpush1.bf16.msra.mxu0 %v199
  %265 = vmatprep.subr.bf16.mxu0 %v202
  %266 = vmatpush1.bf16.msra.mxu0 %v201
  %267 = vmatprep.subr.bf16.mxu0 %v204
  %268 = vmatpush1.bf16.msra.mxu0 %v203
  %269 = vmatprep.subr.bf16.mxu0 %v206
  %270 = vmatpush1.bf16.msra.mxu0 %v205
  %271 = vmatprep.subr.bf16.mxu0 %v208
  %272 = vmatpush1.bf16.msra.mxu0 %v207
  %273 = vmatprep.subr.bf16.mxu0 %v210
  %274 = vmatpush1.bf16.msra.mxu0 %v209
  %275 = vmatprep.subr.bf16.mxu0 %v212
  %276 = vmatpush1.bf16.msra.mxu0 %v211
  %277 = vmatprep.subr.bf16.mxu0 %v214
  %278 = vmatpush1.bf16.msra.mxu0 %v213
  %279 = vmatprep.subr.bf16.mxu0 %v216
  %280 = vmatpush1.bf16.msra.mxu0 %v215
  %281 = vmatprep.subr.bf16.mxu0 %v218
  %282 = vmatpush1.bf16.msra.mxu0 %v217
  %283 = vmatprep.subr.bf16.mxu0 %v220
  %284 = vmatpush1.bf16.msra.mxu0 %v219
  %285 = vmatprep.subr.bf16.mxu0 %v222
  %286 = vmatpush1.bf16.msra.mxu0 %v221
  %287 = vmatprep.subr.bf16.mxu0 %v224
  %288 = vmatpush1.bf16.msra.mxu0 %v223
  %289 = vmatprep.subr.bf16.mxu0 %v226
  %290 = vmatpush1.bf16.msra.mxu0 %v225
  %291 = vmatprep.mubr.bf16.mxu0 %v92
  %292 = vmatmul.mubr.bf16.gmra.mrb[0].mxu0 %v91
  %v293 = vpop.f32.mrb[0].mxu0
  %v294 = vadd.f32 0.0, %v293
  %v295 = vpop.f32.mrb[0].mxu0
  %v296 = vadd.f32 0.0, %v295
  %v297 = vpop.f32.mrb[0].mxu0
  %v298 = vadd.f32 0.0, %v297
  %v299 = vpop.f32.mrb[0].mxu0
  %v300 = vadd.f32 0.0, %v299
  %301 = vmatprep.mubr.bf16.mxu0 %v94
  %302 = vmatmul.mubr.bf16.gmra.mrb[0].mxu0 %v93
  %v303 = vpop.f32.mrb[0].mxu0
  %v304 = vadd.f32 0.0, %v303
  %v305 = vpop.f32.mrb[0].mxu0
  %v306 = vadd.f32 0.0, %v305
  %v307 = vpop.f32.mrb[0].mxu0
  %v308 = vadd.f32 0.0, %v307
  %v309 = vpop.f32.mrb[0].mxu0
  %v310 = vadd.f32 0.0, %v309
  %311 = vdwg.mxu0
  %v312 = vadd.f32 %v35, %v294
  %v313 = vadd.f32 %v36, %v296
  %v314 = vadd.f32 %v37, %v298
  %v315 = vadd.f32 %v38, %v300
  %v316 = vadd.f32 %v39, %v304
  %v317 = vadd.f32 %v40, %v306
  %v318 = vadd.f32 %v41, %v308
  %v319 = vadd.f32 %v42, %v310
  %320 = vst [vmem:[#allocation2] sm:$0xff] %v312
  %321 = vst [vmem:[#allocation2 + $0x8] sm:$0xff] %v313
  %322 = vst [vmem:[#allocation2 + $0x10] sm:$0xff] %v314
  %323 = vst [vmem:[#allocation2 + $0x18] sm:$0xff] %v315
  %324 = vst [vmem:[#allocation2 + $0x20] sm:$0xff] %v316
  %325 = vst [vmem:[#allocation2 + $0x28] sm:$0xff] %v317
  %326 = vst [vmem:[#allocation2 + $0x30] sm:$0xff] %v318
  %327 = vst [vmem:[#allocation2 + $0x38] sm:$0xff] %v319
  // Predicated region
  $region30: #{transformer_forward.19} parent=0 // pred_check
    %p328 = pneg %p23
  $region31: #{transformer_forward.19} parent=0 // pred_check_branch
    %330 = sbr.rel (%p328) target = $region33
  $region32: #{transformer_forward.19} parent=0 // pred_region
    %v331 = vld [vmem:[#allocation2] sm:$0xff]
    %v332 = vld [vmem:[#allocation2 + $0x8] sm:$0xff]
    %v333 = vld [vmem:[#allocation2 + $0x10] sm:$0xff]
    %v334 = vld [vmem:[#allocation2 + $0x18] sm:$0xff]
    %v335 = vld [vmem:[#allocation2 + $0x20] sm:$0xff]
    %v336 = vld [vmem:[#allocation2 + $0x28] sm:$0xff]
    %v337 = vld [vmem:[#allocation2 + $0x30] sm:$0xff]
    %v338 = vld [vmem:[#allocation2 + $0x38] sm:$0xff]
    %v339 = vld [vmem:[%s2] sm:$0x3]
    %v341 = vlaneseq
    %v342 = vshrl.u32 %v341, 7
    %v343 = vsub.s32 0, %v342
    %v344 = vrot.slane %v339, %v343
    %v345 = vlaneseq
    %v346 = vshrl.u32 %v345, 7
    %v347 = vsub.s32 1, %v346
    %v348 = vrot.slane %v339, %v347
    %v351 = vadd.f32 %v331, %v344
    %v352 = vadd.f32 %v332, %v348
    %v353 = vadd.f32 %v333, %v344
    %v354 = vadd.f32 %v334, %v348
    %v355 = vadd.f32 %v335, %v344
    %v356 = vadd.f32 %v336, %v348
    %v357 = vadd.f32 %v337, %v344
    %v358 = vadd.f32 %v338, %v348
    %v359 = vld [vmem:[%s3] sm:$0xff]
    %v360 = vld [vmem:[%s3 + $0x8] sm:$0xff]
    %v361 = vld [vmem:[%s3 + $0x10] sm:$0xff]
    %v362 = vld [vmem:[%s3 + $0x18] sm:$0xff]
    %v363 = vunpack.c.l.bf16 %v359
    %v364 = vunpack.c.h.bf16 %v359
    %v365 = vunpack.c.l.bf16 %v360
    %v366 = vunpack.c.h.bf16 %v360
    %v367 = vunpack.c.l.bf16 %v361
    %v368 = vunpack.c.h.bf16 %v361
    %v369 = vunpack.c.l.bf16 %v362
    %v370 = vunpack.c.h.bf16 %v362
    %v371 = vadd.f32 %v351, %v363
    %v372 = vadd.f32 %v352, %v364
    %v373 = vadd.f32 %v353, %v365
    %v374 = vadd.f32 %v354, %v366
    %v375 = vadd.f32 %v355, %v367
    %v376 = vadd.f32 %v356, %v368
    %v377 = vadd.f32 %v357, %v369
    %v378 = vadd.f32 %v358, %v370
    %v379 = vadd.f32 %v371, %v372
    %380 = vadd.xlane.f32.xlu0 %v379
    %v381 = vpop.xlane.xlu0 %380
    %v382 = vadd.f32 %v373, %v374
    %383 = vadd.xlane.f32.xlu0 %v382
    %v384 = vpop.xlane.xlu0 %383
    %v385 = vadd.f32 %v375, %v376
    %386 = vadd.xlane.f32.xlu0 %v385
    %v387 = vpop.xlane.xlu0 %386
    %v388 = vadd.f32 %v377, %v378
    %389 = vadd.xlane.f32.xlu0 %v388
    %v390 = vpop.xlane.xlu0 %389
    %v391 = vrcp.pop 256.0
    %v392 = vmul.f32 %v381, %v391
    %v393 = vmul.f32 %v384, %v391
    %v394 = vmul.f32 %v387, %v391
    %v395 = vmul.f32 %v390, %v391
    %v396 = vsub.f32 %v371, %v392
    %v397 = vsub.f32 %v372, %v392
    %v398 = vsub.f32 %v373, %v393
    %v399 = vsub.f32 %v374, %v393
    %v400 = vsub.f32 %v375, %v394
    %v401 = vsub.f32 %v376, %v394
    %v402 = vsub.f32 %v377, %v395
    %v403 = vsub.f32 %v378, %v395
    %v404 = vmul.f32 %v396, %v396
    %v405 = vmul.f32 %v397, %v397
    %v406 = vmul.f32 %v398, %v398
    %v407 = vmul.f32 %v399, %v399
    %v408 = vmul.f32 %v400, %v400
    %v409 = vmul.f32 %v401, %v401
    %v410 = vmul.f32 %v402, %v402
    %v411 = vmul.f32 %v403, %v403
    %v412 = vadd.f32 %v404, %v405
    %413 = vadd.xlane.f32.xlu0 %v412
    %v414 = vpop.xlane.xlu0 %413
    %v415 = vadd.f32 %v406, %v407
    %416 = vadd.xlane.f32.xlu0 %v415
    %v417 = vpop.xlane.xlu0 %416
    %v418 = vadd.f32 %v408, %v409
    %419 = vadd.xlane.f32.xlu0 %v418
    %v420 = vpop.xlane.xlu0 %419
    %v421 = vadd.f32 %v410, %v411
    %422 = vadd.xlane.f32.xlu0 %v421
    %v423 = vpop.xlane.xlu0 %422
    %v424 = vmul.f32 %v414, %v391
    %v425 = vmul.f32 %v417, %v391
    %v426 = vmul.f32 %v420, %v391
    %v427 = vmul.f32 %v423, %v391
    %v428 = vadd.f32 %v424, 1e-05
    %v429 = vadd.f32 %v425, 1e-05
    %v430 = vadd.f32 %v426, 1e-05
    %v431 = vadd.f32 %v427, 1e-05
    %v432 = vrsqrt.pop %v428
    %v433 = vrsqrt.pop %v429
    %v434 = vrsqrt.pop %v430
    %v435 = vrsqrt.pop %v431
    %v436 = vmul.f32 %v396, %v432
    %v437 = vmul.f32 %v397, %v432
    %v438 = vmul.f32 %v398, %v433
    %v439 = vmul.f32 %v399, %v433
    %v440 = vmul.f32 %v400, %v434
    %v441 = vmul.f32 %v401, %v434
    %v442 = vmul.f32 %v402, %v435
    %v443 = vmul.f32 %v403, %v435
    %v444 = vld [vmem:[%s4] sm:$0x3]
    %v446 = vlaneseq
    %v447 = vshrl.u32 %v446, 7
    %v448 = vsub.s32 0, %v447
    %v449 = vrot.slane %v444, %v448
    %v450 = vlaneseq
    %v451 = vshrl.u32 %v450, 7
    %v452 = vsub.s32 1, %v451
    %v453 = vrot.slane %v444, %v452
    %v456 = vmul.f32 %v436, %v449
    %v457 = vmul.f32 %v437, %v453
    %v458 = vmul.f32 %v438, %v449
    %v459 = vmul.f32 %v439, %v453
    %v460 = vmul.f32 %v440, %v449
    %v461 = vmul.f32 %v441, %v453
    %v462 = vmul.f32 %v442, %v449
    %v463 = vmul.f32 %v443, %v453
    %v464 = vld [vmem:[%s5] sm:$0x3]
    %v466 = vlaneseq
    %v467 = vshrl.u32 %v466, 7
    %v468 = vsub.s32 0, %v467
    %v469 = vrot.slane %v464, %v468
    %v470 = vlaneseq
    %v471 = vshrl.u32 %v470, 7
    %v472 = vsub.s32 1, %v471
    %v473 = vrot.slane %v464, %v472
    %v476 = vadd.f32 %v456, %v469
    %v477 = vadd.f32 %v457, %v473
    %v478 = vadd.f32 %v458, %v469
    %v479 = vadd.f32 %v459, %v473
    %v480 = vadd.f32 %v460, %v469
    %v481 = vadd.f32 %v461, %v473
    %v482 = vadd.f32 %v462, %v469
    %v483 = vadd.f32 %v463, %v473
    %v484 = vpack.c.bf16 %v478, %v476
    %v485 = vpack.c.bf16 %v479, %v477
    %v486 = vpack.c.bf16 %v482, %v480
    %v487 = vpack.c.bf16 %v483, %v481
    %v492 = vunpack.c.l.b16 %v484
    %v493 = vunpack.c.l.b16 %v485
    %v494 = vunpack.c.h.b16 %v484
    %v495 = vunpack.c.h.b16 %v485
    %v496 = vunpack.c.l.b16 %v486
    %v497 = vunpack.c.l.b16 %v487
    %v498 = vunpack.c.h.b16 %v486
    %v499 = vunpack.c.h.b16 %v487
    %v500 = vpack.c.b16 %v493, %v492
    %v501 = vpack.c.b16 %v495, %v494
    %v502 = vpack.c.b16 %v497, %v496
    %v503 = vpack.c.b16 %v499, %v498
    %508 = vst [vmem:[%s6] sm:$0xff] %v500
    %509 = vst [vmem:[%s6 + $0x8] sm:$0xff] %v501
    %510 = vst [vmem:[%s6 + $0x10] sm:$0xff] %v502
    %511 = vst [vmem:[%s6 + $0x18] sm:$0xff] %v503
  $region33: #{transformer_forward.19} parent=0 // pred_fallthru
    _
  // Predicated region
  $region34: #{transformer_forward.19} parent=0 // pred_check
    _
  $region35: #{transformer_forward.19} parent=0 // pred_check_branch
    %513 = sbr.rel (0) target = $region37
  $region36: #{transformer_forward.19} parent=0 // pred_region
    _
  $region37: #{transformer_forward.19} parent=0 // pred_fallthru
    _
  // Predicated region
  $region38: #{transformer_forward.19} parent=0 // pred_check
    _
  $region39: #{transformer_forward.19} parent=0 // pred_check_branch
    %515 = sbr.rel (0) target = $region41
  $region40: #{transformer_forward.19} parent=0 // pred_region
    _
  $region41: #{transformer_forward.19} parent=0 // pred_fallthru
    _

// kernel: transformer_forward.20
$region0: #{transformer_forward.20}
  #allocation0 [shape = 'u32[]', space=smem, size = 0x4, offset = 0x4, fixed_abs, tag = 'smem constant byte address 0x4 - core index']
  #allocation1 [shape = 'u32[144,128]{1,0:T(1,128)}', space=vmem, size = 0x12000, scoped, tag = 'internal scratch']
  #allocation2 [shape = 'f32[32,512]{1,0:T(8,128)}', space=vmem, size = 0x10000, scoped, tag = 'scratch operand']
  %s0 = inlined_call_operand.vmem [shape: bf16[32,256], index: 0, kind: input, shape index: {}]
  %s1 = inlined_call_operand.vmem [shape: bf16[256,512], index: 1, kind: input, shape index: {}]
  %s2 = inlined_call_operand.vmem [shape: f32[1,512], index: 2, kind: input, shape index: {}]
  %s3 = inlined_call_operand.vmem [shape: bf16[32,512], index: 3, kind: output, shape index: {}]
  %s4 = sld [smem:[#allocation0]]
  $region30: #{transformer_forward.20} parent=0
    _
  %s6 = ssub.s32 1, %s4
  %s7 = scalar_select 0, %s6, %s4
  // Predicated region
  $region2: #{transformer_forward.20} parent=0 // pred_check
    _
  $region3: #{transformer_forward.20} parent=0 // pred_check_branch
    %9 = sbr.rel (0) target = $region5
  $region4: #{transformer_forward.20} parent=0 // pred_region
    _
  $region5: #{transformer_forward.20} parent=0 // pred_fallthru
    _
  // Predicated region
  $region6: #{transformer_forward.20} parent=0 // pred_check
    _
  $region7: #{transformer_forward.20} parent=0 // pred_check_branch
    %11 = sbr.rel (0) target = $region9
  $region8: #{transformer_forward.20} parent=0 // pred_region
    _
  $region9: #{transformer_forward.20} parent=0 // pred_fallthru
    _
  // Predicated region
  $region10: #{transformer_forward.20} parent=0 // pred_check
    _
  $region11: #{transformer_forward.20} parent=0 // pred_check_branch
    %13 = sbr.rel (0) target = $region13
  $region12: #{transformer_forward.20} parent=0 // pred_region
    _
  $region13: #{transformer_forward.20} parent=0 // pred_fallthru
    _
  %p14 = scmp.eq.s32.totalorder 0, 0
  // Predicated region
  $region14: #{transformer_forward.20} parent=0 // pred_check
    %p15 = pneg %p14
  $region15: #{transformer_forward.20} parent=0 // pred_check_branch
    %17 = sbr.rel (%p15) target = $region17
  $region16: #{transformer_forward.20} parent=0 // pred_region
    %18 = vst [vmem:[#allocation2] sm:$0xff] 0.0
    %19 = vst [vmem:[#allocation2 + $0x8] sm:$0xff] 0.0
    %20 = vst [vmem:[#allocation2 + $0x10] sm:$0xff] 0.0
    %21 = vst [vmem:[#allocation2 + $0x18] sm:$0xff] 0.0
    %22 = vst [vmem:[#allocation2 + $0x20] sm:$0xff] 0.0
    %23 = vst [vmem:[#allocation2 + $0x28] sm:$0xff] 0.0
    %24 = vst [vmem:[#allocation2 + $0x30] sm:$0xff] 0.0
    %25 = vst [vmem:[#allocation2 + $0x38] sm:$0xff] 0.0
    %26 = vst [vmem:[#allocation2 + $0x40] sm:$0xff] 0.0
    %27 = vst [vmem:[#allocation2 + $0x48] sm:$0xff] 0.0
    %28 = vst [vmem:[#allocation2 + $0x50] sm:$0xff] 0.0
    %29 = vst [vmem:[#allocation2 + $0x58] sm:$0xff] 0.0
    %30 = vst [vmem:[#allocation2 + $0x60] sm:$0xff] 0.0
    %31 = vst [vmem:[#allocation2 + $0x68] sm:$0xff] 0.0
    %32 = vst [vmem:[#allocation2 + $0x70] sm:$0xff] 0.0
    %33 = vst [vmem:[#allocation2 + $0x78] sm:$0xff] 0.0
  $region17: #{transformer_forward.20} parent=0 // pred_fallthru
    _
  %v34 = vld [vmem:[#allocation2] sm:$0xff]
  %v35 = vld [vmem:[#allocation2 + $0x8] sm:$0xff]
  %v36 = vld [vmem:[#allocation2 + $0x10] sm:$0xff]
  %v37 = vld [vmem:[#allocation2 + $0x18] sm:$0xff]
  %v38 = vld [vmem:[#allocation2 + $0x20] sm:$0xff]
  %v39 = vld [vmem:[#allocation2 + $0x28] sm:$0xff]
  %v40 = vld [vmem:[#allocation2 + $0x30] sm:$0xff]
  %v41 = vld [vmem:[#allocation2 + $0x38] sm:$0xff]
  %v42 = vld [vmem:[#allocation2 + $0x40] sm:$0xff]
  %v43 = vld [vmem:[#allocation2 + $0x48] sm:$0xff]
  %v44 = vld [vmem:[#allocation2 + $0x50] sm:$0xff]
  %v45 = vld [vmem:[#allocation2 + $0x58] sm:$0xff]
  %v46 = vld [vmem:[#allocation2 + $0x60] sm:$0xff]
  %v47 = vld [vmem:[#allocation2 + $0x68] sm:$0xff]
  %v48 = vld [vmem:[#allocation2 + $0x70] sm:$0xff]
  %v49 = vld [vmem:[#allocation2 + $0x78] sm:$0xff]
  %v50 = vld [vmem:[%s0] sm:$0xff]
  %v51 = vld [vmem:[%s0 + $0x8] sm:$0xff]
  %v52 = vld [vmem:[%s0 + $0x10] sm:$0xff]
  %v53 = vld [vmem:[%s0 + $0x18] sm:$0xff]
  %v54 = vld [vmem:[%s1] sm:$0xff]
  %v55 = vld [vmem:[%s1 + $0x8] sm:$0xff]
  %v56 = vld [vmem:[%s1 + $0x10] sm:$0xff]
  %v57 = vld [vmem:[%s1 + $0x18] sm:$0xff]
  %v58 = vld [vmem:[%s1 + $0x20] sm:$0xff]
  %v59 = vld [vmem:[%s1 + $0x28] sm:$0xff]
  %v60 = vld [vmem:[%s1 + $0x30] sm:$0xff]
  %v61 = vld [vmem:[%s1 + $0x38] sm:$0xff]
  %v62 = vld [vmem:[%s1 + $0x40] sm:$0xff]
  %v63 = vld [vmem:[%s1 + $0x48] sm:$0xff]
  %v64 = vld [vmem:[%s1 + $0x50] sm:$0xff]
  %v65 = vld [vmem:[%s1 + $0x58] sm:$0xff]
  %v66 = vld [vmem:[%s1 + $0x60] sm:$0xff]
  %v67 = vld [vmem:[%s1 + $0x68] sm:$0xff]
  %v68 = vld [vmem:[%s1 + $0x70] sm:$0xff]
  %v69 = vld [vmem:[%s1 + $0x78] sm:$0xff]
  %v70 = vld [vmem:[%s1 + $0x80] sm:$0xff]
  %v71 = vld [vmem:[%s1 + $0x88] sm:$0xff]
  %v72 = vld [vmem:[%s1 + $0x90] sm:$0xff]
  %v73 = vld [vmem:[%s1 + $0x98] sm:$0xff]
  %v74 = vld [vmem:[%s1 + $0xa0] sm:$0xff]
  %v75 = vld [vmem:[%s1 + $0xa8] sm:$0xff]
  %v76 = vld [vmem:[%s1 + $0xb0] sm:$0xff]
  %v77 = vld [vmem:[%s1 + $0xb8] sm:$0xff]
  %v78 = vld [vmem:[%s1 + $0xc0] sm:$0xff]
  %v79 = vld [vmem:[%s1 + $0xc8] sm:$0xff]
  %v80 = vld [vmem:[%s1 + $0xd0] sm:$0xff]
  %v81 = vld [vmem:[%s1 + $0xd8] sm:$0xff]
  %v82 = vld [vmem:[%s1 + $0xe0] sm:$0xff]
  %v83 = vld [vmem:[%s1 + $0xe8] sm:$0xff]
  %v84 = vld [vmem:[%s1 + $0xf0] sm:$0xff]
  %v85 = vld [vmem:[%s1 + $0xf8] sm:$0xff]
  %v86 = vld [vmem:[%s1 + $0x100] sm:$0xff]
  %v87 = vld [vmem:[%s1 + $0x108] sm:$0xff]
  %v88 = vld [vmem:[%s1 + $0x110] sm:$0xff]
  %v89 = vld [vmem:[%s1 + $0x118] sm:$0xff]
  %v90 = vld [vmem:[%s1 + $0x120] sm:$0xff]
  %v91 = vld [vmem:[%s1 + $0x128] sm:$0xff]
  %v92 = vld [vmem:[%s1 + $0x130] sm:$0xff]
  %v93 = vld [vmem:[%s1 + $0x138] sm:$0xff]
  %v94 = vld [vmem:[%s1 + $0x140] sm:$0xff]
  %v95 = vld [vmem:[%s1 + $0x148] sm:$0xff]
  %v96 = vld [vmem:[%s1 + $0x150] sm:$0xff]
  %v97 = vld [vmem:[%s1 + $0x158] sm:$0xff]
  %v98 = vld [vmem:[%s1 + $0x160] sm:$0xff]
  %v99 = vld [vmem:[%s1 + $0x168] sm:$0xff]
  %v100 = vld [vmem:[%s1 + $0x170] sm:$0xff]
  %v101 = vld [vmem:[%s1 + $0x178] sm:$0xff]
  %v102 = vld [vmem:[%s1 + $0x180] sm:$0xff]
  %v103 = vld [vmem:[%s1 + $0x188] sm:$0xff]
  %v104 = vld [vmem:[%s1 + $0x190] sm:$0xff]
  %v105 = vld [vmem:[%s1 + $0x198] sm:$0xff]
  %v106 = vld [vmem:[%s1 + $0x1a0] sm:$0xff]
  %v107 = vld [vmem:[%s1 + $0x1a8] sm:$0xff]
  %v108 = vld [vmem:[%s1 + $0x1b0] sm:$0xff]
  %v109 = vld [vmem:[%s1 + $0x1b8] sm:$0xff]
  %v110 = vld [vmem:[%s1 + $0x1c0] sm:$0xff]
  %v111 = vld [vmem:[%s1 + $0x1c8] sm:$0xff]
  %v112 = vld [vmem:[%s1 + $0x1d0] sm:$0xff]
  %v113 = vld [vmem:[%s1 + $0x1d8] sm:$0xff]
  %v114 = vld [vmem:[%s1 + $0x1e0] sm:$0xff]
  %v115 = vld [vmem:[%s1 + $0x1e8] sm:$0xff]
  %v116 = vld [vmem:[%s1 + $0x1f0] sm:$0xff]
  %v117 = vld [vmem:[%s1 + $0x1f8] sm:$0xff]
  %v122 = vunpack.c.l.b16 %v50
  %v123 = vunpack.c.h.b16 %v50
  %v124 = vunpack.c.l.b16 %v51
  %v125 = vunpack.c.h.b16 %v51
  %v126 = vunpack.c.l.b16 %v52
  %v127 = vunpack.c.h.b16 %v52
  %v128 = vunpack.c.l.b16 %v53
  %v129 = vunpack.c.h.b16 %v53
  %v130 = vpack.c.b16 %v124, %v122
  %v131 = vpack.c.b16 %v125, %v123
  %v132 = vpack.c.b16 %v128, %v126
  %v133 = vpack.c.b16 %v129, %v127
  %v202 = vunpack.c.l.b16 %v54
  %v203 = vunpack.c.h.b16 %v54
  %v204 = vunpack.c.l.b16 %v55
  %v205 = vunpack.c.h.b16 %v55
  %v206 = vunpack.c.l.b16 %v56
  %v207 = vunpack.c.h.b16 %v56
  %v208 = vunpack.c.l.b16 %v57
  %v209 = vunpack.c.h.b16 %v57
  %v210 = vunpack.c.l.b16 %v58
  %v211 = vunpack.c.h.b16 %v58
  %v212 = vunpack.c.l.b16 %v59
  %v213 = vunpack.c.h.b16 %v59
  %v214 = vunpack.c.l.b16 %v60
  %v215 = vunpack.c.h.b16 %v60
  %v216 = vunpack.c.l.b16 %v61
  %v217 = vunpack.c.h.b16 %v61
  %v218 = vunpack.c.l.b16 %v62
  %v219 = vunpack.c.h.b16 %v62
  %v220 = vunpack.c.l.b16 %v63
  %v221 = vunpack.c.h.b16 %v63
  %v222 = vunpack.c.l.b16 %v64
  %v223 = vunpack.c.h.b16 %v64
  %v224 = vunpack.c.l.b16 %v65
  %v225 = vunpack.c.h.b16 %v65
  %v226 = vunpack.c.l.b16 %v66
  %v227 = vunpack.c.h.b16 %v66
  %v228 = vunpack.c.l.b16 %v67
  %v229 = vunpack.c.h.b16 %v67
  %v230 = vunpack.c.l.b16 %v68
  %v231 = vunpack.c.h.b16 %v68
  %v232 = vunpack.c.l.b16 %v69
  %v233 = vunpack.c.h.b16 %v69
  %v234 = vunpack.c.l.b16 %v70
  %v235 = vunpack.c.h.b16 %v70
  %v236 = vunpack.c.l.b16 %v71
  %v237 = vunpack.c.h.b16 %v71
  %v238 = vunpack.c.l.b16 %v72
  %v239 = vunpack.c.h.b16 %v72
  %v240 = vunpack.c.l.b16 %v73
  %v241 = vunpack.c.h.b16 %v73
  %v242 = vunpack.c.l.b16 %v74
  %v243 = vunpack.c.h.b16 %v74
  %v244 = vunpack.c.l.b16 %v75
  %v245 = vunpack.c.h.b16 %v75
  %v246 = vunpack.c.l.b16 %v76
  %v247 = vunpack.c.h.b16 %v76
  %v248 = vunpack.c.l.b16 %v77
  %v249 = vunpack.c.h.b16 %v77
  %v250 = vunpack.c.l.b16 %v78
  %v251 = vunpack.c.h.b16 %v78
  %v252 = vunpack.c.l.b16 %v79
  %v253 = vunpack.c.h.b16 %v79
  %v254 = vunpack.c.l.b16 %v80
  %v255 = vunpack.c.h.b16 %v80
  %v256 = vunpack.c.l.b16 %v81
  %v257 = vunpack.c.h.b16 %v81
  %v258 = vunpack.c.l.b16 %v82
  %v259 = vunpack.c.h.b16 %v82
  %v260 = vunpack.c.l.b16 %v83
  %v261 = vunpack.c.h.b16 %v83
  %v262 = vunpack.c.l.b16 %v84
  %v263 = vunpack.c.h.b16 %v84
  %v264 = vunpack.c.l.b16 %v85
  %v265 = vunpack.c.h.b16 %v85
  %v266 = vunpack.c.l.b16 %v86
  %v267 = vunpack.c.h.b16 %v86
  %v268 = vunpack.c.l.b16 %v87
  %v269 = vunpack.c.h.b16 %v87
  %v270 = vunpack.c.l.b16 %v88
  %v271 = vunpack.c.h.b16 %v88
  %v272 = vunpack.c.l.b16 %v89
  %v273 = vunpack.c.h.b16 %v89
  %v274 = vunpack.c.l.b16 %v90
  %v275 = vunpack.c.h.b16 %v90
  %v276 = vunpack.c.l.b16 %v91
  %v277 = vunpack.c.h.b16 %v91
  %v278 = vunpack.c.l.b16 %v92
  %v279 = vunpack.c.h.b16 %v92
  %v280 = vunpack.c.l.b16 %v93
  %v281 = vunpack.c.h.b16 %v93
  %v282 = vunpack.c.l.b16 %v94
  %v283 = vunpack.c.h.b16 %v94
  %v284 = vunpack.c.l.b16 %v95
  %v285 = vunpack.c.h.b16 %v95
  %v286 = vunpack.c.l.b16 %v96
  %v287 = vunpack.c.h.b16 %v96
  %v288 = vunpack.c.l.b16 %v97
  %v289 = vunpack.c.h.b16 %v97
  %v290 = vunpack.c.l.b16 %v98
  %v291 = vunpack.c.h.b16 %v98
  %v292 = vunpack.c.l.b16 %v99
  %v293 = vunpack.c.h.b16 %v99
  %v294 = vunpack.c.l.b16 %v100
  %v295 = vunpack.c.h.b16 %v100
  %v296 = vunpack.c.l.b16 %v101
  %v297 = vunpack.c.h.b16 %v101
  %v298 = vunpack.c.l.b16 %v102
  %v299 = vunpack.c.h.b16 %v102
  %v300 = vunpack.c.l.b16 %v103
  %v301 = vunpack.c.h.b16 %v103
  %v302 = vunpack.c.l.b16 %v104
  %v303 = vunpack.c.h.b16 %v104
  %v304 = vunpack.c.l.b16 %v105
  %v305 = vunpack.c.h.b16 %v105
  %v306 = vunpack.c.l.b16 %v106
  %v307 = vunpack.c.h.b16 %v106
  %v308 = vunpack.c.l.b16 %v107
  %v309 = vunpack.c.h.b16 %v107
  %v310 = vunpack.c.l.b16 %v108
  %v311 = vunpack.c.h.b16 %v108
  %v312 = vunpack.c.l.b16 %v109
  %v313 = vunpack.c.h.b16 %v109
  %v314 = vunpack.c.l.b16 %v110
  %v315 = vunpack.c.h.b16 %v110
  %v316 = vunpack.c.l.b16 %v111
  %v317 = vunpack.c.h.b16 %v111
  %v318 = vunpack.c.l.b16 %v112
  %v319 = vunpack.c.h.b16 %v112
  %v320 = vunpack.c.l.b16 %v113
  %v321 = vunpack.c.h.b16 %v113
  %v322 = vunpack.c.l.b16 %v114
  %v323 = vunpack.c.h.b16 %v114
  %v324 = vunpack.c.l.b16 %v115
  %v325 = vunpack.c.h.b16 %v115
  %v326 = vunpack.c.l.b16 %v116
  %v327 = vunpack.c.h.b16 %v116
  %v328 = vunpack.c.l.b16 %v117
  %v329 = vunpack.c.h.b16 %v117
  %v330 = vpack.c.b16 %v206, %v202
  %v331 = vpack.c.b16 %v207, %v203
  %v332 = vpack.c.b16 %v208, %v204
  %v333 = vpack.c.b16 %v209, %v205
  %v334 = vpack.c.b16 %v214, %v210
  %v335 = vpack.c.b16 %v215, %v211
  %v336 = vpack.c.b16 %v216, %v212
  %v337 = vpack.c.b16 %v217, %v213
  %v338 = vpack.c.b16 %v222, %v218
  %v339 = vpack.c.b16 %v223, %v219
  %v340 = vpack.c.b16 %v224, %v220
  %v341 = vpack.c.b16 %v225, %v221
  %v342 = vpack.c.b16 %v230, %v226
  %v343 = vpack.c.b16 %v231, %v227
  %v344 = vpack.c.b16 %v232, %v228
  %v345 = vpack.c.b16 %v233, %v229
  %v346 = vpack.c.b16 %v238, %v234
  %v347 = vpack.c.b16 %v239, %v235
  %v348 = vpack.c.b16 %v240, %v236
  %v349 = vpack.c.b16 %v241, %v237
  %v350 = vpack.c.b16 %v246, %v242
  %v351 = vpack.c.b16 %v247, %v243
  %v352 = vpack.c.b16 %v248, %v244
  %v353 = vpack.c.b16 %v249, %v245
  %v354 = vpack.c.b16 %v254, %v250
  %v355 = vpack.c.b16 %v255, %v251
  %v356 = vpack.c.b16 %v256, %v252
  %v357 = vpack.c.b16 %v257, %v253
  %v358 = vpack.c.b16 %v262, %v258
  %v359 = vpack.c.b16 %v263, %v259
  %v360 = vpack.c.b16 %v264, %v260
  %v361 = vpack.c.b16 %v265, %v261
  %v362 = vpack.c.b16 %v270, %v266
  %v363 = vpack.c.b16 %v271, %v267
  %v364 = vpack.c.b16 %v272, %v268
  %v365 = vpack.c.b16 %v273, %v269
  %v366 = vpack.c.b16 %v278, %v274
  %v367 = vpack.c.b16 %v279, %v275
  %v368 = vpack.c.b16 %v280, %v276
  %v369 = vpack.c.b16 %v281, %v277
  %v370 = vpack.c.b16 %v286, %v282
  %v371 = vpack.c.b16 %v287, %v283
  %v372 = vpack.c.b16 %v288, %v284
  %v373 = vpack.c.b16 %v289, %v285
  %v374 = vpack.c.b16 %v294, %v290
  %v375 = vpack.c.b16 %v295, %v291
  %v376 = vpack.c.b16 %v296, %v292
  %v377 = vpack.c.b16 %v297, %v293
  %v378 = vpack.c.b16 %v302, %v298
  %v379 = vpack.c.b16 %v303, %v299
  %v380 = vpack.c.b16 %v304, %v300
  %v381 = vpack.c.b16 %v305, %v301
  %v382 = vpack.c.b16 %v310, %v306
  %v383 = vpack.c.b16 %v311, %v307
  %v384 = vpack.c.b16 %v312, %v308
  %v385 = vpack.c.b16 %v313, %v309
  %v386 = vpack.c.b16 %v318, %v314
  %v387 = vpack.c.b16 %v319, %v315
  %v388 = vpack.c.b16 %v320, %v316
  %v389 = vpack.c.b16 %v321, %v317
  %v390 = vpack.c.b16 %v326, %v322
  %v391 = vpack.c.b16 %v327, %v323
  %v392 = vpack.c.b16 %v328, %v324
  %v393 = vpack.c.b16 %v329, %v325
  %458 = vmatprep.subr.bf16.mxu0 %v331
  %459 = vmatpush1.bf16.msra.mxu0 %v330
  %460 = vmatprep.subr.bf16.mxu0 %v335
  %461 = vmatpush1.bf16.msra.mxu0 %v334
  %462 = vmatprep.subr.bf16.mxu0 %v339
  %463 = vmatpush1.bf16.msra.mxu0 %v338
  %464 = vmatprep.subr.bf16.mxu0 %v343
  %465 = vmatpush1.bf16.msra.mxu0 %v342
  %466 = vmatprep.subr.bf16.mxu0 %v347
  %467 = vmatpush1.bf16.msra.mxu0 %v346
  %468 = vmatprep.subr.bf16.mxu0 %v351
  %469 = vmatpush1.bf16.msra.mxu0 %v350
  %470 = vmatprep.subr.bf16.mxu0 %v355
  %471 = vmatpush1.bf16.msra.mxu0 %v354
  %472 = vmatprep.subr.bf16.mxu0 %v359
  %473 = vmatpush1.bf16.msra.mxu0 %v358
  %474 = vmatprep.subr.bf16.mxu0 %v363
  %475 = vmatpush1.bf16.msra.mxu0 %v362
  %476 = vmatprep.subr.bf16.mxu0 %v367
  %477 = vmatpush1.bf16.msra.mxu0 %v366
  %478 = vmatprep.subr.bf16.mxu0 %v371
  %479 = vmatpush1.bf16.msra.mxu0 %v370
  %480 = vmatprep.subr.bf16.mxu0 %v375
  %481 = vmatpush1.bf16.msra.mxu0 %v374
  %482 = vmatprep.subr.bf16.mxu0 %v379
  %483 = vmatpush1.bf16.msra.mxu0 %v378
  %484 = vmatprep.subr.bf16.mxu0 %v383
  %485 = vmatpush1.bf16.msra.mxu0 %v382
  %486 = vmatprep.subr.bf16.mxu0 %v387
  %487 = vmatpush1.bf16.msra.mxu0 %v386
  %488 = vmatprep.subr.bf16.mxu0 %v391
  %489 = vmatpush1.bf16.msra.mxu0 %v390
  %490 = vmatprep.mubr.bf16.mxu0 %v131
  %491 = vmatmul.mubr.bf16.gmra.mrb[0].mxu0 %v130
  %v492 = vpop.f32.mrb[0].mxu0
  %v493 = vadd.f32 0.0, %v492
  %v494 = vpop.f32.mrb[0].mxu0
  %v495 = vadd.f32 0.0, %v494
  %v496 = vpop.f32.mrb[0].mxu0
  %v497 = vadd.f32 0.0, %v496
  %v498 = vpop.f32.mrb[0].mxu0
  %v499 = vadd.f32 0.0, %v498
  %500 = vmatprep.mubr.bf16.mxu0 %v133
  %501 = vmatmul.mubr.bf16.gmra.mrb[0].mxu0 %v132
  %v502 = vpop.f32.mrb[0].mxu0
  %v503 = vadd.f32 0.0, %v502
  %v504 = vpop.f32.mrb[0].mxu0
  %v505 = vadd.f32 0.0, %v504
  %v506 = vpop.f32.mrb[0].mxu0
  %v507 = vadd.f32 0.0, %v506
  %v508 = vpop.f32.mrb[0].mxu0
  %v509 = vadd.f32 0.0, %v508
  %510 = vdwg.mxu0
  %511 = vmatprep.subr.bf16.mxu0 %v333
  %512 = vmatpush1.bf16.msra.mxu0 %v332
  %513 = vmatprep.subr.bf16.mxu0 %v337
  %514 = vmatpush1.bf16.msra.mxu0 %v336
  %515 = vmatprep.subr.bf16.mxu0 %v341
  %516 = vmatpush1.bf16.msra.mxu0 %v340
  %517 = vmatprep.subr.bf16.mxu0 %v345
  %518 = vmatpush1.bf16.msra.mxu0 %v344
  %519 = vmatprep.subr.bf16.mxu0 %v349
  %520 = vmatpush1.bf16.msra.mxu0 %v348
  %521 = vmatprep.subr.bf16.mxu0 %v353
  %522 = vmatpush1.bf16.msra.mxu0 %v352
  %523 = vmatprep.subr.bf16.mxu0 %v357
  %524 = vmatpush1.bf16.msra.mxu0 %v356
  %525 = vmatprep.subr.bf16.mxu0 %v361
  %526 = vmatpush1.bf16.msra.mxu0 %v360
  %527 = vmatprep.subr.bf16.mxu0 %v365
  %528 = vmatpush1.bf16.msra.mxu0 %v364
  %529 = vmatprep.subr.bf16.mxu0 %v369
  %530 = vmatpush1.bf16.msra.mxu0 %v368
  %531 = vmatprep.subr.bf16.mxu0 %v373
  %532 = vmatpush1.bf16.msra.mxu0 %v372
  %533 = vmatprep.subr.bf16.mxu0 %v377
  %534 = vmatpush1.bf16.msra.mxu0 %v376
  %535 = vmatprep.subr.bf16.mxu0 %v381
  %536 = vmatpush1.bf16.msra.mxu0 %v380
  %537 = vmatprep.subr.bf16.mxu0 %v385
  %538 = vmatpush1.bf16.msra.mxu0 %v384
  %539 = vmatprep.subr.bf16.mxu0 %v389
  %540 = vmatpush1.bf16.msra.mxu0 %v388
  %541 = vmatprep.subr.bf16.mxu0 %v393
  %542 = vmatpush1.bf16.msra.mxu0 %v392
  %543 = vmatprep.mubr.bf16.mxu0 %v131
  %544 = vmatmul.mubr.bf16.gmra.mrb[0].mxu0 %v130
  %v545 = vpop.f32.mrb[0].mxu0
  %v546 = vadd.f32 0.0, %v545
  %v547 = vpop.f32.mrb[0].mxu0
  %v548 = vadd.f32 0.0, %v547
  %v549 = vpop.f32.mrb[0].mxu0
  %v550 = vadd.f32 0.0, %v549
  %v551 = vpop.f32.mrb[0].mxu0
  %v552 = vadd.f32 0.0, %v551
  %553 = vmatprep.mubr.bf16.mxu0 %v133
  %554 = vmatmul.mubr.bf16.gmra.mrb[0].mxu0 %v132
  %v555 = vpop.f32.mrb[0].mxu0
  %v556 = vadd.f32 0.0, %v555
  %v557 = vpop.f32.mrb[0].mxu0
  %v558 = vadd.f32 0.0, %v557
  %v559 = vpop.f32.mrb[0].mxu0
  %v560 = vadd.f32 0.0, %v559
  %v561 = vpop.f32.mrb[0].mxu0
  %v562 = vadd.f32 0.0, %v561
  %563 = vdwg.mxu0
  %v564 = vadd.f32 %v34, %v493
  %v565 = vadd.f32 %v35, %v495
  %v566 = vadd.f32 %v36, %v546
  %v567 = vadd.f32 %v37, %v548
  %v568 = vadd.f32 %v38, %v497
  %v569 = vadd.f32 %v39, %v499
  %v570 = vadd.f32 %v40, %v550
  %v571 = vadd.f32 %v41, %v552
  %v572 = vadd.f32 %v42, %v503
  %v573 = vadd.f32 %v43, %v505
  %v574 = vadd.f32 %v44, %v556
  %v575 = vadd.f32 %v45, %v558
  %v576 = vadd.f32 %v46, %v507
  %v577 = vadd.f32 %v47, %v509
  %v578 = vadd.f32 %v48, %v560
  %v579 = vadd.f32 %v49, %v562
  %580 = vst [vmem:[#allocation2] sm:$0xff] %v564
  %581 = vst [vmem:[#allocation2 + $0x8] sm:$0xff] %v565
  %582 = vst [vmem:[#allocation2 + $0x10] sm:$0xff] %v566
  %583 = vst [vmem:[#allocation2 + $0x18] sm:$0xff] %v567
  %584 = vst [vmem:[#allocation2 + $0x20] sm:$0xff] %v568
  %585 = vst [vmem:[#allocation2 + $0x28] sm:$0xff] %v569
  %586 = vst [vmem:[#allocation2 + $0x30] sm:$0xff] %v570
  %587 = vst [vmem:[#allocation2 + $0x38] sm:$0xff] %v571
  %588 = vst [vmem:[#allocation2 + $0x40] sm:$0xff] %v572
  %589 = vst [vmem:[#allocation2 + $0x48] sm:$0xff] %v573
  %590 = vst [vmem:[#allocation2 + $0x50] sm:$0xff] %v574
  %591 = vst [vmem:[#allocation2 + $0x58] sm:$0xff] %v575
  %592 = vst [vmem:[#allocation2 + $0x60] sm:$0xff] %v576
  %593 = vst [vmem:[#allocation2 + $0x68] sm:$0xff] %v577
  %594 = vst [vmem:[#allocation2 + $0x70] sm:$0xff] %v578
  %595 = vst [vmem:[#allocation2 + $0x78] sm:$0xff] %v579
  // Predicated region
  $region18: #{transformer_forward.20} parent=0 // pred_check
    %p596 = pneg %p14
  $region19: #{transformer_forward.20} parent=0 // pred_check_branch
    %598 = sbr.rel (%p596) target = $region21
  $region20: #{transformer_forward.20} parent=0 // pred_region
    %v599 = vld [vmem:[#allocation2] sm:$0xff]
    %v600 = vld [vmem:[#allocation2 + $0x8] sm:$0xff]
    %v601 = vld [vmem:[#allocation2 + $0x10] sm:$0xff]
    %v602 = vld [vmem:[#allocation2 + $0x18] sm:$0xff]
    %v603 = vld [vmem:[#allocation2 + $0x20] sm:$0xff]
    %v604 = vld [vmem:[#allocation2 + $0x28] sm:$0xff]
    %v605 = vld [vmem:[#allocation2 + $0x30] sm:$0xff]
    %v606 = vld [vmem:[#allocation2 + $0x38] sm:$0xff]
    %v607 = vld [vmem:[#allocation2 + $0x40] sm:$0xff]
    %v608 = vld [vmem:[#allocation2 + $0x48] sm:$0xff]
    %v609 = vld [vmem:[#allocation2 + $0x50] sm:$0xff]
    %v610 = vld [vmem:[#allocation2 + $0x58] sm:$0xff]
    %v611 = vld [vmem:[#allocation2 + $0x60] sm:$0xff]
    %v612 = vld [vmem:[#allocation2 + $0x68] sm:$0xff]
    %v613 = vld [vmem:[#allocation2 + $0x70] sm:$0xff]
    %v614 = vld [vmem:[#allocation2 + $0x78] sm:$0xff]
    %v615 = vld [vmem:[%s2] sm:$0xf]
    %v617 = vlaneseq
    %v618 = vshrl.u32 %v617, 7
    %v619 = vsub.s32 0, %v618
    %v620 = vrot.slane %v615, %v619
    %v621 = vlaneseq
    %v622 = vshrl.u32 %v621, 7
    %v623 = vsub.s32 1, %v622
    %v624 = vrot.slane %v615, %v623
    %v625 = vlaneseq
    %v626 = vshrl.u32 %v625, 7
    %v627 = vsub.s32 2, %v626
    %v628 = vrot.slane %v615, %v627
    %v629 = vlaneseq
    %v630 = vshrl.u32 %v629, 7
    %v631 = vsub.s32 3, %v630
    %v632 = vrot.slane %v615, %v631
    %v637 = vadd.f32 %v599, %v620
    %v638 = vadd.f32 %v600, %v624
    %v639 = vadd.f32 %v601, %v628
    %v640 = vadd.f32 %v602, %v632
    %v641 = vadd.f32 %v603, %v620
    %v642 = vadd.f32 %v604, %v624
    %v643 = vadd.f32 %v605, %v628
    %v644 = vadd.f32 %v606, %v632
    %v645 = vadd.f32 %v607, %v620
    %v646 = vadd.f32 %v608, %v624
    %v647 = vadd.f32 %v609, %v628
    %v648 = vadd.f32 %v610, %v632
    %v649 = vadd.f32 %v611, %v620
    %v650 = vadd.f32 %v612, %v624
    %v651 = vadd.f32 %v613, %v628
    %v652 = vadd.f32 %v614, %v632
    %v653 = vmax.f32 %v637, 0.0
    %v654 = vmax.f32 %v638, 0.0
    %v655 = vmax.f32 %v639, 0.0
    %v656 = vmax.f32 %v640, 0.0
    %v657 = vmax.f32 %v641, 0.0
    %v658 = vmax.f32 %v642, 0.0
    %v659 = vmax.f32 %v643, 0.0
    %v660 = vmax.f32 %v644, 0.0
    %v661 = vmax.f32 %v645, 0.0
    %v662 = vmax.f32 %v646, 0.0
    %v663 = vmax.f32 %v647, 0.0
    %v664 = vmax.f32 %v648, 0.0
    %v665 = vmax.f32 %v649, 0.0
    %v666 = vmax.f32 %v650, 0.0
    %v667 = vmax.f32 %v651, 0.0
    %v668 = vmax.f32 %v652, 0.0
    %v669 = vpack.c.bf16 %v657, %v653
    %v670 = vpack.c.bf16 %v658, %v654
    %v671 = vpack.c.bf16 %v659, %v655
    %v672 = vpack.c.bf16 %v660, %v656
    %v673 = vpack.c.bf16 %v665, %v661
    %v674 = vpack.c.bf16 %v666, %v662
    %v675 = vpack.c.bf16 %v667, %v663
    %v676 = vpack.c.bf16 %v668, %v664
    %v685 = vunpack.c.l.b16 %v669
    %v686 = vunpack.c.l.b16 %v670
    %v687 = vunpack.c.l.b16 %v671
    %v688 = vunpack.c.l.b16 %v672
    %v689 = vunpack.c.h.b16 %v669
    %v690 = vunpack.c.h.b16 %v670
    %v691 = vunpack.c.h.b16 %v671
    %v692 = vunpack.c.h.b16 %v672
    %v693 = vunpack.c.l.b16 %v673
    %v694 = vunpack.c.l.b16 %v674
    %v695 = vunpack.c.l.b16 %v675
    %v696 = vunpack.c.l.b16 %v676
    %v697 = vunpack.c.h.b16 %v673
    %v698 = vunpack.c.h.b16 %v674
    %v699 = vunpack.c.h.b16 %v675
    %v700 = vunpack.c.h.b16 %v676
    %v701 = vpack.c.b16 %v686, %v685
    %v702 = vpack.c.b16 %v688, %v687
    %v703 = vpack.c.b16 %v690, %v689
    %v704 = vpack.c.b16 %v692, %v691
    %v705 = vpack.c.b16 %v694, %v693
    %v706 = vpack.c.b16 %v696, %v695
    %v707 = vpack.c.b16 %v698, %v697
    %v708 = vpack.c.b16 %v700, %v699
    %717 = vst [vmem:[%s3] sm:$0xff] %v701
    %718 = vst [vmem:[%s3 + $0x8] sm:$0xff] %v702
    %719 = vst [vmem:[%s3 + $0x10] sm:$0xff] %v703
    %720 = vst [vmem:[%s3 + $0x18] sm:$0xff] %v704
    %721 = vst [vmem:[%s3 + $0x20] sm:$0xff] %v705
    %722 = vst [vmem:[%s3 + $0x28] sm:$0xff] %v706
    %723 = vst [vmem:[%s3 + $0x30] sm:$0xff] %v707
    %724 = vst [vmem:[%s3 + $0x38] sm:$0xff] %v708
  $region21: #{transformer_forward.20} parent=0 // pred_fallthru
    _
  // Predicated region
  $region22: #{transformer_forward.20} parent=0 // pred_check
    _
  $region23: #{transformer_forward.20} parent=0 // pred_check_branch
    %726 = sbr.rel (0) target = $region25
  $region24: #{transformer_forward.20} parent=0 // pred_region
    _
  $region25: #{transformer_forward.20} parent=0 // pred_fallthru
    _
  // Predicated region
  $region26: #{transformer_forward.20} parent=0 // pred_check
    _
  $region27: #{transformer_forward.20} parent=0 // pred_check_branch
    %728 = sbr.rel (0) target = $region29
  $region28: #{transformer_forward.20} parent=0 // pred_region
    _
  $region29: #{transformer_forward.20} parent=0 // pred_fallthru
    _

// kernel: transformer_forward.27
$region0: #{transformer_forward.27}
  #allocation0 [shape = 'u32[]', space=smem, size = 0x4, offset = 0x4, fixed_abs, tag = 'smem constant byte address 0x4 - core index']
  #allocation1 [shape = 'u32[144,128]{1,0:T(1,128)}', space=vmem, size = 0x12000, scoped, tag = 'internal scratch']
  #allocation2 [shape = 'f32[2,256]{1,0:T(2,128)}', space=vmem, size = 0x800, scoped, tag = 'scratch operand']
  %s0 = inlined_call_operand.vmem [shape: bf16[2,16,256], index: 0, kind: input, shape index: {}]
  %s1 = inlined_call_operand.hbm [shape: f32[2,256], index: 1, kind: output, shape index: {}]
  %s2 = sld [smem:[#allocation0]]
  $region22: #{transformer_forward.27} parent=0
    _
  %s4 = ssub.s32 1, %s2
  %s5 = scalar_select 0, %s4, %s2
  $region1: #{transformer_forward.27} parent=0
    #allocation3 [shape = 'u8[2048]{0}', space=vmem, size = 0x800, scoped, tag = 'output window, operand 0, single buffered']
    #allocation4 [shape = 's32[1]{0}', space=sflag, size = 0x4, scoped, tag = 'scoped memory for transformer_forward.27']
    %6 = vsyncpa [#allocation4], 0
    // Predicated region
    $region2: #{transformer_forward.27} parent=1 // pred_check
      _
    $region3: #{transformer_forward.27} parent=1 // pred_check_branch
      %8 = sbr.rel (0) target = $region5
    $region4: #{transformer_forward.27} parent=1 // pred_region
      _
    $region5: #{transformer_forward.27} parent=1 // pred_fallthru
      _
    %p9 = scmp.eq.s32.totalorder 0, 0
    // Predicated region
    $region6: #{transformer_forward.27} parent=1 // pred_check
      %p10 = pneg %p9
    $region7: #{transformer_forward.27} parent=1 // pred_check_branch
      %12 = sbr.rel (%p10) target = $region9
    $region8: #{transformer_forward.27} parent=1 // pred_region
      %13 = vst [vmem:[#allocation2] sm:$0xf] 0.0
    $region9: #{transformer_forward.27} parent=1 // pred_fallthru
      _
    %v14 = vld [vmem:[#allocation2] sm:$0xf]
    %v15 = vld [vmem:[%s0] sm:$0xff]
    %v16 = vld [vmem:[%s0 + $0x8] sm:$0xff]
    %v17 = vld [vmem:[%s0 + $0x10] sm:$0xff]
    %v18 = vld [vmem:[%s0 + $0x18] sm:$0xff]
    %v19 = vunpack.c.l.bf16 %v15
    %v20 = vunpack.c.h.bf16 %v15
    %v21 = vunpack.c.l.bf16 %v16
    %v22 = vunpack.c.h.bf16 %v16
    %v23 = vunpack.c.l.bf16 %v17
    %v24 = vunpack.c.h.bf16 %v17
    %v25 = vunpack.c.l.bf16 %v18
    %v26 = vunpack.c.h.bf16 %v18
    %v27 = vadd.f32 %v19, %v21
    %v28 = vrot.slane %v27, 4
    %v29 = vadd.f32 %v27, %v28
    %v30 = vrot.slane %v29, 2
    %v31 = vadd.f32 %v29, %v30
    %v32 = vrot.slane %v31, 1
    %v33 = vadd.f32 %v31, %v32
    %v34 = vadd.f32 %v20, %v22
    %v35 = vrot.slane %v34, 4
    %v36 = vadd.f32 %v34, %v35
    %v37 = vrot.slane %v36, 2
    %v38 = vadd.f32 %v36, %v37
    %v39 = vrot.slane %v38, 1
    %v40 = vadd.f32 %v38, %v39
    %v41 = vadd.f32 %v23, %v25
    %v42 = vrot.slane %v41, 4
    %v43 = vadd.f32 %v41, %v42
    %v44 = vrot.slane %v43, 2
    %v45 = vadd.f32 %v43, %v44
    %v46 = vrot.slane %v45, 1
    %v47 = vadd.f32 %v45, %v46
    %v48 = vadd.f32 %v24, %v26
    %v49 = vrot.slane %v48, 4
    %v50 = vadd.f32 %v48, %v49
    %v51 = vrot.slane %v50, 2
    %v52 = vadd.f32 %v50, %v51
    %v53 = vrot.slane %v52, 1
    %v54 = vadd.f32 %v52, %v53
    %v59 = vcombine.low %v33, %v40
    %v61 = vunpack.c.l.s4 1983009808
    %v62 = vunpack.c.0.s8 %v61
    %v63 = vlaneseq
    %v64 = vshrl.u32 %v63, 7
    %v65 = vsub.s32 %v62, %v64
    %v66 = vrot.slane %v59, %v65
    %v67 = vcombine.low %v47, %v54
    %v69 = vunpack.c.l.s4 1983009808
    %v70 = vunpack.c.0.s8 %v69
    %v71 = vlaneseq
    %v72 = vshrl.u32 %v71, 7
    %v73 = vsub.s32 %v70, %v72
    %v74 = vrot.slane %v67, %v73
    %vm75 = vcmask 1044484
    %v76 = vsel %vm75, %v66, %v66
    %vm77 = vcmask 1046534
    %v78 = vsel %vm77, %v66, %v76
    %v79 = vrot.slane %v74, 7
    %vm80 = vcmask 1041409
    %v81 = vsel %vm80, %v79, %v78
    %vm82 = vcmask 1043459
    %v83 = vsel %vm82, %v79, %v81
    %vm84 = vcmask 1045509
    %v85 = vsel %vm84, %v79, %v83
    %vm86 = vcmask 1047559
    %v87 = vsel %vm86, %v79, %v85
    %v89 = vadd.f32 %v14, %v87
    %90 = vst [vmem:[#allocation2] sm:$0xf] %v89
    // Predicated region
    $region10: #{transformer_forward.27} parent=1 // pred_check
      %p91 = pneg %p9
    $region11: #{transformer_forward.27} parent=1 // pred_check_branch
      %93 = sbr.rel (%p91) target = $region13
    $region12: #{transformer_forward.27} parent=1 // pred_region
      %v94 = vld [vmem:[#allocation2] sm:$0xf]
      %v95 = vmul.f32 %v94, 0.0625
      %96 = vst [vmem:[#allocation3] sm:$0xf] %v95
    $region13: #{transformer_forward.27} parent=1 // pred_fallthru
      _
    // Predicated region
    $region14: #{transformer_forward.27} parent=1 // pred_check
      _
    $region15: #{transformer_forward.27} parent=1 // pred_check_branch
      %98 = sbr.rel (0) target = $region17
    $region16: #{transformer_forward.27} parent=1 // pred_region
      %s100 = ssub.s32 64, 64
      %101 = vsyncadd [#allocation4], %s100
      %s103 = sshll.u32 [#allocation3], 4
      %s104 = int_to_ptr.vmem [resolvable:$true] %s103
      %106 = dma.vmem_to_hbm [thread:$0]  %s104, 64, %s1, [#allocation4]
    $region17: #{transformer_forward.27} parent=1 // pred_fallthru
      _
    // Predicated region
    $region18: #{transformer_forward.27} parent=1 // pred_check
      _
    $region19: #{transformer_forward.27} parent=1 // pred_check_branch
      %108 = sbr.rel (0) target = $region21
    $region20: #{transformer_forward.27} parent=1 // pred_region
      %109 = dma.done [#allocation4], 64
    $region21: #{transformer_forward.27} parent=1 // pred_fallthru
      _
    %110 = vsyncpa [#allocation4], 1

// kernel: transformer_forward.21
$region0: #{transformer_forward.21}
  #allocation0 [shape = 'u32[]', space=smem, size = 0x4, offset = 0x4, fixed_abs, tag = 'smem constant byte address 0x4 - core index']
  #allocation1 [shape = 'u32[144,128]{1,0:T(1,128)}', space=vmem, size = 0x12000, scoped, tag = 'internal scratch']
  #allocation2 [shape = 'f32[32,256]{1,0:T(8,128)}', space=vmem, size = 0x8000, scoped, tag = 'scratch operand']
  %s0 = inlined_call_operand.vmem [shape: bf16[32,512], index: 0, kind: input, shape index: {}]
  %s1 = inlined_call_operand.vmem [shape: bf16[512,256], index: 1, kind: input, shape index: {}]
  %s2 = inlined_call_operand.vmem [shape: f32[1,256], index: 2, kind: input, shape index: {}]
  %s3 = inlined_call_operand.vmem [shape: bf16[32,256], index: 3, kind: input, shape index: {}]
  %s4 = inlined_call_operand.vmem [shape: f32[1,256], index: 4, kind: input, shape index: {}]
  %s5 = inlined_call_operand.vmem [shape: f32[1,256], index: 5, kind: input, shape index: {}]
  %s6 = inlined_call_operand.vmem [shape: bf16[32,256], index: 6, kind: output, shape index: {}]
  %s7 = sld [smem:[#allocation0]]
  $region42: #{transformer_forward.21} parent=0
    _
  %s9 = ssub.s32 1, %s7
  %s10 = scalar_select 0, %s9, %s7
  // Predicated region
  $region2: #{transformer_forward.21} parent=0 // pred_check
    _
  $region3: #{transformer_forward.21} parent=0 // pred_check_branch
    %12 = sbr.rel (0) target = $region5
  $region4: #{transformer_forward.21} parent=0 // pred_region
    _
  $region5: #{transformer_forward.21} parent=0 // pred_fallthru
    _
  // Predicated region
  $region6: #{transformer_forward.21} parent=0 // pred_check
    _
  $region7: #{transformer_forward.21} parent=0 // pred_check_branch
    %14 = sbr.rel (0) target = $region9
  $region8: #{transformer_forward.21} parent=0 // pred_region
    _
  $region9: #{transformer_forward.21} parent=0 // pred_fallthru
    _
  // Predicated region
  $region10: #{transformer_forward.21} parent=0 // pred_check
    _
  $region11: #{transformer_forward.21} parent=0 // pred_check_branch
    %16 = sbr.rel (0) target = $region13
  $region12: #{transformer_forward.21} parent=0 // pred_region
    _
  $region13: #{transformer_forward.21} parent=0 // pred_fallthru
    _
  // Predicated region
  $region14: #{transformer_forward.21} parent=0 // pred_check
    _
  $region15: #{transformer_forward.21} parent=0 // pred_check_branch
    %18 = sbr.rel (0) target = $region17
  $region16: #{transformer_forward.21} parent=0 // pred_region
    _
  $region17: #{transformer_forward.21} parent=0 // pred_fallthru
    _
  // Predicated region
  $region18: #{transformer_forward.21} parent=0 // pred_check
    _
  $region19: #{transformer_forward.21} parent=0 // pred_check_branch
    %20 = sbr.rel (0) target = $region21
  $region20: #{transformer_forward.21} parent=0 // pred_region
    _
  $region21: #{transformer_forward.21} parent=0 // pred_fallthru
    _
  // Predicated region
  $region22: #{transformer_forward.21} parent=0 // pred_check
    _
  $region23: #{transformer_forward.21} parent=0 // pred_check_branch
    %22 = sbr.rel (0) target = $region25
  $region24: #{transformer_forward.21} parent=0 // pred_region
    _
  $region25: #{transformer_forward.21} parent=0 // pred_fallthru
    _
  %p23 = scmp.eq.s32.totalorder 0, 0
  // Predicated region
  $region26: #{transformer_forward.21} parent=0 // pred_check
    %p24 = pneg %p23
  $region27: #{transformer_forward.21} parent=0 // pred_check_branch
    %26 = sbr.rel (%p24) target = $region29
  $region28: #{transformer_forward.21} parent=0 // pred_region
    %27 = vst [vmem:[#allocation2] sm:$0xff] 0.0
    %28 = vst [vmem:[#allocation2 + $0x8] sm:$0xff] 0.0
    %29 = vst [vmem:[#allocation2 + $0x10] sm:$0xff] 0.0
    %30 = vst [vmem:[#allocation2 + $0x18] sm:$0xff] 0.0
    %31 = vst [vmem:[#allocation2 + $0x20] sm:$0xff] 0.0
    %32 = vst [vmem:[#allocation2 + $0x28] sm:$0xff] 0.0
    %33 = vst [vmem:[#allocation2 + $0x30] sm:$0xff] 0.0
    %34 = vst [vmem:[#allocation2 + $0x38] sm:$0xff] 0.0
  $region29: #{transformer_forward.21} parent=0 // pred_fallthru
    _
  %v35 = vld [vmem:[#allocation2] sm:$0xff]
  %v36 = vld [vmem:[#allocation2 + $0x8] sm:$0xff]
  %v37 = vld [vmem:[#allocation2 + $0x10] sm:$0xff]
  %v38 = vld [vmem:[#allocation2 + $0x18] sm:$0xff]
  %v39 = vld [vmem:[#allocation2 + $0x20] sm:$0xff]
  %v40 = vld [vmem:[#allocation2 + $0x28] sm:$0xff]
  %v41 = vld [vmem:[#allocation2 + $0x30] sm:$0xff]
  %v42 = vld [vmem:[#allocation2 + $0x38] sm:$0xff]
  %v43 = vld [vmem:[%s0] sm:$0xff]
  %v44 = vld [vmem:[%s0 + $0x8] sm:$0xff]
  %v45 = vld [vmem:[%s0 + $0x10] sm:$0xff]
  %v46 = vld [vmem:[%s0 + $0x18] sm:$0xff]
  %v47 = vld [vmem:[%s0 + $0x20] sm:$0xff]
  %v48 = vld [vmem:[%s0 + $0x28] sm:$0xff]
  %v49 = vld [vmem:[%s0 + $0x30] sm:$0xff]
  %v50 = vld [vmem:[%s0 + $0x38] sm:$0xff]
  %v51 = vld [vmem:[%s1] sm:$0xff]
  %v52 = vld [vmem:[%s1 + $0x8] sm:$0xff]
  %v53 = vld [vmem:[%s1 + $0x10] sm:$0xff]
  %v54 = vld [vmem:[%s1 + $0x18] sm:$0xff]
  %v55 = vld [vmem:[%s1 + $0x20] sm:$0xff]
  %v56 = vld [vmem:[%s1 + $0x28] sm:$0xff]
  %v57 = vld [vmem:[%s1 + $0x30] sm:$0xff]
  %v58 = vld [vmem:[%s1 + $0x38] sm:$0xff]
  %v59 = vld [vmem:[%s1 + $0x40] sm:$0xff]
  %v60 = vld [vmem:[%s1 + $0x48] sm:$0xff]
  %v61 = vld [vmem:[%s1 + $0x50] sm:$0xff]
  %v62 = vld [vmem:[%s1 + $0x58] sm:$0xff]
  %v63 = vld [vmem:[%s1 + $0x60] sm:$0xff]
  %v64 = vld [vmem:[%s1 + $0x68] sm:$0xff]
  %v65 = vld [vmem:[%s1 + $0x70] sm:$0xff]
  %v66 = vld [vmem:[%s1 + $0x78] sm:$0xff]
  %v67 = vld [vmem:[%s1 + $0x80] sm:$0xff]
  %v68 = vld [vmem:[%s1 + $0x88] sm:$0xff]
  %v69 = vld [vmem:[%s1 + $0x90] sm:$0xff]
  %v70 = vld [vmem:[%s1 + $0x98] sm:$0xff]
  %v71 = vld [vmem:[%s1 + $0xa0] sm:$0xff]
  %v72 = vld [vmem:[%s1 + $0xa8] sm:$0xff]
  %v73 = vld [vmem:[%s1 + $0xb0] sm:$0xff]
  %v74 = vld [vmem:[%s1 + $0xb8] sm:$0xff]
  %v75 = vld [vmem:[%s1 + $0xc0] sm:$0xff]
  %v76 = vld [vmem:[%s1 + $0xc8] sm:$0xff]
  %v77 = vld [vmem:[%s1 + $0xd0] sm:$0xff]
  %v78 = vld [vmem:[%s1 + $0xd8] sm:$0xff]
  %v79 = vld [vmem:[%s1 + $0xe0] sm:$0xff]
  %v80 = vld [vmem:[%s1 + $0xe8] sm:$0xff]
  %v81 = vld [vmem:[%s1 + $0xf0] sm:$0xff]
  %v82 = vld [vmem:[%s1 + $0xf8] sm:$0xff]
  %v83 = vld [vmem:[%s1 + $0x100] sm:$0xff]
  %v84 = vld [vmem:[%s1 + $0x108] sm:$0xff]
  %v85 = vld [vmem:[%s1 + $0x110] sm:$0xff]
  %v86 = vld [vmem:[%s1 + $0x118] sm:$0xff]
  %v87 = vld [vmem:[%s1 + $0x120] sm:$0xff]
  %v88 = vld [vmem:[%s1 + $0x128] sm:$0xff]
  %v89 = vld [vmem:[%s1 + $0x130] sm:$0xff]
  %v90 = vld [vmem:[%s1 + $0x138] sm:$0xff]
  %v91 = vld [vmem:[%s1 + $0x140] sm:$0xff]
  %v92 = vld [vmem:[%s1 + $0x148] sm:$0xff]
  %v93 = vld [vmem:[%s1 + $0x150] sm:$0xff]
  %v94 = vld [vmem:[%s1 + $0x158] sm:$0xff]
  %v95 = vld [vmem:[%s1 + $0x160] sm:$0xff]
  %v96 = vld [vmem:[%s1 + $0x168] sm:$0xff]
  %v97 = vld [vmem:[%s1 + $0x170] sm:$0xff]
  %v98 = vld [vmem:[%s1 + $0x178] sm:$0xff]
  %v99 = vld [vmem:[%s1 + $0x180] sm:$0xff]
  %v100 = vld [vmem:[%s1 + $0x188] sm:$0xff]
  %v101 = vld [vmem:[%s1 + $0x190] sm:$0xff]
  %v102 = vld [vmem:[%s1 + $0x198] sm:$0xff]
  %v103 = vld [vmem:[%s1 + $0x1a0] sm:$0xff]
  %v104 = vld [vmem:[%s1 + $0x1a8] sm:$0xff]
  %v105 = vld [vmem:[%s1 + $0x1b0] sm:$0xff]
  %v106 = vld [vmem:[%s1 + $0x1b8] sm:$0xff]
  %v107 = vld [vmem:[%s1 + $0x1c0] sm:$0xff]
  %v108 = vld [vmem:[%s1 + $0x1c8] sm:$0xff]
  %v109 = vld [vmem:[%s1 + $0x1d0] sm:$0xff]
  %v110 = vld [vmem:[%s1 + $0x1d8] sm:$0xff]
  %v111 = vld [vmem:[%s1 + $0x1e0] sm:$0xff]
  %v112 = vld [vmem:[%s1 + $0x1e8] sm:$0xff]
  %v113 = vld [vmem:[%s1 + $0x1f0] sm:$0xff]
  %v114 = vld [vmem:[%s1 + $0x1f8] sm:$0xff]
  %v123 = vunpack.c.l.b16 %v43
  %v124 = vunpack.c.h.b16 %v43
  %v125 = vunpack.c.l.b16 %v44
  %v126 = vunpack.c.h.b16 %v44
  %v127 = vunpack.c.l.b16 %v45
  %v128 = vunpack.c.h.b16 %v45
  %v129 = vunpack.c.l.b16 %v46
  %v130 = vunpack.c.h.b16 %v46
  %v131 = vunpack.c.l.b16 %v47
  %v132 = vunpack.c.h.b16 %v47
  %v133 = vunpack.c.l.b16 %v48
  %v134 = vunpack.c.h.b16 %v48
  %v135 = vunpack.c.l.b16 %v49
  %v136 = vunpack.c.h.b16 %v49
  %v137 = vunpack.c.l.b16 %v50
  %v138 = vunpack.c.h.b16 %v50
  %v139 = vpack.c.b16 %v127, %v123
  %v140 = vpack.c.b16 %v128, %v124
  %v141 = vpack.c.b16 %v129, %v125
  %v142 = vpack.c.b16 %v130, %v126
  %v143 = vpack.c.b16 %v135, %v131
  %v144 = vpack.c.b16 %v136, %v132
  %v145 = vpack.c.b16 %v137, %v133
  %v146 = vpack.c.b16 %v138, %v134
  %v219 = vunpack.c.l.b16 %v51
  %v220 = vunpack.c.h.b16 %v51
  %v221 = vunpack.c.l.b16 %v52
  %v222 = vunpack.c.h.b16 %v52
  %v223 = vunpack.c.l.b16 %v53
  %v224 = vunpack.c.h.b16 %v53
  %v225 = vunpack.c.l.b16 %v54
  %v226 = vunpack.c.h.b16 %v54
  %v227 = vunpack.c.l.b16 %v55
  %v228 = vunpack.c.h.b16 %v55
  %v229 = vunpack.c.l.b16 %v56
  %v230 = vunpack.c.h.b16 %v56
  %v231 = vunpack.c.l.b16 %v57
  %v232 = vunpack.c.h.b16 %v57
  %v233 = vunpack.c.l.b16 %v58
  %v234 = vunpack.c.h.b16 %v58
  %v235 = vunpack.c.l.b16 %v59
  %v236 = vunpack.c.h.b16 %v59
  %v237 = vunpack.c.l.b16 %v60
  %v238 = vunpack.c.h.b16 %v60
  %v239 = vunpack.c.l.b16 %v61
  %v240 = vunpack.c.h.b16 %v61
  %v241 = vunpack.c.l.b16 %v62
  %v242 = vunpack.c.h.b16 %v62
  %v243 = vunpack.c.l.b16 %v63
  %v244 = vunpack.c.h.b16 %v63
  %v245 = vunpack.c.l.b16 %v64
  %v246 = vunpack.c.h.b16 %v64
  %v247 = vunpack.c.l.b16 %v65
  %v248 = vunpack.c.h.b16 %v65
  %v249 = vunpack.c.l.b16 %v66
  %v250 = vunpack.c.h.b16 %v66
  %v251 = vunpack.c.l.b16 %v67
  %v252 = vunpack.c.h.b16 %v67
  %v253 = vunpack.c.l.b16 %v68
  %v254 = vunpack.c.h.b16 %v68
  %v255 = vunpack.c.l.b16 %v69
  %v256 = vunpack.c.h.b16 %v69
  %v257 = vunpack.c.l.b16 %v70
  %v258 = vunpack.c.h.b16 %v70
  %v259 = vunpack.c.l.b16 %v71
  %v260 = vunpack.c.h.b16 %v71
  %v261 = vunpack.c.l.b16 %v72
  %v262 = vunpack.c.h.b16 %v72
  %v263 = vunpack.c.l.b16 %v73
  %v264 = vunpack.c.h.b16 %v73
  %v265 = vunpack.c.l.b16 %v74
  %v266 = vunpack.c.h.b16 %v74
  %v267 = vunpack.c.l.b16 %v75
  %v268 = vunpack.c.h.b16 %v75
  %v269 = vunpack.c.l.b16 %v76
  %v270 = vunpack.c.h.b16 %v76
  %v271 = vunpack.c.l.b16 %v77
  %v272 = vunpack.c.h.b16 %v77
  %v273 = vunpack.c.l.b16 %v78
  %v274 = vunpack.c.h.b16 %v78
  %v275 = vunpack.c.l.b16 %v79
  %v276 = vunpack.c.h.b16 %v79
  %v277 = vunpack.c.l.b16 %v80
  %v278 = vunpack.c.h.b16 %v80
  %v279 = vunpack.c.l.b16 %v81
  %v280 = vunpack.c.h.b16 %v81
  %v281 = vunpack.c.l.b16 %v82
  %v282 = vunpack.c.h.b16 %v82
  %v283 = vunpack.c.l.b16 %v83
  %v284 = vunpack.c.h.b16 %v83
  %v285 = vunpack.c.l.b16 %v84
  %v286 = vunpack.c.h.b16 %v84
  %v287 = vunpack.c.l.b16 %v85
  %v288 = vunpack.c.h.b16 %v85
  %v289 = vunpack.c.l.b16 %v86
  %v290 = vunpack.c.h.b16 %v86
  %v291 = vunpack.c.l.b16 %v87
  %v292 = vunpack.c.h.b16 %v87
  %v293 = vunpack.c.l.b16 %v88
  %v294 = vunpack.c.h.b16 %v88
  %v295 = vunpack.c.l.b16 %v89
  %v296 = vunpack.c.h.b16 %v89
  %v297 = vunpack.c.l.b16 %v90
  %v298 = vunpack.c.h.b16 %v90
  %v299 = vunpack.c.l.b16 %v91
  %v300 = vunpack.c.h.b16 %v91
  %v301 = vunpack.c.l.b16 %v92
  %v302 = vunpack.c.h.b16 %v92
  %v303 = vunpack.c.l.b16 %v93
  %v304 = vunpack.c.h.b16 %v93
  %v305 = vunpack.c.l.b16 %v94
  %v306 = vunpack.c.h.b16 %v94
  %v307 = vunpack.c.l.b16 %v95
  %v308 = vunpack.c.h.b16 %v95
  %v309 = vunpack.c.l.b16 %v96
  %v310 = vunpack.c.h.b16 %v96
  %v311 = vunpack.c.l.b16 %v97
  %v312 = vunpack.c.h.b16 %v97
  %v313 = vunpack.c.l.b16 %v98
  %v314 = vunpack.c.h.b16 %v98
  %v315 = vunpack.c.l.b16 %v99
  %v316 = vunpack.c.h.b16 %v99
  %v317 = vunpack.c.l.b16 %v100
  %v318 = vunpack.c.h.b16 %v100
  %v319 = vunpack.c.l.b16 %v101
  %v320 = vunpack.c.h.b16 %v101
  %v321 = vunpack.c.l.b16 %v102
  %v322 = vunpack.c.h.b16 %v102
  %v323 = vunpack.c.l.b16 %v103
  %v324 = vunpack.c.h.b16 %v103
  %v325 = vunpack.c.l.b16 %v104
  %v326 = vunpack.c.h.b16 %v104
  %v327 = vunpack.c.l.b16 %v105
  %v328 = vunpack.c.h.b16 %v105
  %v329 = vunpack.c.l.b16 %v106
  %v330 = vunpack.c.h.b16 %v106
  %v331 = vunpack.c.l.b16 %v107
  %v332 = vunpack.c.h.b16 %v107
  %v333 = vunpack.c.l.b16 %v108
  %v334 = vunpack.c.h.b16 %v108
  %v335 = vunpack.c.l.b16 %v109
  %v336 = vunpack.c.h.b16 %v109
  %v337 = vunpack.c.l.b16 %v110
  %v338 = vunpack.c.h.b16 %v110
  %v339 = vunpack.c.l.b16 %v111
  %v340 = vunpack.c.h.b16 %v111
  %v341 = vunpack.c.l.b16 %v112
  %v342 = vunpack.c.h.b16 %v112
  %v343 = vunpack.c.l.b16 %v113
  %v344 = vunpack.c.h.b16 %v113
  %v345 = vunpack.c.l.b16 %v114
  %v346 = vunpack.c.h.b16 %v114
  %v347 = vpack.c.b16 %v221, %v219
  %v348 = vpack.c.b16 %v222, %v220
  %v349 = vpack.c.b16 %v225, %v223
  %v350 = vpack.c.b16 %v226, %v224
  %v351 = vpack.c.b16 %v229, %v227
  %v352 = vpack.c.b16 %v230, %v228
  %v353 = vpack.c.b16 %v233, %v231
  %v354 = vpack.c.b16 %v234, %v232
  %v355 = vpack.c.b16 %v237, %v235
  %v356 = vpack.c.b16 %v238, %v236
  %v357 = vpack.c.b16 %v241, %v239
  %v358 = vpack.c.b16 %v242, %v240
  %v359 = vpack.c.b16 %v245, %v243
  %v360 = vpack.c.b16 %v246, %v244
  %v361 = vpack.c.b16 %v249, %v247
  %v362 = vpack.c.b16 %v250, %v248
  %v363 = vpack.c.b16 %v253, %v251
  %v364 = vpack.c.b16 %v254, %v252
  %v365 = vpack.c.b16 %v257, %v255
  %v366 = vpack.c.b16 %v258, %v256
  %v367 = vpack.c.b16 %v261, %v259
  %v368 = vpack.c.b16 %v262, %v260
  %v369 = vpack.c.b16 %v265, %v263
  %v370 = vpack.c.b16 %v266, %v264
  %v371 = vpack.c.b16 %v269, %v267
  %v372 = vpack.c.b16 %v270, %v268
  %v373 = vpack.c.b16 %v273, %v271
  %v374 = vpack.c.b16 %v274, %v272
  %v375 = vpack.c.b16 %v277, %v275
  %v376 = vpack.c.b16 %v278, %v276
  %v377 = vpack.c.b16 %v281, %v279
  %v378 = vpack.c.b16 %v282, %v280
  %v379 = vpack.c.b16 %v285, %v283
  %v380 = vpack.c.b16 %v286, %v284
  %v381 = vpack.c.b16 %v289, %v287
  %v382 = vpack.c.b16 %v290, %v288
  %v383 = vpack.c.b16 %v293, %v291
  %v384 = vpack.c.b16 %v294, %v292
  %v385 = vpack.c.b16 %v297, %v295
  %v386 = vpack.c.b16 %v298, %v296
  %v387 = vpack.c.b16 %v301, %v299
  %v388 = vpack.c.b16 %v302, %v300
  %v389 = vpack.c.b16 %v305, %v303
  %v390 = vpack.c.b16 %v306, %v304
  %v391 = vpack.c.b16 %v309, %v307
  %v392 = vpack.c.b16 %v310, %v308
  %v393 = vpack.c.b16 %v313, %v311
  %v394 = vpack.c.b16 %v314, %v312
  %v395 = vpack.c.b16 %v317, %v315
  %v396 = vpack.c.b16 %v318, %v316
  %v397 = vpack.c.b16 %v321, %v319
  %v398 = vpack.c.b16 %v322, %v320
  %v399 = vpack.c.b16 %v325, %v323
  %v400 = vpack.c.b16 %v326, %v324
  %v401 = vpack.c.b16 %v329, %v327
  %v402 = vpack.c.b16 %v330, %v328
  %v403 = vpack.c.b16 %v333, %v331
  %v404 = vpack.c.b16 %v334, %v332
  %v405 = vpack.c.b16 %v337, %v335
  %v406 = vpack.c.b16 %v338, %v336
  %v407 = vpack.c.b16 %v341, %v339
  %v408 = vpack.c.b16 %v342, %v340
  %v409 = vpack.c.b16 %v345, %v343
  %v410 = vpack.c.b16 %v346, %v344
  %475 = vmatprep.subr.bf16.mxu0 %v348
  %476 = vmatpush1.bf16.msra.mxu0 %v347
  %477 = vmatprep.subr.bf16.mxu0 %v350
  %478 = vmatpush1.bf16.msra.mxu0 %v349
  %479 = vmatprep.subr.bf16.mxu0 %v352
  %480 = vmatpush1.bf16.msra.mxu0 %v351
  %481 = vmatprep.subr.bf16.mxu0 %v354
  %482 = vmatpush1.bf16.msra.mxu0 %v353
  %483 = vmatprep.subr.bf16.mxu0 %v356
  %484 = vmatpush1.bf16.msra.mxu0 %v355
  %485 = vmatprep.subr.bf16.mxu0 %v358
  %486 = vmatpush1.bf16.msra.mxu0 %v357
  %487 = vmatprep.subr.bf16.mxu0 %v360
  %488 = vmatpush1.bf16.msra.mxu0 %v359
  %489 = vmatprep.subr.bf16.mxu0 %v362
  %490 = vmatpush1.bf16.msra.mxu0 %v361
  %491 = vmatprep.subr.bf16.mxu0 %v364
  %492 = vmatpush1.bf16.msra.mxu0 %v363
  %493 = vmatprep.subr.bf16.mxu0 %v366
  %494 = vmatpush1.bf16.msra.mxu0 %v365
  %495 = vmatprep.subr.bf16.mxu0 %v368
  %496 = vmatpush1.bf16.msra.mxu0 %v367
  %497 = vmatprep.subr.bf16.mxu0 %v370
  %498 = vmatpush1.bf16.msra.mxu0 %v369
  %499 = vmatprep.subr.bf16.mxu0 %v372
  %500 = vmatpush1.bf16.msra.mxu0 %v371
  %501 = vmatprep.subr.bf16.mxu0 %v374
  %502 = vmatpush1.bf16.msra.mxu0 %v373
  %503 = vmatprep.subr.bf16.mxu0 %v376
  %504 = vmatpush1.bf16.msra.mxu0 %v375
  %505 = vmatprep.subr.bf16.mxu0 %v378
  %506 = vmatpush1.bf16.msra.mxu0 %v377
  %507 = vmatprep.mubr.bf16.mxu0 %v140
  %508 = vmatmul.mubr.bf16.gmra.mrb[0].mxu0 %v139
  %v509 = vpop.f32.mrb[0].mxu0
  %v510 = vadd.f32 0.0, %v509
  %v511 = vpop.f32.mrb[0].mxu0
  %v512 = vadd.f32 0.0, %v511
  %v513 = vpop.f32.mrb[0].mxu0
  %v514 = vadd.f32 0.0, %v513
  %v515 = vpop.f32.mrb[0].mxu0
  %v516 = vadd.f32 0.0, %v515
  %517 = vmatprep.mubr.bf16.mxu0 %v144
  %518 = vmatmul.mubr.bf16.gmra.mrb[0].mxu0 %v143
  %v519 = vpop.f32.mrb[0].mxu0
  %v520 = vadd.f32 0.0, %v519
  %v521 = vpop.f32.mrb[0].mxu0
  %v522 = vadd.f32 0.0, %v521
  %v523 = vpop.f32.mrb[0].mxu0
  %v524 = vadd.f32 0.0, %v523
  %v525 = vpop.f32.mrb[0].mxu0
  %v526 = vadd.f32 0.0, %v525
  %527 = vdwg.mxu0
  %528 = vmatprep.subr.bf16.mxu0 %v380
  %529 = vmatpush1.bf16.msra.mxu0 %v379
  %530 = vmatprep.subr.bf16.mxu0 %v382
  %531 = vmatpush1.bf16.msra.mxu0 %v381
  %532 = vmatprep.subr.bf16.mxu0 %v384
  %533 = vmatpush1.bf16.msra.mxu0 %v383
  %534 = vmatprep.subr.bf16.mxu0 %v386
  %535 = vmatpush1.bf16.msra.mxu0 %v385
  %536 = vmatprep.subr.bf16.mxu0 %v388
  %537 = vmatpush1.bf16.msra.mxu0 %v387
  %538 = vmatprep.subr.bf16.mxu0 %v390
  %539 = vmatpush1.bf16.msra.mxu0 %v389
  %540 = vmatprep.subr.bf16.mxu0 %v392
  %541 = vmatpush1.bf16.msra.mxu0 %v391
  %542 = vmatprep.subr.bf16.mxu0 %v394
  %543 = vmatpush1.bf16.msra.mxu0 %v393
  %544 = vmatprep.subr.bf16.mxu0 %v396
  %545 = vmatpush1.bf16.msra.mxu0 %v395
  %546 = vmatprep.subr.bf16.mxu0 %v398
  %547 = vmatpush1.bf16.msra.mxu0 %v397
  %548 = vmatprep.subr.bf16.mxu0 %v400
  %549 = vmatpush1.bf16.msra.mxu0 %v399
  %550 = vmatprep.subr.bf16.mxu0 %v402
  %551 = vmatpush1.bf16.msra.mxu0 %v401
  %552 = vmatprep.subr.bf16.mxu0 %v404
  %553 = vmatpush1.bf16.msra.mxu0 %v403
  %554 = vmatprep.subr.bf16.mxu0 %v406
  %555 = vmatpush1.bf16.msra.mxu0 %v405
  %556 = vmatprep.subr.bf16.mxu0 %v408
  %557 = vmatpush1.bf16.msra.mxu0 %v407
  %558 = vmatprep.subr.bf16.mxu0 %v410
  %559 = vmatpush1.bf16.msra.mxu0 %v409
  %560 = vmatprep.mubr.bf16.mxu0 %v142
  %561 = vmatmul.mubr.bf16.gmra.mrb[0].mxu0 %v141
  %v562 = vpop.f32.mrb[0].mxu0
  %v563 = vadd.f32 %v510, %v562
  %v564 = vpop.f32.mrb[0].mxu0
  %v565 = vadd.f32 %v512, %v564
  %v566 = vpop.f32.mrb[0].mxu0
  %v567 = vadd.f32 %v514, %v566
  %v568 = vpop.f32.mrb[0].mxu0
  %v569 = vadd.f32 %v516, %v568
  %570 = vmatprep.mubr.bf16.mxu0 %v146
  %571 = vmatmul.mubr.bf16.gmra.mrb[0].mxu0 %v145
  %v572 = vpop.f32.mrb[0].mxu0
  %v573 = vadd.f32 %v520, %v572
  %v574 = vpop.f32.mrb[0].mxu0
  %v575 = vadd.f32 %v522, %v574
  %v576 = vpop.f32.mrb[0].mxu0
  %v577 = vadd.f32 %v524, %v576
  %v578 = vpop.f32.mrb[0].mxu0
  %v579 = vadd.f32 %v526, %v578
  %580 = vdwg.mxu0
  %v581 = vadd.f32 %v35, %v563
  %v582 = vadd.f32 %v36, %v565
  %v583 = vadd.f32 %v37, %v567
  %v584 = vadd.f32 %v38, %v569
  %v585 = vadd.f32 %v39, %v573
  %v586 = vadd.f32 %v40, %v575
  %v587 = vadd.f32 %v41, %v577
  %v588 = vadd.f32 %v42, %v579
  %589 = vst [vmem:[#allocation2] sm:$0xff] %v581
  %590 = vst [vmem:[#allocation2 + $0x8] sm:$0xff] %v582
  %591 = vst [vmem:[#allocation2 + $0x10] sm:$0xff] %v583
  %592 = vst [vmem:[#allocation2 + $0x18] sm:$0xff] %v584
  %593 = vst [vmem:[#allocation2 + $0x20] sm:$0xff] %v585
  %594 = vst [vmem:[#allocation2 + $0x28] sm:$0xff] %v586
  %595 = vst [vmem:[#allocation2 + $0x30] sm:$0xff] %v587
  %596 = vst [vmem:[#allocation2 + $0x38] sm:$0xff] %v588
  // Predicated region
  $region30: #{transformer_forward.21} parent=0 // pred_check
    %p597 = pneg %p23
  $region31: #{transformer_forward.21} parent=0 // pred_check_branch
    %599 = sbr.rel (%p597) target = $region33
  $region32: #{transformer_forward.21} parent=0 // pred_region
    %v600 = vld [vmem:[#allocation2] sm:$0xff]
    %v601 = vld [vmem:[#allocation2 + $0x8] sm:$0xff]
    %v602 = vld [vmem:[#allocation2 + $0x10] sm:$0xff]
    %v603 = vld [vmem:[#allocation2 + $0x18] sm:$0xff]
    %v604 = vld [vmem:[#allocation2 + $0x20] sm:$0xff]
    %v605 = vld [vmem:[#allocation2 + $0x28] sm:$0xff]
    %v606 = vld [vmem:[#allocation2 + $0x30] sm:$0xff]
    %v607 = vld [vmem:[#allocation2 + $0x38] sm:$0xff]
    %v608 = vld [vmem:[%s2] sm:$0x3]
    %v610 = vlaneseq
    %v611 = vshrl.u32 %v610, 7
    %v612 = vsub.s32 0, %v611
    %v613 = vrot.slane %v608, %v612
    %v614 = vlaneseq
    %v615 = vshrl.u32 %v614, 7
    %v616 = vsub.s32 1, %v615
    %v617 = vrot.slane %v608, %v616
    %v620 = vadd.f32 %v600, %v613
    %v621 = vadd.f32 %v601, %v617
    %v622 = vadd.f32 %v602, %v613
    %v623 = vadd.f32 %v603, %v617
    %v624 = vadd.f32 %v604, %v613
    %v625 = vadd.f32 %v605, %v617
    %v626 = vadd.f32 %v606, %v613
    %v627 = vadd.f32 %v607, %v617
    %v628 = vld [vmem:[%s3] sm:$0xff]
    %v629 = vld [vmem:[%s3 + $0x8] sm:$0xff]
    %v630 = vld [vmem:[%s3 + $0x10] sm:$0xff]
    %v631 = vld [vmem:[%s3 + $0x18] sm:$0xff]
    %v632 = vunpack.c.l.bf16 %v628
    %v633 = vunpack.c.h.bf16 %v628
    %v634 = vunpack.c.l.bf16 %v629
    %v635 = vunpack.c.h.bf16 %v629
    %v636 = vunpack.c.l.bf16 %v630
    %v637 = vunpack.c.h.bf16 %v630
    %v638 = vunpack.c.l.bf16 %v631
    %v639 = vunpack.c.h.bf16 %v631
    %v640 = vadd.f32 %v620, %v632
    %v641 = vadd.f32 %v621, %v633
    %v642 = vadd.f32 %v622, %v634
    %v643 = vadd.f32 %v623, %v635
    %v644 = vadd.f32 %v624, %v636
    %v645 = vadd.f32 %v625, %v637
    %v646 = vadd.f32 %v626, %v638
    %v647 = vadd.f32 %v627, %v639
    %v648 = vadd.f32 %v640, %v641
    %649 = vadd.xlane.f32.xlu0 %v648
    %v650 = vpop.xlane.xlu0 %649
    %v651 = vadd.f32 %v642, %v643
    %652 = vadd.xlane.f32.xlu0 %v651
    %v653 = vpop.xlane.xlu0 %652
    %v654 = vadd.f32 %v644, %v645
    %655 = vadd.xlane.f32.xlu0 %v654
    %v656 = vpop.xlane.xlu0 %655
    %v657 = vadd.f32 %v646, %v647
    %658 = vadd.xlane.f32.xlu0 %v657
    %v659 = vpop.xlane.xlu0 %658
    %v660 = vrcp.pop 256.0
    %v661 = vmul.f32 %v650, %v660
    %v662 = vmul.f32 %v653, %v660
    %v663 = vmul.f32 %v656, %v660
    %v664 = vmul.f32 %v659, %v660
    %v665 = vsub.f32 %v640, %v661
    %v666 = vsub.f32 %v641, %v661
    %v667 = vsub.f32 %v642, %v662
    %v668 = vsub.f32 %v643, %v662
    %v669 = vsub.f32 %v644, %v663
    %v670 = vsub.f32 %v645, %v663
    %v671 = vsub.f32 %v646, %v664
    %v672 = vsub.f32 %v647, %v664
    %v673 = vmul.f32 %v665, %v665
    %v674 = vmul.f32 %v666, %v666
    %v675 = vmul.f32 %v667, %v667
    %v676 = vmul.f32 %v668, %v668
    %v677 = vmul.f32 %v669, %v669
    %v678 = vmul.f32 %v670, %v670
    %v679 = vmul.f32 %v671, %v671
    %v680 = vmul.f32 %v672, %v672
    %v681 = vadd.f32 %v673, %v674
    %682 = vadd.xlane.f32.xlu0 %v681
    %v683 = vpop.xlane.xlu0 %682
    %v684 = vadd.f32 %v675, %v676
    %685 = vadd.xlane.f32.xlu0 %v684
    %v686 = vpop.xlane.xlu0 %685
    %v687 = vadd.f32 %v677, %v678
    %688 = vadd.xlane.f32.xlu0 %v687
    %v689 = vpop.xlane.xlu0 %688
    %v690 = vadd.f32 %v679, %v680
    %691 = vadd.xlane.f32.xlu0 %v690
    %v692 = vpop.xlane.xlu0 %691
    %v693 = vmul.f32 %v683, %v660
    %v694 = vmul.f32 %v686, %v660
    %v695 = vmul.f32 %v689, %v660
    %v696 = vmul.f32 %v692, %v660
    %v697 = vadd.f32 %v693, 1e-05
    %v698 = vadd.f32 %v694, 1e-05
    %v699 = vadd.f32 %v695, 1e-05
    %v700 = vadd.f32 %v696, 1e-05
    %v701 = vrsqrt.pop %v697
    %v702 = vrsqrt.pop %v698
    %v703 = vrsqrt.pop %v699
    %v704 = vrsqrt.pop %v700
    %v705 = vmul.f32 %v665, %v701
    %v706 = vmul.f32 %v666, %v701
    %v707 = vmul.f32 %v667, %v702
    %v708 = vmul.f32 %v668, %v702
    %v709 = vmul.f32 %v669, %v703
    %v710 = vmul.f32 %v670, %v703
    %v711 = vmul.f32 %v671, %v704
    %v712 = vmul.f32 %v672, %v704
    %v713 = vld [vmem:[%s4] sm:$0x3]
    %v715 = vlaneseq
    %v716 = vshrl.u32 %v715, 7
    %v717 = vsub.s32 0, %v716
    %v718 = vrot.slane %v713, %v717
    %v719 = vlaneseq
    %v720 = vshrl.u32 %v719, 7
    %v721 = vsub.s32 1, %v720
    %v722 = vrot.slane %v713, %v721
    %v725 = vmul.f32 %v705, %v718
    %v726 = vmul.f32 %v706, %v722
    %v727 = vmul.f32 %v707, %v718
    %v728 = vmul.f32 %v708, %v722
    %v729 = vmul.f32 %v709, %v718
    %v730 = vmul.f32 %v710, %v722
    %v731 = vmul.f32 %v711, %v718
    %v732 = vmul.f32 %v712, %v722
    %v733 = vld [vmem:[%s5] sm:$0x3]
    %v735 = vlaneseq
    %v736 = vshrl.u32 %v735, 7
    %v737 = vsub.s32 0, %v736
    %v738 = vrot.slane %v733, %v737
    %v739 = vlaneseq
    %v740 = vshrl.u32 %v739, 7
    %v741 = vsub.s32 1, %v740
    %v742 = vrot.slane %v733, %v741
    %v745 = vadd.f32 %v725, %v738
    %v746 = vadd.f32 %v726, %v742
    %v747 = vadd.f32 %v727, %v738
    %v748 = vadd.f32 %v728, %v742
    %v749 = vadd.f32 %v729, %v738
    %v750 = vadd.f32 %v730, %v742
    %v751 = vadd.f32 %v731, %v738
    %v752 = vadd.f32 %v732, %v742
    %v753 = vpack.c.bf16 %v747, %v745
    %v754 = vpack.c.bf16 %v748, %v746
    %v755 = vpack.c.bf16 %v751, %v749
    %v756 = vpack.c.bf16 %v752, %v750
    %v761 = vunpack.c.l.b16 %v753
    %v762 = vunpack.c.l.b16 %v754
    %v763 = vunpack.c.h.b16 %v753
    %v764 = vunpack.c.h.b16 %v754
    %v765 = vunpack.c.l.b16 %v755
    %v766 = vunpack.c.l.b16 %v756
    %v767 = vunpack.c.h.b16 %v755
    %v768 = vunpack.c.h.b16 %v756
    %v769 = vpack.c.b16 %v762, %v761
    %v770 = vpack.c.b16 %v764, %v763
    %v771 = vpack.c.b16 %v766, %v765
    %v772 = vpack.c.b16 %v768, %v767
    %777 = vst [vmem:[%s6] sm:$0xff] %v769
    %778 = vst [vmem:[%s6 + $0x8] sm:$0xff] %v770
    %779 = vst [vmem:[%s6 + $0x10] sm:$0xff] %v771
    %780 = vst [vmem:[%s6 + $0x18] sm:$0xff] %v772
  $region33: #{transformer_forward.21} parent=0 // pred_fallthru
    _
  // Predicated region
  $region34: #{transformer_forward.21} parent=0 // pred_check
    _
  $region35: #{transformer_forward.21} parent=0 // pred_check_branch
    %782 = sbr.rel (0) target = $region37
  $region36: #{transformer_forward.21} parent=0 // pred_region
    _
  $region37: #{transformer_forward.21} parent=0 // pred_fallthru
    _
  // Predicated region
  $region38: #{transformer_forward.21} parent=0 // pred_check
    _
  $region39: #{transformer_forward.21} parent=0 // pred_check_branch
    %784 = sbr.rel (0) target = $region41
  $region40: #{transformer_forward.21} parent=0 // pred_region
    _
  $region41: #{transformer_forward.21} parent=0 // pred_fallthru
    _

</llo_original>
